<compile_context>
chip_gen: v5e
topology: v5e:2x2
jax: 0.10.0
libtpu: 0.0.40
codegen_flags: <defaults>
</compile_context>

<pallas_src>
import jax
import jax.numpy as jnp
from jax.experimental import pallas as pl
from jax.experimental.pallas import tpu as pltpu


# ----------------------------------------------------------------------------
# helpers
# ----------------------------------------------------------------------------
def bn_scale_shift(bn, eps=1e-5):
    scale = bn["gamma"] / jnp.sqrt(bn["var"] + eps)
    shift = bn["beta"] - bn["mean"] * scale
    return scale, shift


# ----------------------------------------------------------------------------
# The fused per-sample kernel
# ----------------------------------------------------------------------------
def _make_transition_kernel(Ho, Wo, mid, C):
    S = Ho * Wo
    Hp, Wp = Ho + 1, Wo + 1          # extent of one stride-2 phase of the padded conv2 input

    def kernel(xph_ref, s1_ref, h1_ref, w1_ref, s2_ref, h2_ref, w2_ref,
               s3_ref, h3_ref, w3_ref, s5_ref, h5_ref, w5_ref,
               gf_ref, g3_ref, g5_ref,
               w1f_ref, b1f_ref, w2f_ref, b2f_ref,
               wa3_ref, wa5_ref, baf_ref,
               w3f_ref, b3f_ref, w5f_ref, b5f_ref,
               o_ref, p_scr, pad_scr):
        f32 = jnp.float32

        # ---- stage 1+2: BN1+ReLU -> conv1 1x1 (bf16 MXU) -> BN2+ReLU, per phase;
        #      scatter into the zero-padded phase scratch (conv2's input) ----
        for ph in range(4):
            r0 = 1 - (ph >> 1)                       # placement offset of this phase
            c0 = 1 - (ph & 1)
            # re-zero only the two pad strips of this phase (cheap, megacore-safe)
            zr = ph * Hp + (0 if r0 else Hp - 1)
            zc = 0 if c0 else Wp - 1
            p_scr[zr:zr + 1, :, :] = jnp.zeros((1, Wp, mid), f32)
            p_scr[ph * Hp:(ph + 1) * Hp, zc:zc + 1, :] = jnp.zeros((Hp, 1, mid), f32)

            a = jnp.maximum(xph_ref[ph * S:(ph + 1) * S, :].astype(f32)
                            * s1_ref[...] + h1_ref[...], 0.0)            # (S, Cin) f32
            y = jnp.dot(a.astype(jnp.bfloat16), w1_ref[...],
                        preferred_element_type=f32)                      # (S, mid)
            y = jnp.maximum(y * s2_ref[...] + h2_ref[...], 0.0)
            p_scr[ph * Hp + r0:ph * Hp + r0 + Ho, c0:c0 + Wo, :] = y.reshape(Ho, Wo, mid)

        # ---- stage 3: conv2_3x3 stride 2 pad 1 == 9 shifted phase taps, f32 accumulator ----
        w2 = w2_ref[...]                                                  # (9, mid, C) bf16
        xg = jnp.zeros((S, C), f32)                                       # x_shortcut
        for kh in range(3):
            for kw in range(3):
                ph = 2 * (kh & 1) + (kw & 1)
                qh, qw = kh >> 1, kw >> 1
                tap = p_scr[ph * Hp + qh:ph * Hp + qh + Ho, qw:qw + Wo, :]
                xg = xg + jnp.dot(tap.reshape(S, mid).astype(jnp.bfloat16),
                                  w2[kh * 3 + kw], preferred_element_type=f32)

        # ---- stage 4: both depthwise 3x3 branches (their BN+ReLU fused), shared pad scratch ----
        pad_scr[0:2, :, :] = jnp.zeros((2, Wo + 4, C), f32)
        pad_scr[Ho + 2:Ho + 4, :, :] = jnp.zeros((2, Wo + 4, C), f32)
        pad_scr[:, 0:2, :] = jnp.zeros((Ho + 4, 2, C), f32)
        pad_scr[:, Wo + 2:Wo + 4, :] = jnp.zeros((Ho + 4, 2, C), f32)

        def depthwise(scale, shift, taps, dil):
            yb = jnp.maximum(xg * scale + shift, 0.0)                     # (S, C)
            pad_scr[2:2 + Ho, 2:2 + Wo, :] = yb.reshape(Ho, Wo, C)
            off = 2 - dil
            acc = jnp.zeros((Ho, Wo, C), f32)
            for kh in range(3):
                for kw in range(3):
                    acc = acc + (pad_scr[off + dil * kh:off + dil * kh + Ho,
                                         off + dil * kw:off + dil * kw + Wo, :]
                                 * taps[kh * 3 + kw].reshape(1, 1, C))
            return acc.reshape(S, C)

        x3 = depthwise(s3_ref[...], h3_ref[...], w3_ref[...], 1)          # dil 1, pad 1
        x5 = depthwise(s5_ref[...], h5_ref[...], w5_ref[...], 2)          # dil 2, pad 2

        # ---- stage 5: softmax-gated global pools (gate-conv bias dropped: exact no-op
        #      under softmax; avgpool(x*w)*H*W == sum_s x*w exactly) ----
        def gate_pool(x_sc, g_row):
            logits = jnp.sum(x_sc * g_row, axis=1, keepdims=True)         # (S, 1)
            e = jnp.exp(logits - jnp.max(logits, axis=0, keepdims=True))
            w = e / jnp.sum(e, axis=0, keepdims=True)                     # exact normalization
            return jnp.sum(x_sc * w, axis=0, keepdims=True)               # (1, C)

        xsw = gate_pool(xg, gf_ref[...])
        x3p = gate_pool(x3, g3_ref[...])
        x5p = gate_pool(x5, g5_ref[...])

        # ---- stage 6: FC head (BatchNorm1d layers folded into the FC weights/biases) ----
        t = jnp.tanh(jnp.dot(xsw, w1f_ref[...], preferred_element_type=f32) + b1f_ref[...])
        sw = jax.nn.sigmoid(jnp.dot(t, w2f_ref[...], preferred_element_type=f32) + b2f_ref[...])
        att = jnp.tanh(jnp.dot(x3p, wa3_ref[...], preferred_element_type=f32)
                       + jnp.dot(x5p, wa5_ref[...], preferred_element_type=f32)
                       + baf_ref[...])
        wv3 = jnp.dot(att, w3f_ref[...], preferred_element_type=f32) + b3f_ref[...]
        wv5 = jnp.dot(att, w5f_ref[...], preferred_element_type=f32) + b5f_ref[...]
        mx = jnp.maximum(wv3, wv5)
        e3 = jnp.exp(wv3 - mx)
        e5 = jnp.exp(wv5 - mx)
        nx = (e3 * x3p + e5 * x5p) / (e3 + e5)                            # exact 2-way softmax

        # ---- stage 7: x = x_shortcut * x_shortcut_weight + new_x ----
        o_ref[...] = xg * sw + nx

    return kernel


# ----------------------------------------------------------------------------
# _Transition forward
# ----------------------------------------------------------------------------
def transition_forward(p, x_nchw):
    B, Cin, H, W = x_nchw.shape
    assert H % 2 == 0 and W % 2 == 0, "stride-2 phase decomposition assumes even H, W"
    mid, C, Cf, Cr = p["mid"], p["C"], p["Cf"], p["Cr"]
    Ho, Wo = H // 2, W // 2
    S = Ho * Wo
    f32 = jnp.float32

    # NHWC + bf16 at the DMA boundary; pre-split into the 4 stride-2 phases of
    # conv2's sampling grid (the 1x1 conv1 commutes with the split), so the kernel
    # never materializes an im2col slab in HBM.
    x_nhwc = jnp.transpose(x_nchw, (0, 2, 3, 1)).astype(jnp.bfloat16)
    phases = [x_nhwc[:, 1 - (ph >> 1)::2, 1 - (ph & 1)::2, :] for ph in range(4)]
    x_ph = jnp.stack(phases, axis=1).reshape(B, 4 * S, Cin)

    s1, h1 = bn_scale_shift(p["bn1"])
    s2, h2 = bn_scale_shift(p["bn2"])
    s3, h3 = bn_scale_shift(p["bn3"])
    s5, h5 = bn_scale_shift(p["bn5"])
    sf, hf = bn_scale_shift(p["bn_forget"])
    sa, ha = bn_scale_shift(p["bn_attention"])

    row = lambda v: v.reshape(1, -1).astype(f32)

    w1_mat = p["w1"].reshape(mid, Cin).T.astype(jnp.bfloat16)                   # (Cin, mid)
    w2_taps = jnp.transpose(p["w2"], (2, 3, 1, 0)).reshape(9, mid, C).astype(jnp.bfloat16)
    w3_taps = p["w3"].reshape(C, 9).T.astype(f32)                               # (9, C)
    w5_taps = p["w5"].reshape(C, 9).T.astype(f32)

    # FC head with its BatchNorm1d layers folded in (exact, inference mode)
    w1f = (p["fc1_w"].reshape(Cf, C).T * sf[None, :]).astype(f32)               # (C, Cf)
    b1f = row(p["fc1_b"] * sf + hf)
    w2f = p["fc2_w"].reshape(C, Cf).T.astype(f32)                               # (Cf, C)
    b2f = row(p["fc2_b"])
    wall = p["fcall_w"].reshape(Cr, 2 * C).T * sa[None, :]                      # (2C, Cr)
    wa3 = wall[:C].astype(f32)
    wa5 = wall[C:].astype(f32)
    baf = row(p["fcall_b"] * sa + ha)
    w3f = p["fc3x3_w"].reshape(C, Cr).T.astype(f32)                             # (Cr, C)
    b3f = row(p["fc3x3_b"])
    w5f = p["fc5x5_w"].reshape(C, Cr).T.astype(f32)
    b5f = row(p["fc5x5_b"])

    params = (row(s1), row(h1), w1_mat, row(s2), row(h2), w2_taps,
              row(s3), row(h3), w3_taps, row(s5), row(h5), w5_taps,
              row(p["gfc_w"].reshape(C)), row(p["gc3_w"].reshape(C)), row(p["gc5_w"].reshape(C)),
              w1f, b1f, w2f, b2f, wa3, wa5, baf, w3f, b3f, w5f, b5f)

    kernel = _make_transition_kernel(Ho, Wo, mid, C)
    param_specs = [pl.BlockSpec(a.shape, lambda b, n=a.ndim: (0,) * n) for a in params]

    out = pl.pallas_call(
        kernel,
        out_shape=jax.ShapeDtypeStruct((B, S, C), jnp.float32),
        grid=(B,),
        in_specs=[pl.BlockSpec((None, 4 * S, Cin), lambda b: (b, 0, 0))] + param_specs,
        out_specs=pl.BlockSpec((None, S, C), lambda b: (b, 0, 0)),
        scratch_shapes=[pltpu.VMEM((4 * (Ho + 1), Wo + 1, mid), jnp.float32),   # phase images of padded y
                        pltpu.VMEM((Ho + 4, Wo + 4, C), jnp.float32)],          # depthwise pad buffer
        compiler_params=pltpu.CompilerParams(
            dimension_semantics=("parallel",),
            vmem_limit_bytes=32 * 1024 * 1024),
    )(x_ph, *params)

    # tiny (4 KB) NHWC -> NCHW flip of the final result; left to XLA
    return jnp.transpose(out.reshape(B, Ho, Wo, C), (0, 3, 1, 2))


# ----------------------------------------------------------------------------
# Parameter generation (deterministic, synthetic, PyTorch-layout weights)
# ----------------------------------------------------------------------------
class ParamGen:
    def __init__(self, seed=0):
        self._key = jax.random.PRNGKey(seed)

    def _next(self):
        self._key, k = jax.random.split(self._key)
        return k

    def conv(self, cout, cin_g, k):
        fan_in = cin_g * k * k
        return jax.random.normal(self._next(), (cout, cin_g, k, k), jnp.float32) / jnp.sqrt(fan_in)

    def bias(self, c):
        return 0.05 * jax.random.normal(self._next(), (c,), jnp.float32)

    def bn(self, c):
        return {
            "gamma": 1.0 + 0.1 * jax.random.normal(self._next(), (c,), jnp.float32),
            "beta": 0.05 * jax.random.normal(self._next(), (c,), jnp.float32),
            "mean": 0.1 * jax.random.normal(self._next(), (c,), jnp.float32),
            "var": 1.0 + 0.1 * jax.random.uniform(self._next(), (c,), jnp.float32),
        }


def init_transition(in_channels, out_channels, forget_factor=4, reduction_factor=4, seed=0):
    pg = ParamGen(seed)
    reduce_channels = (in_channels - out_channels) // 2
    mid = in_channels - reduce_channels
    C = out_channels
    Cf = C // forget_factor
    Cr = 2 * C // reduction_factor
    return {
        "in_channels": in_channels, "mid": mid, "C": C, "Cf": Cf, "Cr": Cr,
        # BasicConv = BN + ReLU + conv(bias=False)
        "bn1": pg.bn(in_channels), "w1": pg.conv(mid, in_channels, 1),
        "bn2": pg.bn(mid), "w2": pg.conv(C, mid, 3),
        "bn3": pg.bn(C), "w3": pg.conv(C, 1, 3),      # depthwise 3x3, dil 1
        "bn5": pg.bn(C), "w5": pg.conv(C, 1, 3),      # depthwise 3x3, dil 2
        # 1x1 gate convs C -> 1 (bias is an exact no-op under the subsequent softmax)
        "gfc_w": pg.conv(1, C, 1), "gfc_b": pg.bias(1),
        "gc3_w": pg.conv(1, C, 1), "gc3_b": pg.bias(1),
        "gc5_w": pg.conv(1, C, 1), "gc5_b": pg.bias(1),
        # attention head
        "fcall_w": pg.conv(Cr, 2 * C, 1), "fcall_b": pg.bias(Cr),
        "bn_attention": pg.bn(Cr),
        "fc3x3_w": pg.conv(C, Cr, 1), "fc3x3_b": pg.bias(C),
        "fc5x5_w": pg.conv(C, Cr, 1), "fc5x5_b": pg.bias(C),
        # forget head
        "fc1_w": pg.conv(Cf, C, 1), "fc1_b": pg.bias(Cf),
        "bn_forget": pg.bn(Cf),
        "fc2_w": pg.conv(C, Cf, 1), "fc2_b": pg.bias(C),
    }


# ----------------------------------------------------------------------------
if __name__ == "__main__":
    in_channels, out_channels = 16, 8
    B, H, W = 2, 16, 16

    params = init_transition(in_channels, out_channels,
                             forget_factor=4, reduction_factor=4, seed=0)
    x = jax.random.normal(jax.random.PRNGKey(0), (B, in_channels, H, W), jnp.float32)

    fwd = jax.jit(lambda inp: transition_forward(params, inp))
    out = fwd(x)
    jax.block_until_ready(out)

    assert out.shape == (B, out_channels, H // 2, W // 2), out.shape
    assert bool(jnp.all(jnp.isfinite(out)))
    print("KERNEL_OK")
</pallas_src>

<mosaic_0001>
module attributes {stable_mosaic.version = 11 : i64} {
  func.func @kernel(%arg0: i32, %arg1: memref<1x256x16xbf16, #tpu.memory_space<vmem>>, %arg2: memref<1x16xf32, #tpu.memory_space<vmem>>, %arg3: memref<1x16xf32, #tpu.memory_space<vmem>>, %arg4: memref<16x12xbf16, #tpu.memory_space<vmem>>, %arg5: memref<1x12xf32, #tpu.memory_space<vmem>>, %arg6: memref<1x12xf32, #tpu.memory_space<vmem>>, %arg7: memref<9x12x8xbf16, #tpu.memory_space<vmem>>, %arg8: memref<1x8xf32, #tpu.memory_space<vmem>>, %arg9: memref<1x8xf32, #tpu.memory_space<vmem>>, %arg10: memref<9x8xf32, #tpu.memory_space<vmem>>, %arg11: memref<1x8xf32, #tpu.memory_space<vmem>>, %arg12: memref<1x8xf32, #tpu.memory_space<vmem>>, %arg13: memref<9x8xf32, #tpu.memory_space<vmem>>, %arg14: memref<1x8xf32, #tpu.memory_space<vmem>>, %arg15: memref<1x8xf32, #tpu.memory_space<vmem>>, %arg16: memref<1x8xf32, #tpu.memory_space<vmem>>, %arg17: memref<8x2xf32, #tpu.memory_space<vmem>>, %arg18: memref<1x2xf32, #tpu.memory_space<vmem>>, %arg19: memref<2x8xf32, #tpu.memory_space<vmem>>, %arg20: memref<1x8xf32, #tpu.memory_space<vmem>>, %arg21: memref<8x4xf32, #tpu.memory_space<vmem>>, %arg22: memref<8x4xf32, #tpu.memory_space<vmem>>, %arg23: memref<1x4xf32, #tpu.memory_space<vmem>>, %arg24: memref<4x8xf32, #tpu.memory_space<vmem>>, %arg25: memref<1x8xf32, #tpu.memory_space<vmem>>, %arg26: memref<4x8xf32, #tpu.memory_space<vmem>>, %arg27: memref<1x8xf32, #tpu.memory_space<vmem>>, %arg28: memref<1x64x8xf32, #tpu.memory_space<vmem>>, %arg29: memref<36x9x12xf32, #tpu.memory_space<vmem>>, %arg30: memref<12x12x8xf32, #tpu.memory_space<vmem>>) attributes {dimension_semantics = [#tpu.dimension_semantics<parallel>], iteration_bounds = array<i64: 2>, scalar_prefetch = 0 : i64, scratch_operands = 2 : i64, tpu.core_type = #tpu.core_type<tc>, window_params = [{transform_indices = @transform_0, window_bounds = array<i64: 1, 256, 16>}, {pipeline_mode = #tpu.pipeline_mode<synchronous>, transform_indices = @transform_1, window_bounds = array<i64: 1, 16>}, {pipeline_mode = #tpu.pipeline_mode<synchronous>, transform_indices = @transform_2, window_bounds = array<i64: 1, 16>}, {pipeline_mode = #tpu.pipeline_mode<synchronous>, transform_indices = @transform_3, window_bounds = array<i64: 16, 12>}, {pipeline_mode = #tpu.pipeline_mode<synchronous>, transform_indices = @transform_4, window_bounds = array<i64: 1, 12>}, {pipeline_mode = #tpu.pipeline_mode<synchronous>, transform_indices = @transform_5, window_bounds = array<i64: 1, 12>}, {pipeline_mode = #tpu.pipeline_mode<synchronous>, transform_indices = @transform_6, window_bounds = array<i64: 9, 12, 8>}, {pipeline_mode = #tpu.pipeline_mode<synchronous>, transform_indices = @transform_7, window_bounds = array<i64: 1, 8>}, {pipeline_mode = #tpu.pipeline_mode<synchronous>, transform_indices = @transform_8, window_bounds = array<i64: 1, 8>}, {pipeline_mode = #tpu.pipeline_mode<synchronous>, transform_indices = @transform_9, window_bounds = array<i64: 9, 8>}, {pipeline_mode = #tpu.pipeline_mode<synchronous>, transform_indices = @transform_10, window_bounds = array<i64: 1, 8>}, {pipeline_mode = #tpu.pipeline_mode<synchronous>, transform_indices = @transform_11, window_bounds = array<i64: 1, 8>}, {pipeline_mode = #tpu.pipeline_mode<synchronous>, transform_indices = @transform_12, window_bounds = array<i64: 9, 8>}, {pipeline_mode = #tpu.pipeline_mode<synchronous>, transform_indices = @transform_13, window_bounds = array<i64: 1, 8>}, {pipeline_mode = #tpu.pipeline_mode<synchronous>, transform_indices = @transform_14, window_bounds = array<i64: 1, 8>}, {pipeline_mode = #tpu.pipeline_mode<synchronous>, transform_indices = @transform_15, window_bounds = array<i64: 1, 8>}, {pipeline_mode = #tpu.pipeline_mode<synchronous>, transform_indices = @transform_16, window_bounds = array<i64: 8, 2>}, {pipeline_mode = #tpu.pipeline_mode<synchronous>, transform_indices = @transform_17, window_bounds = array<i64: 1, 2>}, {pipeline_mode = #tpu.pipeline_mode<synchronous>, transform_indices = @transform_18, window_bounds = array<i64: 2, 8>}, {pipeline_mode = #tpu.pipeline_mode<synchronous>, transform_indices = @transform_19, window_bounds = array<i64: 1, 8>}, {pipeline_mode = #tpu.pipeline_mode<synchronous>, transform_indices = @transform_20, window_bounds = array<i64: 8, 4>}, {pipeline_mode = #tpu.pipeline_mode<synchronous>, transform_indices = @transform_21, window_bounds = array<i64: 8, 4>}, {pipeline_mode = #tpu.pipeline_mode<synchronous>, transform_indices = @transform_22, window_bounds = array<i64: 1, 4>}, {pipeline_mode = #tpu.pipeline_mode<synchronous>, transform_indices = @transform_23, window_bounds = array<i64: 4, 8>}, {pipeline_mode = #tpu.pipeline_mode<synchronous>, transform_indices = @transform_24, window_bounds = array<i64: 1, 8>}, {pipeline_mode = #tpu.pipeline_mode<synchronous>, transform_indices = @transform_25, window_bounds = array<i64: 4, 8>}, {pipeline_mode = #tpu.pipeline_mode<synchronous>, transform_indices = @transform_26, window_bounds = array<i64: 1, 8>}, {transform_indices = @transform_27, window_bounds = array<i64: 1, 64, 8>}]} {
    %cst = arith.constant 0.000000e+00 : f32
    %0 = vector.broadcast %cst : f32 to vector<1x9x12xf32>
    %c0 = arith.constant 0 : index
    %c0_0 = arith.constant 0 : index
    %c0_1 = arith.constant 0 : index
    %1 = vector.load %arg29[%c0, %c0_0, %c0_1] : memref<36x9x12xf32, #tpu.memory_space<vmem>>, vector<1x9x12xf32>
    tpu.vector_store %arg29[%c0, %c0_0, %c0_1], %0 {strides = array<i32>} : memref<36x9x12xf32, #tpu.memory_space<vmem>>, vector<1x9x12xf32>,
    %cst_2 = arith.constant 0.000000e+00 : f32
    %2 = vector.broadcast %cst_2 : f32 to vector<9x1x12xf32>
    %c0_3 = arith.constant 0 : index
    %c0_4 = arith.constant 0 : index
    %c0_5 = arith.constant 0 : index
    %3 = vector.load %arg29[%c0_3, %c0_4, %c0_5] : memref<36x9x12xf32, #tpu.memory_space<vmem>>, vector<9x1x12xf32>
    tpu.vector_store %arg29[%c0_3, %c0_4, %c0_5], %2 {strides = array<i32>} : memref<36x9x12xf32, #tpu.memory_space<vmem>>, vector<9x1x12xf32>,
    %c0_6 = arith.constant 0 : index
    %c0_7 = arith.constant 0 : index
    %c0_8 = arith.constant 0 : index
    %4 = vector.load %arg1[%c0_6, %c0_7, %c0_8] : memref<1x256x16xbf16, #tpu.memory_space<vmem>>, vector<1x64x16xbf16>
    %5 = vector.shape_cast %4 : vector<1x64x16xbf16> to vector<64x16xbf16>
    %6 = arith.extf %5 : vector<64x16xbf16> to vector<64x16xf32>
    %c0_9 = arith.constant 0 : index
    %c0_10 = arith.constant 0 : index
    %7 = vector.load %arg2[%c0_9, %c0_10] : memref<1x16xf32, #tpu.memory_space<vmem>>, vector<1x16xf32>
    %8 = vector.broadcast %7 : vector<1x16xf32> to vector<64x16xf32>
    %9 = arith.mulf %6, %8 : vector<64x16xf32>
    %c0_11 = arith.constant 0 : index
    %c0_12 = arith.constant 0 : index
    %10 = vector.load %arg3[%c0_11, %c0_12] : memref<1x16xf32, #tpu.memory_space<vmem>>, vector<1x16xf32>
    %11 = vector.broadcast %10 : vector<1x16xf32> to vector<64x16xf32>
    %12 = arith.addf %9, %11 : vector<64x16xf32>
    %cst_13 = arith.constant 0.000000e+00 : f32
    %13 = vector.broadcast %cst_13 : f32 to vector<64x16xf32>
    %14 = arith.maximumf %12, %13 : vector<64x16xf32>
    %15 = arith.truncf %14 : vector<64x16xf32> to vector<64x16xbf16>
    %c0_14 = arith.constant 0 : index
    %c0_15 = arith.constant 0 : index
    %16 = vector.load %arg4[%c0_14, %c0_15] : memref<16x12xbf16, #tpu.memory_space<vmem>>, vector<16x12xbf16>
    %cst_16 = arith.constant dense<0.000000e+00> : vector<64x12xf32>
    %17 = tpu.matmul %15, %16, %cst_16 {dimension_numbers = #tpu.dot_dimension_numbers<[1], [0], [0], [1], [0, 0, 1, 1], [], []>} : vector<64x16xbf16>, vector<16x12xbf16>, vector<64x12xf32> -> vector<64x12xf32>
    %c0_17 = arith.constant 0 : index
    %c0_18 = arith.constant 0 : index
    %18 = vector.load %arg5[%c0_17, %c0_18] : memref<1x12xf32, #tpu.memory_space<vmem>>, vector<1x12xf32>
    %19 = vector.broadcast %18 : vector<1x12xf32> to vector<64x12xf32>
    %20 = arith.mulf %17, %19 : vector<64x12xf32>
    %c0_19 = arith.constant 0 : index
    %c0_20 = arith.constant 0 : index
    %21 = vector.load %arg6[%c0_19, %c0_20] : memref<1x12xf32, #tpu.memory_space<vmem>>, vector<1x12xf32>
    %22 = vector.broadcast %21 : vector<1x12xf32> to vector<64x12xf32>
    %23 = arith.addf %20, %22 : vector<64x12xf32>
    %cst_21 = arith.constant 0.000000e+00 : f32
    %24 = vector.broadcast %cst_21 : f32 to vector<64x12xf32>
    %25 = arith.maximumf %23, %24 : vector<64x12xf32>
    %26 = vector.shape_cast %25 : vector<64x12xf32> to vector<8x8x12xf32>
    %c1 = arith.constant 1 : index
    %c1_22 = arith.constant 1 : index
    %c0_23 = arith.constant 0 : index
    %27 = vector.load %arg29[%c1, %c1_22, %c0_23] : memref<36x9x12xf32, #tpu.memory_space<vmem>>, vector<8x8x12xf32>
    tpu.vector_store %arg29[%c1, %c1_22, %c0_23], %26 {strides = array<i32>} : memref<36x9x12xf32, #tpu.memory_space<vmem>>, vector<8x8x12xf32>,
    %cst_24 = arith.constant 0.000000e+00 : f32
    %28 = vector.broadcast %cst_24 : f32 to vector<1x9x12xf32>
    %c9 = arith.constant 9 : index
    %c0_25 = arith.constant 0 : index
    %c0_26 = arith.constant 0 : index
    %29 = vector.load %arg29[%c9, %c0_25, %c0_26] : memref<36x9x12xf32, #tpu.memory_space<vmem>>, vector<1x9x12xf32>
    tpu.vector_store %arg29[%c9, %c0_25, %c0_26], %28 {strides = array<i32>} : memref<36x9x12xf32, #tpu.memory_space<vmem>>, vector<1x9x12xf32>,
    %cst_27 = arith.constant 0.000000e+00 : f32
    %30 = vector.broadcast %cst_27 : f32 to vector<9x1x12xf32>
    %c9_28 = arith.constant 9 : index
    %c8 = arith.constant 8 : index
    %c0_29 = arith.constant 0 : index
    %31 = vector.load %arg29[%c9_28, %c8, %c0_29] : memref<36x9x12xf32, #tpu.memory_space<vmem>>, vector<9x1x12xf32>
    tpu.vector_store %arg29[%c9_28, %c8, %c0_29], %30 {strides = array<i32>} : memref<36x9x12xf32, #tpu.memory_space<vmem>>, vector<9x1x12xf32>,
    %c0_30 = arith.constant 0 : index
    %c64 = arith.constant 64 : index
    %c0_31 = arith.constant 0 : index
    %32 = vector.load %arg1[%c0_30, %c64, %c0_31] : memref<1x256x16xbf16, #tpu.memory_space<vmem>>, vector<1x64x16xbf16>
    %33 = vector.shape_cast %32 : vector<1x64x16xbf16> to vector<64x16xbf16>
    %34 = arith.extf %33 : vector<64x16xbf16> to vector<64x16xf32>
    %c0_32 = arith.constant 0 : index
    %c0_33 = arith.constant 0 : index
    %35 = vector.load %arg2[%c0_32, %c0_33] : memref<1x16xf32, #tpu.memory_space<vmem>>, vector<1x16xf32>
    %36 = vector.broadcast %35 : vector<1x16xf32> to vector<64x16xf32>
    %37 = arith.mulf %34, %36 : vector<64x16xf32>
    %c0_34 = arith.constant 0 : index
    %c0_35 = arith.constant 0 : index
    %38 = vector.load %arg3[%c0_34, %c0_35] : memref<1x16xf32, #tpu.memory_space<vmem>>, vector<1x16xf32>
    %39 = vector.broadcast %38 : vector<1x16xf32> to vector<64x16xf32>
    %40 = arith.addf %37, %39 : vector<64x16xf32>
    %cst_36 = arith.constant 0.000000e+00 : f32
    %41 = vector.broadcast %cst_36 : f32 to vector<64x16xf32>
    %42 = arith.maximumf %40, %41 : vector<64x16xf32>
    %43 = arith.truncf %42 : vector<64x16xf32> to vector<64x16xbf16>
    %c0_37 = arith.constant 0 : index
    %c0_38 = arith.constant 0 : index
    %44 = vector.load %arg4[%c0_37, %c0_38] : memref<16x12xbf16, #tpu.memory_space<vmem>>, vector<16x12xbf16>
    %cst_39 = arith.constant dense<0.000000e+00> : vector<64x12xf32>
    %45 = tpu.matmul %43, %44, %cst_39 {dimension_numbers = #tpu.dot_dimension_numbers<[1], [0], [0], [1], [0, 0, 1, 1], [], []>} : vector<64x16xbf16>, vector<16x12xbf16>, vector<64x12xf32> -> vector<64x12xf32>
    %c0_40 = arith.constant 0 : index
    %c0_41 = arith.constant 0 : index
    %46 = vector.load %arg5[%c0_40, %c0_41] : memref<1x12xf32, #tpu.memory_space<vmem>>, vector<1x12xf32>
    %47 = vector.broadcast %46 : vector<1x12xf32> to vector<64x12xf32>
    %48 = arith.mulf %45, %47 : vector<64x12xf32>
    %c0_42 = arith.constant 0 : index
    %c0_43 = arith.constant 0 : index
    %49 = vector.load %arg6[%c0_42, %c0_43] : memref<1x12xf32, #tpu.memory_space<vmem>>, vector<1x12xf32>
    %50 = vector.broadcast %49 : vector<1x12xf32> to vector<64x12xf32>
    %51 = arith.addf %48, %50 : vector<64x12xf32>
    %cst_44 = arith.constant 0.000000e+00 : f32
    %52 = vector.broadcast %cst_44 : f32 to vector<64x12xf32>
    %53 = arith.maximumf %51, %52 : vector<64x12xf32>
    %54 = vector.shape_cast %53 : vector<64x12xf32> to vector<8x8x12xf32>
    %c10 = arith.constant 10 : index
    %c0_45 = arith.constant 0 : index
    %c0_46 = arith.constant 0 : index
    %55 = vector.load %arg29[%c10, %c0_45, %c0_46] : memref<36x9x12xf32, #tpu.memory_space<vmem>>, vector<8x8x12xf32>
    tpu.vector_store %arg29[%c10, %c0_45, %c0_46], %54 {strides = array<i32>} : memref<36x9x12xf32, #tpu.memory_space<vmem>>, vector<8x8x12xf32>,
    %cst_47 = arith.constant 0.000000e+00 : f32
    %56 = vector.broadcast %cst_47 : f32 to vector<1x9x12xf32>
    %c26 = arith.constant 26 : index
    %c0_48 = arith.constant 0 : index
    %c0_49 = arith.constant 0 : index
    %57 = vector.load %arg29[%c26, %c0_48, %c0_49] : memref<36x9x12xf32, #tpu.memory_space<vmem>>, vector<1x9x12xf32>
    tpu.vector_store %arg29[%c26, %c0_48, %c0_49], %56 {strides = array<i32>} : memref<36x9x12xf32, #tpu.memory_space<vmem>>, vector<1x9x12xf32>,
    %cst_50 = arith.constant 0.000000e+00 : f32
    %58 = vector.broadcast %cst_50 : f32 to vector<9x1x12xf32>
    %c18 = arith.constant 18 : index
    %c0_51 = arith.constant 0 : index
    %c0_52 = arith.constant 0 : index
    %59 = vector.load %arg29[%c18, %c0_51, %c0_52] : memref<36x9x12xf32, #tpu.memory_space<vmem>>, vector<9x1x12xf32>
    tpu.vector_store %arg29[%c18, %c0_51, %c0_52], %58 {strides = array<i32>} : memref<36x9x12xf32, #tpu.memory_space<vmem>>, vector<9x1x12xf32>,
    %c0_53 = arith.constant 0 : index
    %c128 = arith.constant 128 : index
    %c0_54 = arith.constant 0 : index
    %60 = vector.load %arg1[%c0_53, %c128, %c0_54] : memref<1x256x16xbf16, #tpu.memory_space<vmem>>, vector<1x64x16xbf16>
    %61 = vector.shape_cast %60 : vector<1x64x16xbf16> to vector<64x16xbf16>
    %62 = arith.extf %61 : vector<64x16xbf16> to vector<64x16xf32>
    %c0_55 = arith.constant 0 : index
    %c0_56 = arith.constant 0 : index
    %63 = vector.load %arg2[%c0_55, %c0_56] : memref<1x16xf32, #tpu.memory_space<vmem>>, vector<1x16xf32>
    %64 = vector.broadcast %63 : vector<1x16xf32> to vector<64x16xf32>
    %65 = arith.mulf %62, %64 : vector<64x16xf32>
    %c0_57 = arith.constant 0 : index
    %c0_58 = arith.constant 0 : index
    %66 = vector.load %arg3[%c0_57, %c0_58] : memref<1x16xf32, #tpu.memory_space<vmem>>, vector<1x16xf32>
    %67 = vector.broadcast %66 : vector<1x16xf32> to vector<64x16xf32>
    %68 = arith.addf %65, %67 : vector<64x16xf32>
    %cst_59 = arith.constant 0.000000e+00 : f32
    %69 = vector.broadcast %cst_59 : f32 to vector<64x16xf32>
    %70 = arith.maximumf %68, %69 : vector<64x16xf32>
    %71 = arith.truncf %70 : vector<64x16xf32> to vector<64x16xbf16>
    %c0_60 = arith.constant 0 : index
    %c0_61 = arith.constant 0 : index
    %72 = vector.load %arg4[%c0_60, %c0_61] : memref<16x12xbf16, #tpu.memory_space<vmem>>, vector<16x12xbf16>
    %cst_62 = arith.constant dense<0.000000e+00> : vector<64x12xf32>
    %73 = tpu.matmul %71, %72, %cst_62 {dimension_numbers = #tpu.dot_dimension_numbers<[1], [0], [0], [1], [0, 0, 1, 1], [], []>} : vector<64x16xbf16>, vector<16x12xbf16>, vector<64x12xf32> -> vector<64x12xf32>
    %c0_63 = arith.constant 0 : index
    %c0_64 = arith.constant 0 : index
    %74 = vector.load %arg5[%c0_63, %c0_64] : memref<1x12xf32, #tpu.memory_space<vmem>>, vector<1x12xf32>
    %75 = vector.broadcast %74 : vector<1x12xf32> to vector<64x12xf32>
    %76 = arith.mulf %73, %75 : vector<64x12xf32>
    %c0_65 = arith.constant 0 : index
    %c0_66 = arith.constant 0 : index
    %77 = vector.load %arg6[%c0_65, %c0_66] : memref<1x12xf32, #tpu.memory_space<vmem>>, vector<1x12xf32>
    %78 = vector.broadcast %77 : vector<1x12xf32> to vector<64x12xf32>
    %79 = arith.addf %76, %78 : vector<64x12xf32>
    %cst_67 = arith.constant 0.000000e+00 : f32
    %80 = vector.broadcast %cst_67 : f32 to vector<64x12xf32>
    %81 = arith.maximumf %79, %80 : vector<64x12xf32>
    %82 = vector.shape_cast %81 : vector<64x12xf32> to vector<8x8x12xf32>
    %c18_68 = arith.constant 18 : index
    %c1_69 = arith.constant 1 : index
    %c0_70 = arith.constant 0 : index
    %83 = vector.load %arg29[%c18_68, %c1_69, %c0_70] : memref<36x9x12xf32, #tpu.memory_space<vmem>>, vector<8x8x12xf32>
    tpu.vector_store %arg29[%c18_68, %c1_69, %c0_70], %82 {strides = array<i32>} : memref<36x9x12xf32, #tpu.memory_space<vmem>>, vector<8x8x12xf32>,
    %cst_71 = arith.constant 0.000000e+00 : f32
    %84 = vector.broadcast %cst_71 : f32 to vector<1x9x12xf32>
    %c35 = arith.constant 35 : index
    %c0_72 = arith.constant 0 : index
    %c0_73 = arith.constant 0 : index
    %85 = vector.load %arg29[%c35, %c0_72, %c0_73] : memref<36x9x12xf32, #tpu.memory_space<vmem>>, vector<1x9x12xf32>
    tpu.vector_store %arg29[%c35, %c0_72, %c0_73], %84 {strides = array<i32>} : memref<36x9x12xf32, #tpu.memory_space<vmem>>, vector<1x9x12xf32>,
    %cst_74 = arith.constant 0.000000e+00 : f32
    %86 = vector.broadcast %cst_74 : f32 to vector<9x1x12xf32>
    %c27 = arith.constant 27 : index
    %c8_75 = arith.constant 8 : index
    %c0_76 = arith.constant 0 : index
    %87 = vector.load %arg29[%c27, %c8_75, %c0_76] : memref<36x9x12xf32, #tpu.memory_space<vmem>>, vector<9x1x12xf32>
    tpu.vector_store %arg29[%c27, %c8_75, %c0_76], %86 {strides = array<i32>} : memref<36x9x12xf32, #tpu.memory_space<vmem>>, vector<9x1x12xf32>,
    %c0_77 = arith.constant 0 : index
    %c192 = arith.constant 192 : index
    %c0_78 = arith.constant 0 : index
    %88 = vector.load %arg1[%c0_77, %c192, %c0_78] : memref<1x256x16xbf16, #tpu.memory_space<vmem>>, vector<1x64x16xbf16>
    %89 = vector.shape_cast %88 : vector<1x64x16xbf16> to vector<64x16xbf16>
    %90 = arith.extf %89 : vector<64x16xbf16> to vector<64x16xf32>
    %c0_79 = arith.constant 0 : index
    %c0_80 = arith.constant 0 : index
    %91 = vector.load %arg2[%c0_79, %c0_80] : memref<1x16xf32, #tpu.memory_space<vmem>>, vector<1x16xf32>
    %92 = vector.broadcast %91 : vector<1x16xf32> to vector<64x16xf32>
    %93 = arith.mulf %90, %92 : vector<64x16xf32>
    %c0_81 = arith.constant 0 : index
    %c0_82 = arith.constant 0 : index
    %94 = vector.load %arg3[%c0_81, %c0_82] : memref<1x16xf32, #tpu.memory_space<vmem>>, vector<1x16xf32>
    %95 = vector.broadcast %94 : vector<1x16xf32> to vector<64x16xf32>
    %96 = arith.addf %93, %95 : vector<64x16xf32>
    %cst_83 = arith.constant 0.000000e+00 : f32
    %97 = vector.broadcast %cst_83 : f32 to vector<64x16xf32>
    %98 = arith.maximumf %96, %97 : vector<64x16xf32>
    %99 = arith.truncf %98 : vector<64x16xf32> to vector<64x16xbf16>
    %c0_84 = arith.constant 0 : index
    %c0_85 = arith.constant 0 : index
    %100 = vector.load %arg4[%c0_84, %c0_85] : memref<16x12xbf16, #tpu.memory_space<vmem>>, vector<16x12xbf16>
    %cst_86 = arith.constant dense<0.000000e+00> : vector<64x12xf32>
    %101 = tpu.matmul %99, %100, %cst_86 {dimension_numbers = #tpu.dot_dimension_numbers<[1], [0], [0], [1], [0, 0, 1, 1], [], []>} : vector<64x16xbf16>, vector<16x12xbf16>, vector<64x12xf32> -> vector<64x12xf32>
    %c0_87 = arith.constant 0 : index
    %c0_88 = arith.constant 0 : index
    %102 = vector.load %arg5[%c0_87, %c0_88] : memref<1x12xf32, #tpu.memory_space<vmem>>, vector<1x12xf32>
    %103 = vector.broadcast %102 : vector<1x12xf32> to vector<64x12xf32>
    %104 = arith.mulf %101, %103 : vector<64x12xf32>
    %c0_89 = arith.constant 0 : index
    %c0_90 = arith.constant 0 : index
    %105 = vector.load %arg6[%c0_89, %c0_90] : memref<1x12xf32, #tpu.memory_space<vmem>>, vector<1x12xf32>
    %106 = vector.broadcast %105 : vector<1x12xf32> to vector<64x12xf32>
    %107 = arith.addf %104, %106 : vector<64x12xf32>
    %cst_91 = arith.constant 0.000000e+00 : f32
    %108 = vector.broadcast %cst_91 : f32 to vector<64x12xf32>
    %109 = arith.maximumf %107, %108 : vector<64x12xf32>
    %110 = vector.shape_cast %109 : vector<64x12xf32> to vector<8x8x12xf32>
    %c27_92 = arith.constant 27 : index
    %c0_93 = arith.constant 0 : index
    %c0_94 = arith.constant 0 : index
    %111 = vector.load %arg29[%c27_92, %c0_93, %c0_94] : memref<36x9x12xf32, #tpu.memory_space<vmem>>, vector<8x8x12xf32>
    tpu.vector_store %arg29[%c27_92, %c0_93, %c0_94], %110 {strides = array<i32>} : memref<36x9x12xf32, #tpu.memory_space<vmem>>, vector<8x8x12xf32>,
    %c0_95 = arith.constant 0 : index
    %c0_96 = arith.constant 0 : index
    %c0_97 = arith.constant 0 : index
    %112 = vector.load %arg7[%c0_95, %c0_96, %c0_97] : memref<9x12x8xbf16, #tpu.memory_space<vmem>>, vector<9x12x8xbf16>
    %cst_98 = arith.constant 0.000000e+00 : f32
    %113 = vector.broadcast %cst_98 : f32 to vector<64x8xf32>
    %c0_99 = arith.constant 0 : index
    %c0_100 = arith.constant 0 : index
    %c0_101 = arith.constant 0 : index
    %114 = vector.load %arg29[%c0_99, %c0_100, %c0_101] : memref<36x9x12xf32, #tpu.memory_space<vmem>>, vector<8x8x12xf32>
    %115 = vector.shape_cast %114 : vector<8x8x12xf32> to vector<64x12xf32>
    %116 = arith.truncf %115 : vector<64x12xf32> to vector<64x12xbf16>
    %117 = vector.extract_strided_slice %112 {offsets = [0, 0, 0], sizes = [1, 12, 8], strides = [1, 1, 1]} : vector<9x12x8xbf16> to vector<1x12x8xbf16>
    %118 = vector.shape_cast %117 : vector<1x12x8xbf16> to vector<12x8xbf16>
    %cst_102 = arith.constant dense<0.000000e+00> : vector<64x8xf32>
    %119 = tpu.matmul %116, %118, %cst_102 {dimension_numbers = #tpu.dot_dimension_numbers<[1], [0], [0], [1], [0, 0, 1, 1], [], []>} : vector<64x12xbf16>, vector<12x8xbf16>, vector<64x8xf32> -> vector<64x8xf32>
    %120 = arith.addf %113, %119 : vector<64x8xf32>
    %c9_103 = arith.constant 9 : index
    %c0_104 = arith.constant 0 : index
    %c0_105 = arith.constant 0 : index
    %121 = vector.load %arg29[%c9_103, %c0_104, %c0_105] : memref<36x9x12xf32, #tpu.memory_space<vmem>>, vector<8x8x12xf32>
    %122 = vector.shape_cast %121 : vector<8x8x12xf32> to vector<64x12xf32>
    %123 = arith.truncf %122 : vector<64x12xf32> to vector<64x12xbf16>
    %124 = vector.extract_strided_slice %112 {offsets = [1, 0, 0], sizes = [1, 12, 8], strides = [1, 1, 1]} : vector<9x12x8xbf16> to vector<1x12x8xbf16>
    %125 = vector.shape_cast %124 : vector<1x12x8xbf16> to vector<12x8xbf16>
    %cst_106 = arith.constant dense<0.000000e+00> : vector<64x8xf32>
    %126 = tpu.matmul %123, %125, %cst_106 {dimension_numbers = #tpu.dot_dimension_numbers<[1], [0], [0], [1], [0, 0, 1, 1], [], []>} : vector<64x12xbf16>, vector<12x8xbf16>, vector<64x8xf32> -> vector<64x8xf32>
    %127 = arith.addf %120, %126 : vector<64x8xf32>
    %c0_107 = arith.constant 0 : index
    %c1_108 = arith.constant 1 : index
    %c0_109 = arith.constant 0 : index
    %128 = vector.load %arg29[%c0_107, %c1_108, %c0_109] : memref<36x9x12xf32, #tpu.memory_space<vmem>>, vector<8x8x12xf32>
    %129 = vector.shape_cast %128 : vector<8x8x12xf32> to vector<64x12xf32>
    %130 = arith.truncf %129 : vector<64x12xf32> to vector<64x12xbf16>
    %131 = vector.extract_strided_slice %112 {offsets = [2, 0, 0], sizes = [1, 12, 8], strides = [1, 1, 1]} : vector<9x12x8xbf16> to vector<1x12x8xbf16>
    %132 = vector.shape_cast %131 : vector<1x12x8xbf16> to vector<12x8xbf16>
    %cst_110 = arith.constant dense<0.000000e+00> : vector<64x8xf32>
    %133 = tpu.matmul %130, %132, %cst_110 {dimension_numbers = #tpu.dot_dimension_numbers<[1], [0], [0], [1], [0, 0, 1, 1], [], []>} : vector<64x12xbf16>, vector<12x8xbf16>, vector<64x8xf32> -> vector<64x8xf32>
    %134 = arith.addf %127, %133 : vector<64x8xf32>
    %c18_111 = arith.constant 18 : index
    %c0_112 = arith.constant 0 : index
    %c0_113 = arith.constant 0 : index
    %135 = vector.load %arg29[%c18_111, %c0_112, %c0_113] : memref<36x9x12xf32, #tpu.memory_space<vmem>>, vector<8x8x12xf32>
    %136 = vector.shape_cast %135 : vector<8x8x12xf32> to vector<64x12xf32>
    %137 = arith.truncf %136 : vector<64x12xf32> to vector<64x12xbf16>
    %138 = vector.extract_strided_slice %112 {offsets = [3, 0, 0], sizes = [1, 12, 8], strides = [1, 1, 1]} : vector<9x12x8xbf16> to vector<1x12x8xbf16>
    %139 = vector.shape_cast %138 : vector<1x12x8xbf16> to vector<12x8xbf16>
    %cst_114 = arith.constant dense<0.000000e+00> : vector<64x8xf32>
    %140 = tpu.matmul %137, %139, %cst_114 {dimension_numbers = #tpu.dot_dimension_numbers<[1], [0], [0], [1], [0, 0, 1, 1], [], []>} : vector<64x12xbf16>, vector<12x8xbf16>, vector<64x8xf32> -> vector<64x8xf32>
    %141 = arith.addf %134, %140 : vector<64x8xf32>
    %c27_115 = arith.constant 27 : index
    %c0_116 = arith.constant 0 : index
    %c0_117 = arith.constant 0 : index
    %142 = vector.load %arg29[%c27_115, %c0_116, %c0_117] : memref<36x9x12xf32, #tpu.memory_space<vmem>>, vector<8x8x12xf32>
    %143 = vector.shape_cast %142 : vector<8x8x12xf32> to vector<64x12xf32>
    %144 = arith.truncf %143 : vector<64x12xf32> to vector<64x12xbf16>
    %145 = vector.extract_strided_slice %112 {offsets = [4, 0, 0], sizes = [1, 12, 8], strides = [1, 1, 1]} : vector<9x12x8xbf16> to vector<1x12x8xbf16>
    %146 = vector.shape_cast %145 : vector<1x12x8xbf16> to vector<12x8xbf16>
    %cst_118 = arith.constant dense<0.000000e+00> : vector<64x8xf32>
    %147 = tpu.matmul %144, %146, %cst_118 {dimension_numbers = #tpu.dot_dimension_numbers<[1], [0], [0], [1], [0, 0, 1, 1], [], []>} : vector<64x12xbf16>, vector<12x8xbf16>, vector<64x8xf32> -> vector<64x8xf32>
    %148 = arith.addf %141, %147 : vector<64x8xf32>
    %c18_119 = arith.constant 18 : index
    %c1_120 = arith.constant 1 : index
    %c0_121 = arith.constant 0 : index
    %149 = vector.load %arg29[%c18_119, %c1_120, %c0_121] : memref<36x9x12xf32, #tpu.memory_space<vmem>>, vector<8x8x12xf32>
    %150 = vector.shape_cast %149 : vector<8x8x12xf32> to vector<64x12xf32>
    %151 = arith.truncf %150 : vector<64x12xf32> to vector<64x12xbf16>
    %152 = vector.extract_strided_slice %112 {offsets = [5, 0, 0], sizes = [1, 12, 8], strides = [1, 1, 1]} : vector<9x12x8xbf16> to vector<1x12x8xbf16>
    %153 = vector.shape_cast %152 : vector<1x12x8xbf16> to vector<12x8xbf16>
    %cst_122 = arith.constant dense<0.000000e+00> : vector<64x8xf32>
    %154 = tpu.matmul %151, %153, %cst_122 {dimension_numbers = #tpu.dot_dimension_numbers<[1], [0], [0], [1], [0, 0, 1, 1], [], []>} : vector<64x12xbf16>, vector<12x8xbf16>, vector<64x8xf32> -> vector<64x8xf32>
    %155 = arith.addf %148, %154 : vector<64x8xf32>
    %c1_123 = arith.constant 1 : index
    %c0_124 = arith.constant 0 : index
    %c0_125 = arith.constant 0 : index
    %156 = vector.load %arg29[%c1_123, %c0_124, %c0_125] : memref<36x9x12xf32, #tpu.memory_space<vmem>>, vector<8x8x12xf32>
    %157 = vector.shape_cast %156 : vector<8x8x12xf32> to vector<64x12xf32>
    %158 = arith.truncf %157 : vector<64x12xf32> to vector<64x12xbf16>
    %159 = vector.extract_strided_slice %112 {offsets = [6, 0, 0], sizes = [1, 12, 8], strides = [1, 1, 1]} : vector<9x12x8xbf16> to vector<1x12x8xbf16>
    %160 = vector.shape_cast %159 : vector<1x12x8xbf16> to vector<12x8xbf16>
    %cst_126 = arith.constant dense<0.000000e+00> : vector<64x8xf32>
    %161 = tpu.matmul %158, %160, %cst_126 {dimension_numbers = #tpu.dot_dimension_numbers<[1], [0], [0], [1], [0, 0, 1, 1], [], []>} : vector<64x12xbf16>, vector<12x8xbf16>, vector<64x8xf32> -> vector<64x8xf32>
    %162 = arith.addf %155, %161 : vector<64x8xf32>
    %c10_127 = arith.constant 10 : index
    %c0_128 = arith.constant 0 : index
    %c0_129 = arith.constant 0 : index
    %163 = vector.load %arg29[%c10_127, %c0_128, %c0_129] : memref<36x9x12xf32, #tpu.memory_space<vmem>>, vector<8x8x12xf32>
    %164 = vector.shape_cast %163 : vector<8x8x12xf32> to vector<64x12xf32>
    %165 = arith.truncf %164 : vector<64x12xf32> to vector<64x12xbf16>
    %166 = vector.extract_strided_slice %112 {offsets = [7, 0, 0], sizes = [1, 12, 8], strides = [1, 1, 1]} : vector<9x12x8xbf16> to vector<1x12x8xbf16>
    %167 = vector.shape_cast %166 : vector<1x12x8xbf16> to vector<12x8xbf16>
    %cst_130 = arith.constant dense<0.000000e+00> : vector<64x8xf32>
    %168 = tpu.matmul %165, %167, %cst_130 {dimension_numbers = #tpu.dot_dimension_numbers<[1], [0], [0], [1], [0, 0, 1, 1], [], []>} : vector<64x12xbf16>, vector<12x8xbf16>, vector<64x8xf32> -> vector<64x8xf32>
    %169 = arith.addf %162, %168 : vector<64x8xf32>
    %c1_131 = arith.constant 1 : index
    %c1_132 = arith.constant 1 : index
    %c0_133 = arith.constant 0 : index
    %170 = vector.load %arg29[%c1_131, %c1_132, %c0_133] : memref<36x9x12xf32, #tpu.memory_space<vmem>>, vector<8x8x12xf32>
    %171 = vector.shape_cast %170 : vector<8x8x12xf32> to vector<64x12xf32>
    %172 = arith.truncf %171 : vector<64x12xf32> to vector<64x12xbf16>
    %173 = vector.extract_strided_slice %112 {offsets = [8, 0, 0], sizes = [1, 12, 8], strides = [1, 1, 1]} : vector<9x12x8xbf16> to vector<1x12x8xbf16>
    %174 = vector.shape_cast %173 : vector<1x12x8xbf16> to vector<12x8xbf16>
    %cst_134 = arith.constant dense<0.000000e+00> : vector<64x8xf32>
    %175 = tpu.matmul %172, %174, %cst_134 {dimension_numbers = #tpu.dot_dimension_numbers<[1], [0], [0], [1], [0, 0, 1, 1], [], []>} : vector<64x12xbf16>, vector<12x8xbf16>, vector<64x8xf32> -> vector<64x8xf32>
    %176 = arith.addf %169, %175 : vector<64x8xf32>
    %cst_135 = arith.constant 0.000000e+00 : f32
    %177 = vector.broadcast %cst_135 : f32 to vector<2x12x8xf32>
    %c0_136 = arith.constant 0 : index
    %c0_137 = arith.constant 0 : index
    %c0_138 = arith.constant 0 : index
    %178 = vector.load %arg30[%c0_136, %c0_137, %c0_138] : memref<12x12x8xf32, #tpu.memory_space<vmem>>, vector<2x12x8xf32>
    tpu.vector_store %arg30[%c0_136, %c0_137, %c0_138], %177 {strides = array<i32>} : memref<12x12x8xf32, #tpu.memory_space<vmem>>, vector<2x12x8xf32>,
    %cst_139 = arith.constant 0.000000e+00 : f32
    %179 = vector.broadcast %cst_139 : f32 to vector<2x12x8xf32>
    %c10_140 = arith.constant 10 : index
    %c0_141 = arith.constant 0 : index
    %c0_142 = arith.constant 0 : index
    %180 = vector.load %arg30[%c10_140, %c0_141, %c0_142] : memref<12x12x8xf32, #tpu.memory_space<vmem>>, vector<2x12x8xf32>
    tpu.vector_store %arg30[%c10_140, %c0_141, %c0_142], %179 {strides = array<i32>} : memref<12x12x8xf32, #tpu.memory_space<vmem>>, vector<2x12x8xf32>,
    %cst_143 = arith.constant 0.000000e+00 : f32
    %181 = vector.broadcast %cst_143 : f32 to vector<12x2x8xf32>
    %c0_144 = arith.constant 0 : index
    %c0_145 = arith.constant 0 : index
    %c0_146 = arith.constant 0 : index
    %182 = vector.load %arg30[%c0_144, %c0_145, %c0_146] : memref<12x12x8xf32, #tpu.memory_space<vmem>>, vector<12x2x8xf32>
    tpu.vector_store %arg30[%c0_144, %c0_145, %c0_146], %181 {strides = array<i32>} : memref<12x12x8xf32, #tpu.memory_space<vmem>>, vector<12x2x8xf32>,
    %cst_147 = arith.constant 0.000000e+00 : f32
    %183 = vector.broadcast %cst_147 : f32 to vector<12x2x8xf32>
    %c0_148 = arith.constant 0 : index
    %c10_149 = arith.constant 10 : index
    %c0_150 = arith.constant 0 : index
    %184 = vector.load %arg30[%c0_148, %c10_149, %c0_150] : memref<12x12x8xf32, #tpu.memory_space<vmem>>, vector<12x2x8xf32>
    tpu.vector_store %arg30[%c0_148, %c10_149, %c0_150], %183 {strides = array<i32>} : memref<12x12x8xf32, #tpu.memory_space<vmem>>, vector<12x2x8xf32>,
    %c0_151 = arith.constant 0 : index
    %c0_152 = arith.constant 0 : index
    %185 = vector.load %arg8[%c0_151, %c0_152] : memref<1x8xf32, #tpu.memory_space<vmem>>, vector<1x8xf32>
    %c0_153 = arith.constant 0 : index
    %c0_154 = arith.constant 0 : index
    %186 = vector.load %arg9[%c0_153, %c0_154] : memref<1x8xf32, #tpu.memory_space<vmem>>, vector<1x8xf32>
    %c0_155 = arith.constant 0 : index
    %c0_156 = arith.constant 0 : index
    %187 = vector.load %arg10[%c0_155, %c0_156] : memref<9x8xf32, #tpu.memory_space<vmem>>, vector<9x8xf32>
    %188 = vector.broadcast %185 : vector<1x8xf32> to vector<64x8xf32>
    %189 = arith.mulf %176, %188 : vector<64x8xf32>
    %190 = vector.broadcast %186 : vector<1x8xf32> to vector<64x8xf32>
    %191 = arith.addf %189, %190 : vector<64x8xf32>
    %cst_157 = arith.constant 0.000000e+00 : f32
    %192 = vector.broadcast %cst_157 : f32 to vector<64x8xf32>
    %193 = arith.maximumf %191, %192 : vector<64x8xf32>
    %194 = vector.shape_cast %193 : vector<64x8xf32> to vector<8x8x8xf32>
    %c2 = arith.constant 2 : index
    %c2_158 = arith.constant 2 : index
    %c0_159 = arith.constant 0 : index
    %195 = vector.load %arg30[%c2, %c2_158, %c0_159] : memref<12x12x8xf32, #tpu.memory_space<vmem>>, vector<8x8x8xf32>
    tpu.vector_store %arg30[%c2, %c2_158, %c0_159], %194 {strides = array<i32>} : memref<12x12x8xf32, #tpu.memory_space<vmem>>, vector<8x8x8xf32>,
    %cst_160 = arith.constant 0.000000e+00 : f32
    %196 = vector.broadcast %cst_160 : f32 to vector<8x8x8xf32>
    %c1_161 = arith.constant 1 : index
    %c1_162 = arith.constant 1 : index
    %c0_163 = arith.constant 0 : index
    %197 = vector.load %arg30[%c1_161, %c1_162, %c0_163] : memref<12x12x8xf32, #tpu.memory_space<vmem>>, vector<8x8x8xf32>
    %198 = vector.extract_strided_slice %187 {offsets = [0, 0], sizes = [1, 8], strides = [1, 1]} : vector<9x8xf32> to vector<1x8xf32>
    %199 = vector.shape_cast %198 : vector<1x8xf32> to vector<8xf32>
    %200 = vector.shape_cast %199 : vector<8xf32> to vector<1x1x8xf32>
    %201 = vector.broadcast %200 : vector<1x1x8xf32> to vector<8x8x8xf32>
    %202 = arith.mulf %197, %201 : vector<8x8x8xf32>
    %203 = arith.addf %196, %202 : vector<8x8x8xf32>
    %c1_164 = arith.constant 1 : index
    %c2_165 = arith.constant 2 : index
    %c0_166 = arith.constant 0 : index
    %204 = vector.load %arg30[%c1_164, %c2_165, %c0_166] : memref<12x12x8xf32, #tpu.memory_space<vmem>>, vector<8x8x8xf32>
    %205 = vector.extract_strided_slice %187 {offsets = [1, 0], sizes = [1, 8], strides = [1, 1]} : vector<9x8xf32> to vector<1x8xf32>
    %206 = vector.shape_cast %205 : vector<1x8xf32> to vector<8xf32>
    %207 = vector.shape_cast %206 : vector<8xf32> to vector<1x1x8xf32>
    %208 = vector.broadcast %207 : vector<1x1x8xf32> to vector<8x8x8xf32>
    %209 = arith.mulf %204, %208 : vector<8x8x8xf32>
    %210 = arith.addf %203, %209 : vector<8x8x8xf32>
    %c1_167 = arith.constant 1 : index
    %c3 = arith.constant 3 : index
    %c0_168 = arith.constant 0 : index
    %211 = vector.load %arg30[%c1_167, %c3, %c0_168] : memref<12x12x8xf32, #tpu.memory_space<vmem>>, vector<8x8x8xf32>
    %212 = vector.extract_strided_slice %187 {offsets = [2, 0], sizes = [1, 8], strides = [1, 1]} : vector<9x8xf32> to vector<1x8xf32>
    %213 = vector.shape_cast %212 : vector<1x8xf32> to vector<8xf32>
    %214 = vector.shape_cast %213 : vector<8xf32> to vector<1x1x8xf32>
    %215 = vector.broadcast %214 : vector<1x1x8xf32> to vector<8x8x8xf32>
    %216 = arith.mulf %211, %215 : vector<8x8x8xf32>
    %217 = arith.addf %210, %216 : vector<8x8x8xf32>
    %c2_169 = arith.constant 2 : index
    %c1_170 = arith.constant 1 : index
    %c0_171 = arith.constant 0 : index
    %218 = vector.load %arg30[%c2_169, %c1_170, %c0_171] : memref<12x12x8xf32, #tpu.memory_space<vmem>>, vector<8x8x8xf32>
    %219 = vector.extract_strided_slice %187 {offsets = [3, 0], sizes = [1, 8], strides = [1, 1]} : vector<9x8xf32> to vector<1x8xf32>
    %220 = vector.shape_cast %219 : vector<1x8xf32> to vector<8xf32>
    %221 = vector.shape_cast %220 : vector<8xf32> to vector<1x1x8xf32>
    %222 = vector.broadcast %221 : vector<1x1x8xf32> to vector<8x8x8xf32>
    %223 = arith.mulf %218, %222 : vector<8x8x8xf32>
    %224 = arith.addf %217, %223 : vector<8x8x8xf32>
    %c2_172 = arith.constant 2 : index
    %c2_173 = arith.constant 2 : index
    %c0_174 = arith.constant 0 : index
    %225 = vector.load %arg30[%c2_172, %c2_173, %c0_174] : memref<12x12x8xf32, #tpu.memory_space<vmem>>, vector<8x8x8xf32>
    %226 = vector.extract_strided_slice %187 {offsets = [4, 0], sizes = [1, 8], strides = [1, 1]} : vector<9x8xf32> to vector<1x8xf32>
    %227 = vector.shape_cast %226 : vector<1x8xf32> to vector<8xf32>
    %228 = vector.shape_cast %227 : vector<8xf32> to vector<1x1x8xf32>
    %229 = vector.broadcast %228 : vector<1x1x8xf32> to vector<8x8x8xf32>
    %230 = arith.mulf %225, %229 : vector<8x8x8xf32>
    %231 = arith.addf %224, %230 : vector<8x8x8xf32>
    %c2_175 = arith.constant 2 : index
    %c3_176 = arith.constant 3 : index
    %c0_177 = arith.constant 0 : index
    %232 = vector.load %arg30[%c2_175, %c3_176, %c0_177] : memref<12x12x8xf32, #tpu.memory_space<vmem>>, vector<8x8x8xf32>
    %233 = vector.extract_strided_slice %187 {offsets = [5, 0], sizes = [1, 8], strides = [1, 1]} : vector<9x8xf32> to vector<1x8xf32>
    %234 = vector.shape_cast %233 : vector<1x8xf32> to vector<8xf32>
    %235 = vector.shape_cast %234 : vector<8xf32> to vector<1x1x8xf32>
    %236 = vector.broadcast %235 : vector<1x1x8xf32> to vector<8x8x8xf32>
    %237 = arith.mulf %232, %236 : vector<8x8x8xf32>
    %238 = arith.addf %231, %237 : vector<8x8x8xf32>
    %c3_178 = arith.constant 3 : index
    %c1_179 = arith.constant 1 : index
    %c0_180 = arith.constant 0 : index
    %239 = vector.load %arg30[%c3_178, %c1_179, %c0_180] : memref<12x12x8xf32, #tpu.memory_space<vmem>>, vector<8x8x8xf32>
    %240 = vector.extract_strided_slice %187 {offsets = [6, 0], sizes = [1, 8], strides = [1, 1]} : vector<9x8xf32> to vector<1x8xf32>
    %241 = vector.shape_cast %240 : vector<1x8xf32> to vector<8xf32>
    %242 = vector.shape_cast %241 : vector<8xf32> to vector<1x1x8xf32>
    %243 = vector.broadcast %242 : vector<1x1x8xf32> to vector<8x8x8xf32>
    %244 = arith.mulf %239, %243 : vector<8x8x8xf32>
    %245 = arith.addf %238, %244 : vector<8x8x8xf32>
    %c3_181 = arith.constant 3 : index
    %c2_182 = arith.constant 2 : index
    %c0_183 = arith.constant 0 : index
    %246 = vector.load %arg30[%c3_181, %c2_182, %c0_183] : memref<12x12x8xf32, #tpu.memory_space<vmem>>, vector<8x8x8xf32>
    %247 = vector.extract_strided_slice %187 {offsets = [7, 0], sizes = [1, 8], strides = [1, 1]} : vector<9x8xf32> to vector<1x8xf32>
    %248 = vector.shape_cast %247 : vector<1x8xf32> to vector<8xf32>
    %249 = vector.shape_cast %248 : vector<8xf32> to vector<1x1x8xf32>
    %250 = vector.broadcast %249 : vector<1x1x8xf32> to vector<8x8x8xf32>
    %251 = arith.mulf %246, %250 : vector<8x8x8xf32>
    %252 = arith.addf %245, %251 : vector<8x8x8xf32>
    %c3_184 = arith.constant 3 : index
    %c3_185 = arith.constant 3 : index
    %c0_186 = arith.constant 0 : index
    %253 = vector.load %arg30[%c3_184, %c3_185, %c0_186] : memref<12x12x8xf32, #tpu.memory_space<vmem>>, vector<8x8x8xf32>
    %254 = vector.extract_strided_slice %187 {offsets = [8, 0], sizes = [1, 8], strides = [1, 1]} : vector<9x8xf32> to vector<1x8xf32>
    %255 = vector.shape_cast %254 : vector<1x8xf32> to vector<8xf32>
    %256 = vector.shape_cast %255 : vector<8xf32> to vector<1x1x8xf32>
    %257 = vector.broadcast %256 : vector<1x1x8xf32> to vector<8x8x8xf32>
    %258 = arith.mulf %253, %257 : vector<8x8x8xf32>
    %259 = arith.addf %252, %258 : vector<8x8x8xf32>
    %260 = vector.shape_cast %259 : vector<8x8x8xf32> to vector<64x8xf32>
    %c0_187 = arith.constant 0 : index
    %c0_188 = arith.constant 0 : index
    %261 = vector.load %arg11[%c0_187, %c0_188] : memref<1x8xf32, #tpu.memory_space<vmem>>, vector<1x8xf32>
    %c0_189 = arith.constant 0 : index
    %c0_190 = arith.constant 0 : index
    %262 = vector.load %arg12[%c0_189, %c0_190] : memref<1x8xf32, #tpu.memory_space<vmem>>, vector<1x8xf32>
    %c0_191 = arith.constant 0 : index
    %c0_192 = arith.constant 0 : index
    %263 = vector.load %arg13[%c0_191, %c0_192] : memref<9x8xf32, #tpu.memory_space<vmem>>, vector<9x8xf32>
    %264 = vector.broadcast %261 : vector<1x8xf32> to vector<64x8xf32>
    %265 = arith.mulf %176, %264 : vector<64x8xf32>
    %266 = vector.broadcast %262 : vector<1x8xf32> to vector<64x8xf32>
    %267 = arith.addf %265, %266 : vector<64x8xf32>
    %cst_193 = arith.constant 0.000000e+00 : f32
    %268 = vector.broadcast %cst_193 : f32 to vector<64x8xf32>
    %269 = arith.maximumf %267, %268 : vector<64x8xf32>
    %270 = vector.shape_cast %269 : vector<64x8xf32> to vector<8x8x8xf32>
    %c2_194 = arith.constant 2 : index
    %c2_195 = arith.constant 2 : index
    %c0_196 = arith.constant 0 : index
    %271 = vector.load %arg30[%c2_194, %c2_195, %c0_196] : memref<12x12x8xf32, #tpu.memory_space<vmem>>, vector<8x8x8xf32>
    tpu.vector_store %arg30[%c2_194, %c2_195, %c0_196], %270 {strides = array<i32>} : memref<12x12x8xf32, #tpu.memory_space<vmem>>, vector<8x8x8xf32>,
    %cst_197 = arith.constant 0.000000e+00 : f32
    %272 = vector.broadcast %cst_197 : f32 to vector<8x8x8xf32>
    %c0_198 = arith.constant 0 : index
    %c0_199 = arith.constant 0 : index
    %c0_200 = arith.constant 0 : index
    %273 = vector.load %arg30[%c0_198, %c0_199, %c0_200] : memref<12x12x8xf32, #tpu.memory_space<vmem>>, vector<8x8x8xf32>
    %274 = vector.extract_strided_slice %263 {offsets = [0, 0], sizes = [1, 8], strides = [1, 1]} : vector<9x8xf32> to vector<1x8xf32>
    %275 = vector.shape_cast %274 : vector<1x8xf32> to vector<8xf32>
    %276 = vector.shape_cast %275 : vector<8xf32> to vector<1x1x8xf32>
    %277 = vector.broadcast %276 : vector<1x1x8xf32> to vector<8x8x8xf32>
    %278 = arith.mulf %273, %277 : vector<8x8x8xf32>
    %279 = arith.addf %272, %278 : vector<8x8x8xf32>
    %c0_201 = arith.constant 0 : index
    %c2_202 = arith.constant 2 : index
    %c0_203 = arith.constant 0 : index
    %280 = vector.load %arg30[%c0_201, %c2_202, %c0_203] : memref<12x12x8xf32, #tpu.memory_space<vmem>>, vector<8x8x8xf32>
    %281 = vector.extract_strided_slice %263 {offsets = [1, 0], sizes = [1, 8], strides = [1, 1]} : vector<9x8xf32> to vector<1x8xf32>
    %282 = vector.shape_cast %281 : vector<1x8xf32> to vector<8xf32>
    %283 = vector.shape_cast %282 : vector<8xf32> to vector<1x1x8xf32>
    %284 = vector.broadcast %283 : vector<1x1x8xf32> to vector<8x8x8xf32>
    %285 = arith.mulf %280, %284 : vector<8x8x8xf32>
    %286 = arith.addf %279, %285 : vector<8x8x8xf32>
    %c0_204 = arith.constant 0 : index
    %c4 = arith.constant 4 : index
    %c0_205 = arith.constant 0 : index
    %287 = vector.load %arg30[%c0_204, %c4, %c0_205] : memref<12x12x8xf32, #tpu.memory_space<vmem>>, vector<8x8x8xf32>
    %288 = vector.extract_strided_slice %263 {offsets = [2, 0], sizes = [1, 8], strides = [1, 1]} : vector<9x8xf32> to vector<1x8xf32>
    %289 = vector.shape_cast %288 : vector<1x8xf32> to vector<8xf32>
    %290 = vector.shape_cast %289 : vector<8xf32> to vector<1x1x8xf32>
    %291 = vector.broadcast %290 : vector<1x1x8xf32> to vector<8x8x8xf32>
    %292 = arith.mulf %287, %291 : vector<8x8x8xf32>
    %293 = arith.addf %286, %292 : vector<8x8x8xf32>
    %c2_206 = arith.constant 2 : index
    %c0_207 = arith.constant 0 : index
    %c0_208 = arith.constant 0 : index
    %294 = vector.load %arg30[%c2_206, %c0_207, %c0_208] : memref<12x12x8xf32, #tpu.memory_space<vmem>>, vector<8x8x8xf32>
    %295 = vector.extract_strided_slice %263 {offsets = [3, 0], sizes = [1, 8], strides = [1, 1]} : vector<9x8xf32> to vector<1x8xf32>
    %296 = vector.shape_cast %295 : vector<1x8xf32> to vector<8xf32>
    %297 = vector.shape_cast %296 : vector<8xf32> to vector<1x1x8xf32>
    %298 = vector.broadcast %297 : vector<1x1x8xf32> to vector<8x8x8xf32>
    %299 = arith.mulf %294, %298 : vector<8x8x8xf32>
    %300 = arith.addf %293, %299 : vector<8x8x8xf32>
    %c2_209 = arith.constant 2 : index
    %c2_210 = arith.constant 2 : index
    %c0_211 = arith.constant 0 : index
    %301 = vector.load %arg30[%c2_209, %c2_210, %c0_211] : memref<12x12x8xf32, #tpu.memory_space<vmem>>, vector<8x8x8xf32>
    %302 = vector.extract_strided_slice %263 {offsets = [4, 0], sizes = [1, 8], strides = [1, 1]} : vector<9x8xf32> to vector<1x8xf32>
    %303 = vector.shape_cast %302 : vector<1x8xf32> to vector<8xf32>
    %304 = vector.shape_cast %303 : vector<8xf32> to vector<1x1x8xf32>
    %305 = vector.broadcast %304 : vector<1x1x8xf32> to vector<8x8x8xf32>
    %306 = arith.mulf %301, %305 : vector<8x8x8xf32>
    %307 = arith.addf %300, %306 : vector<8x8x8xf32>
    %c2_212 = arith.constant 2 : index
    %c4_213 = arith.constant 4 : index
    %c0_214 = arith.constant 0 : index
    %308 = vector.load %arg30[%c2_212, %c4_213, %c0_214] : memref<12x12x8xf32, #tpu.memory_space<vmem>>, vector<8x8x8xf32>
    %309 = vector.extract_strided_slice %263 {offsets = [5, 0], sizes = [1, 8], strides = [1, 1]} : vector<9x8xf32> to vector<1x8xf32>
    %310 = vector.shape_cast %309 : vector<1x8xf32> to vector<8xf32>
    %311 = vector.shape_cast %310 : vector<8xf32> to vector<1x1x8xf32>
    %312 = vector.broadcast %311 : vector<1x1x8xf32> to vector<8x8x8xf32>
    %313 = arith.mulf %308, %312 : vector<8x8x8xf32>
    %314 = arith.addf %307, %313 : vector<8x8x8xf32>
    %c4_215 = arith.constant 4 : index
    %c0_216 = arith.constant 0 : index
    %c0_217 = arith.constant 0 : index
    %315 = vector.load %arg30[%c4_215, %c0_216, %c0_217] : memref<12x12x8xf32, #tpu.memory_space<vmem>>, vector<8x8x8xf32>
    %316 = vector.extract_strided_slice %263 {offsets = [6, 0], sizes = [1, 8], strides = [1, 1]} : vector<9x8xf32> to vector<1x8xf32>
    %317 = vector.shape_cast %316 : vector<1x8xf32> to vector<8xf32>
    %318 = vector.shape_cast %317 : vector<8xf32> to vector<1x1x8xf32>
    %319 = vector.broadcast %318 : vector<1x1x8xf32> to vector<8x8x8xf32>
    %320 = arith.mulf %315, %319 : vector<8x8x8xf32>
    %321 = arith.addf %314, %320 : vector<8x8x8xf32>
    %c4_218 = arith.constant 4 : index
    %c2_219 = arith.constant 2 : index
    %c0_220 = arith.constant 0 : index
    %322 = vector.load %arg30[%c4_218, %c2_219, %c0_220] : memref<12x12x8xf32, #tpu.memory_space<vmem>>, vector<8x8x8xf32>
    %323 = vector.extract_strided_slice %263 {offsets = [7, 0], sizes = [1, 8], strides = [1, 1]} : vector<9x8xf32> to vector<1x8xf32>
    %324 = vector.shape_cast %323 : vector<1x8xf32> to vector<8xf32>
    %325 = vector.shape_cast %324 : vector<8xf32> to vector<1x1x8xf32>
    %326 = vector.broadcast %325 : vector<1x1x8xf32> to vector<8x8x8xf32>
    %327 = arith.mulf %322, %326 : vector<8x8x8xf32>
    %328 = arith.addf %321, %327 : vector<8x8x8xf32>
    %c4_221 = arith.constant 4 : index
    %c4_222 = arith.constant 4 : index
    %c0_223 = arith.constant 0 : index
    %329 = vector.load %arg30[%c4_221, %c4_222, %c0_223] : memref<12x12x8xf32, #tpu.memory_space<vmem>>, vector<8x8x8xf32>
    %330 = vector.extract_strided_slice %263 {offsets = [8, 0], sizes = [1, 8], strides = [1, 1]} : vector<9x8xf32> to vector<1x8xf32>
    %331 = vector.shape_cast %330 : vector<1x8xf32> to vector<8xf32>
    %332 = vector.shape_cast %331 : vector<8xf32> to vector<1x1x8xf32>
    %333 = vector.broadcast %332 : vector<1x1x8xf32> to vector<8x8x8xf32>
    %334 = arith.mulf %329, %333 : vector<8x8x8xf32>
    %335 = arith.addf %328, %334 : vector<8x8x8xf32>
    %336 = vector.shape_cast %335 : vector<8x8x8xf32> to vector<64x8xf32>
    %c0_224 = arith.constant 0 : index
    %c0_225 = arith.constant 0 : index
    %337 = vector.load %arg14[%c0_224, %c0_225] : memref<1x8xf32, #tpu.memory_space<vmem>>, vector<1x8xf32>
    %338 = vector.broadcast %337 : vector<1x8xf32> to vector<64x8xf32>
    %339 = arith.mulf %176, %338 : vector<64x8xf32>
    %cst_226 = arith.constant dense<0.000000e+00> : vector<64xf32>
    %340 = vector.multi_reduction <add>, %339, %cst_226 [1] : vector<64x8xf32> to vector<64xf32>
    %341 = vector.shape_cast %340 : vector<64xf32> to vector<64x1xf32>
    %cst_227 = arith.constant dense<0xFF800000> : vector<1xf32>
    %342 = vector.multi_reduction <maximumf>, %341, %cst_227 [0] : vector<64x1xf32> to vector<1xf32>
    %343 = vector.shape_cast %342 : vector<1xf32> to vector<1x1xf32>
    %344 = vector.broadcast %343 : vector<1x1xf32> to vector<64x1xf32>
    %345 = arith.subf %341, %344 : vector<64x1xf32>
    %346 = math.exp %345 : vector<64x1xf32>
    %cst_228 = arith.constant dense<0.000000e+00> : vector<1xf32>
    %347 = vector.multi_reduction <add>, %346, %cst_228 [0] : vector<64x1xf32> to vector<1xf32>
    %348 = vector.shape_cast %347 : vector<1xf32> to vector<1x1xf32>
    %349 = vector.broadcast %348 : vector<1x1xf32> to vector<64x1xf32>
    %350 = arith.divf %346, %349 : vector<64x1xf32>
    %351 = vector.broadcast %350 : vector<64x1xf32> to vector<64x8xf32>
    %352 = arith.mulf %176, %351 : vector<64x8xf32>
    %cst_229 = arith.constant dense<0.000000e+00> : vector<8xf32>
    %353 = vector.multi_reduction <add>, %352, %cst_229 [0] : vector<64x8xf32> to vector<8xf32>
    %354 = vector.shape_cast %353 : vector<8xf32> to vector<1x8xf32>
    %c0_230 = arith.constant 0 : index
    %c0_231 = arith.constant 0 : index
    %355 = vector.load %arg15[%c0_230, %c0_231] : memref<1x8xf32, #tpu.memory_space<vmem>>, vector<1x8xf32>
    %356 = vector.broadcast %355 : vector<1x8xf32> to vector<64x8xf32>
    %357 = arith.mulf %260, %356 : vector<64x8xf32>
    %cst_232 = arith.constant dense<0.000000e+00> : vector<64xf32>
    %358 = vector.multi_reduction <add>, %357, %cst_232 [1] : vector<64x8xf32> to vector<64xf32>
    %359 = vector.shape_cast %358 : vector<64xf32> to vector<64x1xf32>
    %cst_233 = arith.constant dense<0xFF800000> : vector<1xf32>
    %360 = vector.multi_reduction <maximumf>, %359, %cst_233 [0] : vector<64x1xf32> to vector<1xf32>
    %361 = vector.shape_cast %360 : vector<1xf32> to vector<1x1xf32>
    %362 = vector.broadcast %361 : vector<1x1xf32> to vector<64x1xf32>
    %363 = arith.subf %359, %362 : vector<64x1xf32>
    %364 = math.exp %363 : vector<64x1xf32>
    %cst_234 = arith.constant dense<0.000000e+00> : vector<1xf32>
    %365 = vector.multi_reduction <add>, %364, %cst_234 [0] : vector<64x1xf32> to vector<1xf32>
    %366 = vector.shape_cast %365 : vector<1xf32> to vector<1x1xf32>
    %367 = vector.broadcast %366 : vector<1x1xf32> to vector<64x1xf32>
    %368 = arith.divf %364, %367 : vector<64x1xf32>
    %369 = vector.broadcast %368 : vector<64x1xf32> to vector<64x8xf32>
    %370 = arith.mulf %260, %369 : vector<64x8xf32>
    %cst_235 = arith.constant dense<0.000000e+00> : vector<8xf32>
    %371 = vector.multi_reduction <add>, %370, %cst_235 [0] : vector<64x8xf32> to vector<8xf32>
    %372 = vector.shape_cast %371 : vector<8xf32> to vector<1x8xf32>
    %c0_236 = arith.constant 0 : index
    %c0_237 = arith.constant 0 : index
    %373 = vector.load %arg16[%c0_236, %c0_237] : memref<1x8xf32, #tpu.memory_space<vmem>>, vector<1x8xf32>
    %374 = vector.broadcast %373 : vector<1x8xf32> to vector<64x8xf32>
    %375 = arith.mulf %336, %374 : vector<64x8xf32>
    %cst_238 = arith.constant dense<0.000000e+00> : vector<64xf32>
    %376 = vector.multi_reduction <add>, %375, %cst_238 [1] : vector<64x8xf32> to vector<64xf32>
    %377 = vector.shape_cast %376 : vector<64xf32> to vector<64x1xf32>
    %cst_239 = arith.constant dense<0xFF800000> : vector<1xf32>
    %378 = vector.multi_reduction <maximumf>, %377, %cst_239 [0] : vector<64x1xf32> to vector<1xf32>
    %379 = vector.shape_cast %378 : vector<1xf32> to vector<1x1xf32>
    %380 = vector.broadcast %379 : vector<1x1xf32> to vector<64x1xf32>
    %381 = arith.subf %377, %380 : vector<64x1xf32>
    %382 = math.exp %381 : vector<64x1xf32>
    %cst_240 = arith.constant dense<0.000000e+00> : vector<1xf32>
    %383 = vector.multi_reduction <add>, %382, %cst_240 [0] : vector<64x1xf32> to vector<1xf32>
    %384 = vector.shape_cast %383 : vector<1xf32> to vector<1x1xf32>
    %385 = vector.broadcast %384 : vector<1x1xf32> to vector<64x1xf32>
    %386 = arith.divf %382, %385 : vector<64x1xf32>
    %387 = vector.broadcast %386 : vector<64x1xf32> to vector<64x8xf32>
    %388 = arith.mulf %336, %387 : vector<64x8xf32>
    %cst_241 = arith.constant dense<0.000000e+00> : vector<8xf32>
    %389 = vector.multi_reduction <add>, %388, %cst_241 [0] : vector<64x8xf32> to vector<8xf32>
    %390 = vector.shape_cast %389 : vector<8xf32> to vector<1x8xf32>
    %c0_242 = arith.constant 0 : index
    %c0_243 = arith.constant 0 : index
    %391 = vector.load %arg17[%c0_242, %c0_243] : memref<8x2xf32, #tpu.memory_space<vmem>>, vector<8x2xf32>
    %cst_244 = arith.constant dense<0.000000e+00> : vector<1x2xf32>
    %392 = tpu.matmul %354, %391, %cst_244 {dimension_numbers = #tpu.dot_dimension_numbers<[1], [0], [0], [1], [0, 0, 1, 1], [], []>} : vector<1x8xf32>, vector<8x2xf32>, vector<1x2xf32> -> vector<1x2xf32>
    %c0_245 = arith.constant 0 : index
    %c0_246 = arith.constant 0 : index
    %393 = vector.load %arg18[%c0_245, %c0_246] : memref<1x2xf32, #tpu.memory_space<vmem>>, vector<1x2xf32>
    %394 = arith.addf %392, %393 : vector<1x2xf32>
    %395 = math.tanh %394 : vector<1x2xf32>
    %c0_247 = arith.constant 0 : index
    %c0_248 = arith.constant 0 : index
    %396 = vector.load %arg19[%c0_247, %c0_248] : memref<2x8xf32, #tpu.memory_space<vmem>>, vector<2x8xf32>
    %cst_249 = arith.constant dense<0.000000e+00> : vector<1x8xf32>
    %397 = tpu.matmul %395, %396, %cst_249 {dimension_numbers = #tpu.dot_dimension_numbers<[1], [0], [0], [1], [0, 0, 1, 1], [], []>} : vector<1x2xf32>, vector<2x8xf32>, vector<1x8xf32> -> vector<1x8xf32>
    %c0_250 = arith.constant 0 : index
    %c0_251 = arith.constant 0 : index
    %398 = vector.load %arg20[%c0_250, %c0_251] : memref<1x8xf32, #tpu.memory_space<vmem>>, vector<1x8xf32>
    %399 = arith.addf %397, %398 : vector<1x8xf32>
    %400 = arith.negf %399 : vector<1x8xf32>
    %401 = math.exp %400 : vector<1x8xf32>
    %cst_252 = arith.constant 1.000000e+00 : f32
    %402 = vector.broadcast %cst_252 : f32 to vector<1x8xf32>
    %403 = arith.addf %402, %401 : vector<1x8xf32>
    %404 = arith.divf %402, %403 : vector<1x8xf32>
    %c0_253 = arith.constant 0 : index
    %c0_254 = arith.constant 0 : index
    %405 = vector.load %arg21[%c0_253, %c0_254] : memref<8x4xf32, #tpu.memory_space<vmem>>, vector<8x4xf32>
    %cst_255 = arith.constant dense<0.000000e+00> : vector<1x4xf32>
    %406 = tpu.matmul %372, %405, %cst_255 {dimension_numbers = #tpu.dot_dimension_numbers<[1], [0], [0], [1], [0, 0, 1, 1], [], []>} : vector<1x8xf32>, vector<8x4xf32>, vector<1x4xf32> -> vector<1x4xf32>
    %c0_256 = arith.constant 0 : index
    %c0_257 = arith.constant 0 : index
    %407 = vector.load %arg22[%c0_256, %c0_257] : memref<8x4xf32, #tpu.memory_space<vmem>>, vector<8x4xf32>
    %cst_258 = arith.constant dense<0.000000e+00> : vector<1x4xf32>
    %408 = tpu.matmul %390, %407, %cst_258 {dimension_numbers = #tpu.dot_dimension_numbers<[1], [0], [0], [1], [0, 0, 1, 1], [], []>} : vector<1x8xf32>, vector<8x4xf32>, vector<1x4xf32> -> vector<1x4xf32>
    %409 = arith.addf %406, %408 : vector<1x4xf32>
    %c0_259 = arith.constant 0 : index
    %c0_260 = arith.constant 0 : index
    %410 = vector.load %arg23[%c0_259, %c0_260] : memref<1x4xf32, #tpu.memory_space<vmem>>, vector<1x4xf32>
    %411 = arith.addf %409, %410 : vector<1x4xf32>
    %412 = math.tanh %411 : vector<1x4xf32>
    %c0_261 = arith.constant 0 : index
    %c0_262 = arith.constant 0 : index
    %413 = vector.load %arg24[%c0_261, %c0_262] : memref<4x8xf32, #tpu.memory_space<vmem>>, vector<4x8xf32>
    %cst_263 = arith.constant dense<0.000000e+00> : vector<1x8xf32>
    %414 = tpu.matmul %412, %413, %cst_263 {dimension_numbers = #tpu.dot_dimension_numbers<[1], [0], [0], [1], [0, 0, 1, 1], [], []>} : vector<1x4xf32>, vector<4x8xf32>, vector<1x8xf32> -> vector<1x8xf32>
    %c0_264 = arith.constant 0 : index
    %c0_265 = arith.constant 0 : index
    %415 = vector.load %arg25[%c0_264, %c0_265] : memref<1x8xf32, #tpu.memory_space<vmem>>, vector<1x8xf32>
    %416 = arith.addf %414, %415 : vector<1x8xf32>
    %c0_266 = arith.constant 0 : index
    %c0_267 = arith.constant 0 : index
    %417 = vector.load %arg26[%c0_266, %c0_267] : memref<4x8xf32, #tpu.memory_space<vmem>>, vector<4x8xf32>
    %cst_268 = arith.constant dense<0.000000e+00> : vector<1x8xf32>
    %418 = tpu.matmul %412, %417, %cst_268 {dimension_numbers = #tpu.dot_dimension_numbers<[1], [0], [0], [1], [0, 0, 1, 1], [], []>} : vector<1x4xf32>, vector<4x8xf32>, vector<1x8xf32> -> vector<1x8xf32>
    %c0_269 = arith.constant 0 : index
    %c0_270 = arith.constant 0 : index
    %419 = vector.load %arg27[%c0_269, %c0_270] : memref<1x8xf32, #tpu.memory_space<vmem>>, vector<1x8xf32>
    %420 = arith.addf %418, %419 : vector<1x8xf32>
    %421 = arith.maximumf %416, %420 : vector<1x8xf32>
    %422 = arith.subf %416, %421 : vector<1x8xf32>
    %423 = math.exp %422 : vector<1x8xf32>
    %424 = arith.subf %420, %421 : vector<1x8xf32>
    %425 = math.exp %424 : vector<1x8xf32>
    %426 = arith.mulf %423, %372 : vector<1x8xf32>
    %427 = arith.mulf %425, %390 : vector<1x8xf32>
    %428 = arith.addf %426, %427 : vector<1x8xf32>
    %429 = arith.addf %423, %425 : vector<1x8xf32>
    %430 = arith.divf %428, %429 : vector<1x8xf32>
    %431 = vector.broadcast %404 : vector<1x8xf32> to vector<64x8xf32>
    %432 = arith.mulf %176, %431 : vector<64x8xf32>
    %433 = vector.broadcast %430 : vector<1x8xf32> to vector<64x8xf32>
    %434 = arith.addf %432, %433 : vector<64x8xf32>
    %c0_271 = arith.constant 0 : index
    %c0_272 = arith.constant 0 : index
    %c0_273 = arith.constant 0 : index
    %435 = vector.load %arg28[%c0_271, %c0_272, %c0_273] : memref<1x64x8xf32, #tpu.memory_space<vmem>>, vector<1x64x8xf32>
    %436 = vector.shape_cast %435 : vector<1x64x8xf32> to vector<64x8xf32>
    %437 = vector.shape_cast %434 : vector<64x8xf32> to vector<1x64x8xf32>
    tpu.vector_store %arg28[%c0_271, %c0_272, %c0_273], %437 {strides = array<i32>} : memref<1x64x8xf32, #tpu.memory_space<vmem>>, vector<1x64x8xf32>,
    return
  }
  func.func @transform_0(%arg0: i32) -> (i32, i32, i32) {
    %c0_i32 = arith.constant 0 : i32
    %c0_i32_0 = arith.constant 0 : i32
    %c0_i32_1 = arith.constant 0 : i32
    return %arg0, %c0_i32, %c0_i32_0 : i32, i32, i32
  }
  func.func @transform_1(%arg0: i32) -> (i32, i32) {
    %c0_i32 = arith.constant 0 : i32
    %c0_i32_0 = arith.constant 0 : i32
    %c0_i32_1 = arith.constant 0 : i32
    return %c0_i32, %c0_i32_0 : i32, i32
  }
  func.func @transform_2(%arg0: i32) -> (i32, i32) {
    %c0_i32 = arith.constant 0 : i32
    %c0_i32_0 = arith.constant 0 : i32
    %c0_i32_1 = arith.constant 0 : i32
    return %c0_i32, %c0_i32_0 : i32, i32
  }
  func.func @transform_3(%arg0: i32) -> (i32, i32) {
    %c0_i32 = arith.constant 0 : i32
    %c0_i32_0 = arith.constant 0 : i32
    %c0_i32_1 = arith.constant 0 : i32
    return %c0_i32, %c0_i32_0 : i32, i32
  }
  func.func @transform_4(%arg0: i32) -> (i32, i32) {
    %c0_i32 = arith.constant 0 : i32
    %c0_i32_0 = arith.constant 0 : i32
    %c0_i32_1 = arith.constant 0 : i32
    return %c0_i32, %c0_i32_0 : i32, i32
  }
  func.func @transform_5(%arg0: i32) -> (i32, i32) {
    %c0_i32 = arith.constant 0 : i32
    %c0_i32_0 = arith.constant 0 : i32
    %c0_i32_1 = arith.constant 0 : i32
    return %c0_i32, %c0_i32_0 : i32, i32
  }
  func.func @transform_6(%arg0: i32) -> (i32, i32, i32) {
    %c0_i32 = arith.constant 0 : i32
    %c0_i32_0 = arith.constant 0 : i32
    %c0_i32_1 = arith.constant 0 : i32
    %c0_i32_2 = arith.constant 0 : i32
    return %c0_i32, %c0_i32_0, %c0_i32_1 : i32, i32, i32
  }
  func.func @transform_7(%arg0: i32) -> (i32, i32) {
    %c0_i32 = arith.constant 0 : i32
    %c0_i32_0 = arith.constant 0 : i32
    %c0_i32_1 = arith.constant 0 : i32
    return %c0_i32, %c0_i32_0 : i32, i32
  }
  func.func @transform_8(%arg0: i32) -> (i32, i32) {
    %c0_i32 = arith.constant 0 : i32
    %c0_i32_0 = arith.constant 0 : i32
    %c0_i32_1 = arith.constant 0 : i32
    return %c0_i32, %c0_i32_0 : i32, i32
  }
  func.func @transform_9(%arg0: i32) -> (i32, i32) {
    %c0_i32 = arith.constant 0 : i32
    %c0_i32_0 = arith.constant 0 : i32
    %c0_i32_1 = arith.constant 0 : i32
    return %c0_i32, %c0_i32_0 : i32, i32
  }
  func.func @transform_10(%arg0: i32) -> (i32, i32) {
    %c0_i32 = arith.constant 0 : i32
    %c0_i32_0 = arith.constant 0 : i32
    %c0_i32_1 = arith.constant 0 : i32
    return %c0_i32, %c0_i32_0 : i32, i32
  }
  func.func @transform_11(%arg0: i32) -> (i32, i32) {
    %c0_i32 = arith.constant 0 : i32
    %c0_i32_0 = arith.constant 0 : i32
    %c0_i32_1 = arith.constant 0 : i32
    return %c0_i32, %c0_i32_0 : i32, i32
  }
  func.func @transform_12(%arg0: i32) -> (i32, i32) {
    %c0_i32 = arith.constant 0 : i32
    %c0_i32_0 = arith.constant 0 : i32
    %c0_i32_1 = arith.constant 0 : i32
    return %c0_i32, %c0_i32_0 : i32, i32
  }
  func.func @transform_13(%arg0: i32) -> (i32, i32) {
    %c0_i32 = arith.constant 0 : i32
    %c0_i32_0 = arith.constant 0 : i32
    %c0_i32_1 = arith.constant 0 : i32
    return %c0_i32, %c0_i32_0 : i32, i32
  }
  func.func @transform_14(%arg0: i32) -> (i32, i32) {
    %c0_i32 = arith.constant 0 : i32
    %c0_i32_0 = arith.constant 0 : i32
    %c0_i32_1 = arith.constant 0 : i32
    return %c0_i32, %c0_i32_0 : i32, i32
  }
  func.func @transform_15(%arg0: i32) -> (i32, i32) {
    %c0_i32 = arith.constant 0 : i32
    %c0_i32_0 = arith.constant 0 : i32
    %c0_i32_1 = arith.constant 0 : i32
    return %c0_i32, %c0_i32_0 : i32, i32
  }
  func.func @transform_16(%arg0: i32) -> (i32, i32) {
    %c0_i32 = arith.constant 0 : i32
    %c0_i32_0 = arith.constant 0 : i32
    %c0_i32_1 = arith.constant 0 : i32
    return %c0_i32, %c0_i32_0 : i32, i32
  }
  func.func @transform_17(%arg0: i32) -> (i32, i32) {
    %c0_i32 = arith.constant 0 : i32
    %c0_i32_0 = arith.constant 0 : i32
    %c0_i32_1 = arith.constant 0 : i32
    return %c0_i32, %c0_i32_0 : i32, i32
  }
  func.func @transform_18(%arg0: i32) -> (i32, i32) {
    %c0_i32 = arith.constant 0 : i32
    %c0_i32_0 = arith.constant 0 : i32
    %c0_i32_1 = arith.constant 0 : i32
    return %c0_i32, %c0_i32_0 : i32, i32
  }
  func.func @transform_19(%arg0: i32) -> (i32, i32) {
    %c0_i32 = arith.constant 0 : i32
    %c0_i32_0 = arith.constant 0 : i32
    %c0_i32_1 = arith.constant 0 : i32
    return %c0_i32, %c0_i32_0 : i32, i32
  }
  func.func @transform_20(%arg0: i32) -> (i32, i32) {
    %c0_i32 = arith.constant 0 : i32
    %c0_i32_0 = arith.constant 0 : i32
    %c0_i32_1 = arith.constant 0 : i32
    return %c0_i32, %c0_i32_0 : i32, i32
  }
  func.func @transform_21(%arg0: i32) -> (i32, i32) {
    %c0_i32 = arith.constant 0 : i32
    %c0_i32_0 = arith.constant 0 : i32
    %c0_i32_1 = arith.constant 0 : i32
    return %c0_i32, %c0_i32_0 : i32, i32
  }
  func.func @transform_22(%arg0: i32) -> (i32, i32) {
    %c0_i32 = arith.constant 0 : i32
    %c0_i32_0 = arith.constant 0 : i32
    %c0_i32_1 = arith.constant 0 : i32
    return %c0_i32, %c0_i32_0 : i32, i32
  }
  func.func @transform_23(%arg0: i32) -> (i32, i32) {
    %c0_i32 = arith.constant 0 : i32
    %c0_i32_0 = arith.constant 0 : i32
    %c0_i32_1 = arith.constant 0 : i32
    return %c0_i32, %c0_i32_0 : i32, i32
  }
  func.func @transform_24(%arg0: i32) -> (i32, i32) {
    %c0_i32 = arith.constant 0 : i32
    %c0_i32_0 = arith.constant 0 : i32
    %c0_i32_1 = arith.constant 0 : i32
    return %c0_i32, %c0_i32_0 : i32, i32
  }
  func.func @transform_25(%arg0: i32) -> (i32, i32) {
    %c0_i32 = arith.constant 0 : i32
    %c0_i32_0 = arith.constant 0 : i32
    %c0_i32_1 = arith.constant 0 : i32
    return %c0_i32, %c0_i32_0 : i32, i32
  }
  func.func @transform_26(%arg0: i32) -> (i32, i32) {
    %c0_i32 = arith.constant 0 : i32
    %c0_i32_0 = arith.constant 0 : i32
    %c0_i32_1 = arith.constant 0 : i32
    return %c0_i32, %c0_i32_0 : i32, i32
  }
  func.func @transform_27(%arg0: i32) -> (i32, i32, i32) {
    %c0_i32 = arith.constant 0 : i32
    %c0_i32_0 = arith.constant 0 : i32
    %c0_i32_1 = arith.constant 0 : i32
    return %arg0, %c0_i32, %c0_i32_0 : i32, i32, i32
  }
}

</mosaic_0001>

<llo_original>
// kernel: _lambda_.1
$region0: #{_lambda_.1}
  #allocation0 [shape = 'u32[]', space=smem, size = 0x4, offset = 0x4, fixed_abs, tag = 'smem constant byte address 0x4 - core index']
  #allocation1 [shape = 'u32[72,128]{1,0:T(1,128)}', space=vmem, size = 0x9000, scoped, tag = 'internal scratch']
  #allocation2 [shape = 'f32[36,9,12]{2,1,0:T(8,128)}', space=vmem, size = 0x48000, scoped, tag = 'scratch operand']
  #allocation3 [shape = 'f32[12,12,8]{2,1,0:T(8,128)}', space=vmem, size = 0x18000, scoped, tag = 'scratch operand']
  %s0 = inlined_call_operand.vmem [shape: bf16[2,256,16], index: 0, kind: input, shape index: {}]
  %s1 = inlined_call_operand.vmem [shape: f32[1,16], index: 1, kind: input, shape index: {}]
  %s2 = inlined_call_operand.vmem [shape: f32[1,16], index: 2, kind: input, shape index: {}]
  %s3 = inlined_call_operand.vmem [shape: bf16[16,12], index: 3, kind: input, shape index: {}]
  %s4 = inlined_call_operand.vmem [shape: f32[1,12], index: 4, kind: input, shape index: {}]
  %s5 = inlined_call_operand.vmem [shape: f32[1,12], index: 5, kind: input, shape index: {}]
  %s6 = inlined_call_operand.vmem [shape: bf16[9,12,8], index: 6, kind: input, shape index: {}]
  %s7 = inlined_call_operand.vmem [shape: f32[1,8], index: 7, kind: input, shape index: {}]
  %s8 = inlined_call_operand.vmem [shape: f32[1,8], index: 8, kind: input, shape index: {}]
  %s9 = inlined_call_operand.vmem [shape: f32[9,8], index: 9, kind: input, shape index: {}]
  %s10 = inlined_call_operand.vmem [shape: f32[1,8], index: 10, kind: input, shape index: {}]
  %s11 = inlined_call_operand.vmem [shape: f32[1,8], index: 11, kind: input, shape index: {}]
  %s12 = inlined_call_operand.vmem [shape: f32[9,8], index: 12, kind: input, shape index: {}]
  %s13 = inlined_call_operand.vmem [shape: f32[1,8], index: 13, kind: input, shape index: {}]
  %s14 = inlined_call_operand.vmem [shape: f32[1,8], index: 14, kind: input, shape index: {}]
  %s15 = inlined_call_operand.vmem [shape: f32[1,8], index: 15, kind: input, shape index: {}]
  %s16 = inlined_call_operand.vmem [shape: f32[8,2], index: 16, kind: input, shape index: {}]
  %s17 = inlined_call_operand.vmem [shape: f32[1,2], index: 17, kind: input, shape index: {}]
  %s18 = inlined_call_operand.vmem [shape: f32[2,8], index: 18, kind: input, shape index: {}]
  %s19 = inlined_call_operand.vmem [shape: f32[1,8], index: 19, kind: input, shape index: {}]
  %s20 = inlined_call_operand.vmem [shape: f32[8,4], index: 20, kind: input, shape index: {}]
  %s21 = inlined_call_operand.vmem [shape: f32[8,4], index: 21, kind: input, shape index: {}]
  %s22 = inlined_call_operand.vmem [shape: f32[1,4], index: 22, kind: input, shape index: {}]
  %s23 = inlined_call_operand.vmem [shape: f32[4,8], index: 23, kind: input, shape index: {}]
  %s24 = inlined_call_operand.vmem [shape: f32[1,8], index: 24, kind: input, shape index: {}]
  %s25 = inlined_call_operand.vmem [shape: f32[4,8], index: 25, kind: input, shape index: {}]
  %s26 = inlined_call_operand.vmem [shape: f32[1,8], index: 26, kind: input, shape index: {}]
  %s27 = inlined_call_operand.vmem [shape: f32[2,64,8], index: 27, kind: output, shape index: {}]
  %s28 = sld [smem:[#allocation0]]
  $region141: #{_lambda_.1} parent=0
    _
  %s30 = ssub.s32 1, %s28
  %s31 = scalar_select 0, %s30, %s28
  loop: start=0, step=1, limit=4
  $region2: #{_lambda_.1} parent=0 // loop_pre_header
    _
  $region3: #{_lambda_.1} parent=0 // loop_header
    %s33 = sphi 0, %s37
    %p34 = scmp.ge.s32.totalorder %s33, 4
    %s43 = sphi 0, %s45
    %s46 = sphi 0, %s43
    %s47 = sphi 0, %s46
    %s63 = sphi 0, %s47
    %s67 = sphi 0, %s67
    %s69 = sphi 0, %s67
    %s70 = sphi 0, %s69
    %s84 = sphi 0, %s70
    %s88 = sphi 0, %s88
    %s90 = sphi 0, %s88
    %s91 = sphi 0, %s90
    %s105 = sphi 0, %s91
    %s109 = sphi 0, %s109
    %s111 = sphi 0, %s109
    %s112 = sphi 0, %s111
    %s126 = sphi 0, %s112
    %s130 = sphi 0, %s130
    %s132 = sphi 0, %s130
    %s133 = sphi 0, %s132
    %s147 = sphi 0, %s133
    %s151 = sphi 0, %s151
    %s153 = sphi 0, %s151
    %s154 = sphi 0, %s153
    %s168 = sphi 0, %s154
    %s172 = sphi 0, %s172
    %s174 = sphi 0, %s172
    %s175 = sphi 0, %s174
    %s189 = sphi 0, %s175
    %s193 = sphi 0, %s193
    %s195 = sphi 0, %s193
    %s196 = sphi 0, %s195
    %s210 = sphi 0, %s196
    %s214 = sphi 0, %s214
    %s216 = sphi 0, %s214
    %s217 = sphi 0, %s216
    %s231 = sphi 0, %s217
    %s235 = sphi 0, %s235
    %s237 = sphi 0, %s235
    %s238 = sphi 0, %s237
    %s252 = sphi 0, %s238
    %s256 = sphi 0, %s256
    %s258 = sphi 0, %s256
    %s259 = sphi 0, %s258
    %s273 = sphi 0, %s259
    %s277 = sphi 0, %s277
    %s279 = sphi 0, %s277
    %s280 = sphi 0, %s279
    %s294 = sphi 0, %s280
    %s298 = sphi 0, %s298
    %s300 = sphi 0, %s298
    %s301 = sphi 0, %s300
    %s315 = sphi 0, %s301
    %s319 = sphi 0, %s319
    %s321 = sphi 0, %s319
    %s322 = sphi 0, %s321
    %s336 = sphi 0, %s322
    %s340 = sphi 0, %s340
    %s342 = sphi 0, %s340
    %s343 = sphi 0, %s342
    %s357 = sphi 0, %s343
    %s361 = sphi 0, %s361
    %s363 = sphi 0, %s361
    %s364 = sphi 0, %s363
    %s378 = sphi 0, %s364
    %s382 = sphi 0, %s382
    %s384 = sphi 0, %s382
    %s385 = sphi 0, %s384
    %s399 = sphi 0, %s385
    %s403 = sphi 0, %s403
    %s405 = sphi 0, %s403
    %s406 = sphi 0, %s405
    %s420 = sphi 0, %s406
    %s424 = sphi 0, %s424
    %s426 = sphi 0, %s424
    %s427 = sphi 0, %s426
    %s441 = sphi 0, %s427
    %s445 = sphi 0, %s445
    %s447 = sphi 0, %s445
    %s448 = sphi 0, %s447
    %s462 = sphi 0, %s448
    %s466 = sphi 0, %s466
    %s468 = sphi 0, %s466
    %s469 = sphi 0, %s468
    %s483 = sphi 0, %s469
    %s487 = sphi 0, %s487
    %s489 = sphi 0, %s487
    %s490 = sphi 0, %s489
    %s504 = sphi 0, %s490
    %s508 = sphi 0, %s508
    %s510 = sphi 0, %s508
    %s511 = sphi 0, %s510
    %s525 = sphi 0, %s511
    %s529 = sphi 0, %s529
    %s531 = sphi 0, %s529
    %s532 = sphi 0, %s531
    %s546 = sphi 0, %s532
    %s550 = sphi 0, %s550
    %s552 = sphi 0, %s550
    %s553 = sphi 0, %s552
    %s567 = sphi 0, %s553
    %s571 = sphi 0, %s571
    %s573 = sphi 0, %s571
    %s574 = sphi 0, %s573
    %s588 = sphi 0, %s574
    %s592 = sphi 0, %s592
    %s594 = sphi 0, %s592
    %s595 = sphi 0, %s594
    %s609 = sphi 0, %s595
    %s615 = sphi 0, %s617
    %s618 = sphi 0, %s615
    %s619 = sphi 0, %s618
    %s635 = sphi 0, %s619
  $region4: #{_lambda_.1} parent=0 // loop_header_branch
    %36 = sbr.rel (%p34) target = $region8
  $region5: #{_lambda_.1} parent=0 // loop_body
    %s38 = ssub.s32 %s33, 1
    %s39 = ssub.s32 %s33, 2
    %s40 = sadd.s32 %s33, 1
    %s41 = ssub.s32 %s33, %s40
    %p42 = scmp.eq.s32.totalorder %s41, 0
    %s44 = sadd.s32 %s43, 1
    %s45 = scalar_select %p42, %s43, %s44
    %p48 = pneg %p42
    %p49 = scmp.eq.s32.totalorder %s33, 1
    %p50 = por %p48, %p49
    %p51 = scmp.ne.s32.totalorder %s43, %s46
    %p52 = scmp.eq.s32.totalorder %s33, 0
    %p53 = por %p51, %p52
    %p54 = scmp.ne.s32.totalorder %s43, %s46
    %p55 = scmp.eq.s32.totalorder %s38, 1
    %p56 = por %p54, %p55
    %p57 = scmp.ne.s32.totalorder %s46, %s47
    %p58 = scmp.eq.s32.totalorder %s38, 0
    %p59 = por %p57, %p58
    %p60 = scmp.ne.s32.totalorder %s46, %s47
    %p61 = scmp.eq.s32.totalorder %s39, 1
    %p62 = por %p60, %p61
    %p64 = scmp.ne.s32.totalorder %s47, %s63
    %p65 = scmp.eq.s32.totalorder %s39, 0
    %p66 = por %p64, %p65
    %s68 = sadd.s32 %s67, 1
    %p71 = scmp.eq.s32.totalorder %s33, 1
    %p72 = scmp.ne.s32.totalorder %s67, %s69
    %p73 = scmp.eq.s32.totalorder %s33, 0
    %p74 = por %p72, %p73
    %p75 = scmp.ne.s32.totalorder %s67, %s69
    %p76 = scmp.eq.s32.totalorder %s38, 1
    %p77 = por %p75, %p76
    %p78 = scmp.ne.s32.totalorder %s69, %s70
    %p79 = scmp.eq.s32.totalorder %s38, 0
    %p80 = por %p78, %p79
    %p81 = scmp.ne.s32.totalorder %s69, %s70
    %p82 = scmp.eq.s32.totalorder %s39, 1
    %p83 = por %p81, %p82
    %p85 = scmp.ne.s32.totalorder %s70, %s84
    %p86 = scmp.eq.s32.totalorder %s39, 0
    %p87 = por %p85, %p86
    %s89 = sadd.s32 %s88, 1
    %p92 = scmp.eq.s32.totalorder %s33, 1
    %p93 = scmp.ne.s32.totalorder %s88, %s90
    %p94 = scmp.eq.s32.totalorder %s33, 0
    %p95 = por %p93, %p94
    %p96 = scmp.ne.s32.totalorder %s88, %s90
    %p97 = scmp.eq.s32.totalorder %s38, 1
    %p98 = por %p96, %p97
    %p99 = scmp.ne.s32.totalorder %s90, %s91
    %p100 = scmp.eq.s32.totalorder %s38, 0
    %p101 = por %p99, %p100
    %p102 = scmp.ne.s32.totalorder %s90, %s91
    %p103 = scmp.eq.s32.totalorder %s39, 1
    %p104 = por %p102, %p103
    %p106 = scmp.ne.s32.totalorder %s91, %s105
    %p107 = scmp.eq.s32.totalorder %s39, 0
    %p108 = por %p106, %p107
    %s110 = sadd.s32 %s109, 1
    %p113 = scmp.eq.s32.totalorder %s33, 1
    %p114 = scmp.ne.s32.totalorder %s109, %s111
    %p115 = scmp.eq.s32.totalorder %s33, 0
    %p116 = por %p114, %p115
    %p117 = scmp.ne.s32.totalorder %s109, %s111
    %p118 = scmp.eq.s32.totalorder %s38, 1
    %p119 = por %p117, %p118
    %p120 = scmp.ne.s32.totalorder %s111, %s112
    %p121 = scmp.eq.s32.totalorder %s38, 0
    %p122 = por %p120, %p121
    %p123 = scmp.ne.s32.totalorder %s111, %s112
    %p124 = scmp.eq.s32.totalorder %s39, 1
    %p125 = por %p123, %p124
    %p127 = scmp.ne.s32.totalorder %s112, %s126
    %p128 = scmp.eq.s32.totalorder %s39, 0
    %p129 = por %p127, %p128
    %s131 = sadd.s32 %s130, 1
    %p134 = scmp.eq.s32.totalorder %s33, 1
    %p135 = scmp.ne.s32.totalorder %s130, %s132
    %p136 = scmp.eq.s32.totalorder %s33, 0
    %p137 = por %p135, %p136
    %p138 = scmp.ne.s32.totalorder %s130, %s132
    %p139 = scmp.eq.s32.totalorder %s38, 1
    %p140 = por %p138, %p139
    %p141 = scmp.ne.s32.totalorder %s132, %s133
    %p142 = scmp.eq.s32.totalorder %s38, 0
    %p143 = por %p141, %p142
    %p144 = scmp.ne.s32.totalorder %s132, %s133
    %p145 = scmp.eq.s32.totalorder %s39, 1
    %p146 = por %p144, %p145
    %p148 = scmp.ne.s32.totalorder %s133, %s147
    %p149 = scmp.eq.s32.totalorder %s39, 0
    %p150 = por %p148, %p149
    %s152 = sadd.s32 %s151, 1
    %p155 = scmp.eq.s32.totalorder %s33, 1
    %p156 = scmp.ne.s32.totalorder %s151, %s153
    %p157 = scmp.eq.s32.totalorder %s33, 0
    %p158 = por %p156, %p157
    %p159 = scmp.ne.s32.totalorder %s151, %s153
    %p160 = scmp.eq.s32.totalorder %s38, 1
    %p161 = por %p159, %p160
    %p162 = scmp.ne.s32.totalorder %s153, %s154
    %p163 = scmp.eq.s32.totalorder %s38, 0
    %p164 = por %p162, %p163
    %p165 = scmp.ne.s32.totalorder %s153, %s154
    %p166 = scmp.eq.s32.totalorder %s39, 1
    %p167 = por %p165, %p166
    %p169 = scmp.ne.s32.totalorder %s154, %s168
    %p170 = scmp.eq.s32.totalorder %s39, 0
    %p171 = por %p169, %p170
    %s173 = sadd.s32 %s172, 1
    %p176 = scmp.eq.s32.totalorder %s33, 1
    %p177 = scmp.ne.s32.totalorder %s172, %s174
    %p178 = scmp.eq.s32.totalorder %s33, 0
    %p179 = por %p177, %p178
    %p180 = scmp.ne.s32.totalorder %s172, %s174
    %p181 = scmp.eq.s32.totalorder %s38, 1
    %p182 = por %p180, %p181
    %p183 = scmp.ne.s32.totalorder %s174, %s175
    %p184 = scmp.eq.s32.totalorder %s38, 0
    %p185 = por %p183, %p184
    %p186 = scmp.ne.s32.totalorder %s174, %s175
    %p187 = scmp.eq.s32.totalorder %s39, 1
    %p188 = por %p186, %p187
    %p190 = scmp.ne.s32.totalorder %s175, %s189
    %p191 = scmp.eq.s32.totalorder %s39, 0
    %p192 = por %p190, %p191
    %s194 = sadd.s32 %s193, 1
    %p197 = scmp.eq.s32.totalorder %s33, 1
    %p198 = scmp.ne.s32.totalorder %s193, %s195
    %p199 = scmp.eq.s32.totalorder %s33, 0
    %p200 = por %p198, %p199
    %p201 = scmp.ne.s32.totalorder %s193, %s195
    %p202 = scmp.eq.s32.totalorder %s38, 1
    %p203 = por %p201, %p202
    %p204 = scmp.ne.s32.totalorder %s195, %s196
    %p205 = scmp.eq.s32.totalorder %s38, 0
    %p206 = por %p204, %p205
    %p207 = scmp.ne.s32.totalorder %s195, %s196
    %p208 = scmp.eq.s32.totalorder %s39, 1
    %p209 = por %p207, %p208
    %p211 = scmp.ne.s32.totalorder %s196, %s210
    %p212 = scmp.eq.s32.totalorder %s39, 0
    %p213 = por %p211, %p212
    %s215 = sadd.s32 %s214, 1
    %p218 = scmp.eq.s32.totalorder %s33, 1
    %p219 = scmp.ne.s32.totalorder %s214, %s216
    %p220 = scmp.eq.s32.totalorder %s33, 0
    %p221 = por %p219, %p220
    %p222 = scmp.ne.s32.totalorder %s214, %s216
    %p223 = scmp.eq.s32.totalorder %s38, 1
    %p224 = por %p222, %p223
    %p225 = scmp.ne.s32.totalorder %s216, %s217
    %p226 = scmp.eq.s32.totalorder %s38, 0
    %p227 = por %p225, %p226
    %p228 = scmp.ne.s32.totalorder %s216, %s217
    %p229 = scmp.eq.s32.totalorder %s39, 1
    %p230 = por %p228, %p229
    %p232 = scmp.ne.s32.totalorder %s217, %s231
    %p233 = scmp.eq.s32.totalorder %s39, 0
    %p234 = por %p232, %p233
    %s236 = sadd.s32 %s235, 1
    %p239 = scmp.eq.s32.totalorder %s33, 1
    %p240 = scmp.ne.s32.totalorder %s235, %s237
    %p241 = scmp.eq.s32.totalorder %s33, 0
    %p242 = por %p240, %p241
    %p243 = scmp.ne.s32.totalorder %s235, %s237
    %p244 = scmp.eq.s32.totalorder %s38, 1
    %p245 = por %p243, %p244
    %p246 = scmp.ne.s32.totalorder %s237, %s238
    %p247 = scmp.eq.s32.totalorder %s38, 0
    %p248 = por %p246, %p247
    %p249 = scmp.ne.s32.totalorder %s237, %s238
    %p250 = scmp.eq.s32.totalorder %s39, 1
    %p251 = por %p249, %p250
    %p253 = scmp.ne.s32.totalorder %s238, %s252
    %p254 = scmp.eq.s32.totalorder %s39, 0
    %p255 = por %p253, %p254
    %s257 = sadd.s32 %s256, 1
    %p260 = scmp.eq.s32.totalorder %s33, 1
    %p261 = scmp.ne.s32.totalorder %s256, %s258
    %p262 = scmp.eq.s32.totalorder %s33, 0
    %p263 = por %p261, %p262
    %p264 = scmp.ne.s32.totalorder %s256, %s258
    %p265 = scmp.eq.s32.totalorder %s38, 1
    %p266 = por %p264, %p265
    %p267 = scmp.ne.s32.totalorder %s258, %s259
    %p268 = scmp.eq.s32.totalorder %s38, 0
    %p269 = por %p267, %p268
    %p270 = scmp.ne.s32.totalorder %s258, %s259
    %p271 = scmp.eq.s32.totalorder %s39, 1
    %p272 = por %p270, %p271
    %p274 = scmp.ne.s32.totalorder %s259, %s273
    %p275 = scmp.eq.s32.totalorder %s39, 0
    %p276 = por %p274, %p275
    %s278 = sadd.s32 %s277, 1
    %p281 = scmp.eq.s32.totalorder %s33, 1
    %p282 = scmp.ne.s32.totalorder %s277, %s279
    %p283 = scmp.eq.s32.totalorder %s33, 0
    %p284 = por %p282, %p283
    %p285 = scmp.ne.s32.totalorder %s277, %s279
    %p286 = scmp.eq.s32.totalorder %s38, 1
    %p287 = por %p285, %p286
    %p288 = scmp.ne.s32.totalorder %s279, %s280
    %p289 = scmp.eq.s32.totalorder %s38, 0
    %p290 = por %p288, %p289
    %p291 = scmp.ne.s32.totalorder %s279, %s280
    %p292 = scmp.eq.s32.totalorder %s39, 1
    %p293 = por %p291, %p292
    %p295 = scmp.ne.s32.totalorder %s280, %s294
    %p296 = scmp.eq.s32.totalorder %s39, 0
    %p297 = por %p295, %p296
    %s299 = sadd.s32 %s298, 1
    %p302 = scmp.eq.s32.totalorder %s33, 1
    %p303 = scmp.ne.s32.totalorder %s298, %s300
    %p304 = scmp.eq.s32.totalorder %s33, 0
    %p305 = por %p303, %p304
    %p306 = scmp.ne.s32.totalorder %s298, %s300
    %p307 = scmp.eq.s32.totalorder %s38, 1
    %p308 = por %p306, %p307
    %p309 = scmp.ne.s32.totalorder %s300, %s301
    %p310 = scmp.eq.s32.totalorder %s38, 0
    %p311 = por %p309, %p310
    %p312 = scmp.ne.s32.totalorder %s300, %s301
    %p313 = scmp.eq.s32.totalorder %s39, 1
    %p314 = por %p312, %p313
    %p316 = scmp.ne.s32.totalorder %s301, %s315
    %p317 = scmp.eq.s32.totalorder %s39, 0
    %p318 = por %p316, %p317
    %s320 = sadd.s32 %s319, 1
    %p323 = scmp.eq.s32.totalorder %s33, 1
    %p324 = scmp.ne.s32.totalorder %s319, %s321
    %p325 = scmp.eq.s32.totalorder %s33, 0
    %p326 = por %p324, %p325
    %p327 = scmp.ne.s32.totalorder %s319, %s321
    %p328 = scmp.eq.s32.totalorder %s38, 1
    %p329 = por %p327, %p328
    %p330 = scmp.ne.s32.totalorder %s321, %s322
    %p331 = scmp.eq.s32.totalorder %s38, 0
    %p332 = por %p330, %p331
    %p333 = scmp.ne.s32.totalorder %s321, %s322
    %p334 = scmp.eq.s32.totalorder %s39, 1
    %p335 = por %p333, %p334
    %p337 = scmp.ne.s32.totalorder %s322, %s336
    %p338 = scmp.eq.s32.totalorder %s39, 0
    %p339 = por %p337, %p338
    %s341 = sadd.s32 %s340, 1
    %p344 = scmp.eq.s32.totalorder %s33, 1
    %p345 = scmp.ne.s32.totalorder %s340, %s342
    %p346 = scmp.eq.s32.totalorder %s33, 0
    %p347 = por %p345, %p346
    %p348 = scmp.ne.s32.totalorder %s340, %s342
    %p349 = scmp.eq.s32.totalorder %s38, 1
    %p350 = por %p348, %p349
    %p351 = scmp.ne.s32.totalorder %s342, %s343
    %p352 = scmp.eq.s32.totalorder %s38, 0
    %p353 = por %p351, %p352
    %p354 = scmp.ne.s32.totalorder %s342, %s343
    %p355 = scmp.eq.s32.totalorder %s39, 1
    %p356 = por %p354, %p355
    %p358 = scmp.ne.s32.totalorder %s343, %s357
    %p359 = scmp.eq.s32.totalorder %s39, 0
    %p360 = por %p358, %p359
    %s362 = sadd.s32 %s361, 1
    %p365 = scmp.eq.s32.totalorder %s33, 1
    %p366 = scmp.ne.s32.totalorder %s361, %s363
    %p367 = scmp.eq.s32.totalorder %s33, 0
    %p368 = por %p366, %p367
    %p369 = scmp.ne.s32.totalorder %s361, %s363
    %p370 = scmp.eq.s32.totalorder %s38, 1
    %p371 = por %p369, %p370
    %p372 = scmp.ne.s32.totalorder %s363, %s364
    %p373 = scmp.eq.s32.totalorder %s38, 0
    %p374 = por %p372, %p373
    %p375 = scmp.ne.s32.totalorder %s363, %s364
    %p376 = scmp.eq.s32.totalorder %s39, 1
    %p377 = por %p375, %p376
    %p379 = scmp.ne.s32.totalorder %s364, %s378
    %p380 = scmp.eq.s32.totalorder %s39, 0
    %p381 = por %p379, %p380
    %s383 = sadd.s32 %s382, 1
    %p386 = scmp.eq.s32.totalorder %s33, 1
    %p387 = scmp.ne.s32.totalorder %s382, %s384
    %p388 = scmp.eq.s32.totalorder %s33, 0
    %p389 = por %p387, %p388
    %p390 = scmp.ne.s32.totalorder %s382, %s384
    %p391 = scmp.eq.s32.totalorder %s38, 1
    %p392 = por %p390, %p391
    %p393 = scmp.ne.s32.totalorder %s384, %s385
    %p394 = scmp.eq.s32.totalorder %s38, 0
    %p395 = por %p393, %p394
    %p396 = scmp.ne.s32.totalorder %s384, %s385
    %p397 = scmp.eq.s32.totalorder %s39, 1
    %p398 = por %p396, %p397
    %p400 = scmp.ne.s32.totalorder %s385, %s399
    %p401 = scmp.eq.s32.totalorder %s39, 0
    %p402 = por %p400, %p401
    %s404 = sadd.s32 %s403, 1
    %p407 = scmp.eq.s32.totalorder %s33, 1
    %p408 = scmp.ne.s32.totalorder %s403, %s405
    %p409 = scmp.eq.s32.totalorder %s33, 0
    %p410 = por %p408, %p409
    %p411 = scmp.ne.s32.totalorder %s403, %s405
    %p412 = scmp.eq.s32.totalorder %s38, 1
    %p413 = por %p411, %p412
    %p414 = scmp.ne.s32.totalorder %s405, %s406
    %p415 = scmp.eq.s32.totalorder %s38, 0
    %p416 = por %p414, %p415
    %p417 = scmp.ne.s32.totalorder %s405, %s406
    %p418 = scmp.eq.s32.totalorder %s39, 1
    %p419 = por %p417, %p418
    %p421 = scmp.ne.s32.totalorder %s406, %s420
    %p422 = scmp.eq.s32.totalorder %s39, 0
    %p423 = por %p421, %p422
    %s425 = sadd.s32 %s424, 1
    %p428 = scmp.eq.s32.totalorder %s33, 1
    %p429 = scmp.ne.s32.totalorder %s424, %s426
    %p430 = scmp.eq.s32.totalorder %s33, 0
    %p431 = por %p429, %p430
    %p432 = scmp.ne.s32.totalorder %s424, %s426
    %p433 = scmp.eq.s32.totalorder %s38, 1
    %p434 = por %p432, %p433
    %p435 = scmp.ne.s32.totalorder %s426, %s427
    %p436 = scmp.eq.s32.totalorder %s38, 0
    %p437 = por %p435, %p436
    %p438 = scmp.ne.s32.totalorder %s426, %s427
    %p439 = scmp.eq.s32.totalorder %s39, 1
    %p440 = por %p438, %p439
    %p442 = scmp.ne.s32.totalorder %s427, %s441
    %p443 = scmp.eq.s32.totalorder %s39, 0
    %p444 = por %p442, %p443
    %s446 = sadd.s32 %s445, 1
    %p449 = scmp.eq.s32.totalorder %s33, 1
    %p450 = scmp.ne.s32.totalorder %s445, %s447
    %p451 = scmp.eq.s32.totalorder %s33, 0
    %p452 = por %p450, %p451
    %p453 = scmp.ne.s32.totalorder %s445, %s447
    %p454 = scmp.eq.s32.totalorder %s38, 1
    %p455 = por %p453, %p454
    %p456 = scmp.ne.s32.totalorder %s447, %s448
    %p457 = scmp.eq.s32.totalorder %s38, 0
    %p458 = por %p456, %p457
    %p459 = scmp.ne.s32.totalorder %s447, %s448
    %p460 = scmp.eq.s32.totalorder %s39, 1
    %p461 = por %p459, %p460
    %p463 = scmp.ne.s32.totalorder %s448, %s462
    %p464 = scmp.eq.s32.totalorder %s39, 0
    %p465 = por %p463, %p464
    %s467 = sadd.s32 %s466, 1
    %p470 = scmp.eq.s32.totalorder %s33, 1
    %p471 = scmp.ne.s32.totalorder %s466, %s468
    %p472 = scmp.eq.s32.totalorder %s33, 0
    %p473 = por %p471, %p472
    %p474 = scmp.ne.s32.totalorder %s466, %s468
    %p475 = scmp.eq.s32.totalorder %s38, 1
    %p476 = por %p474, %p475
    %p477 = scmp.ne.s32.totalorder %s468, %s469
    %p478 = scmp.eq.s32.totalorder %s38, 0
    %p479 = por %p477, %p478
    %p480 = scmp.ne.s32.totalorder %s468, %s469
    %p481 = scmp.eq.s32.totalorder %s39, 1
    %p482 = por %p480, %p481
    %p484 = scmp.ne.s32.totalorder %s469, %s483
    %p485 = scmp.eq.s32.totalorder %s39, 0
    %p486 = por %p484, %p485
    %s488 = sadd.s32 %s487, 1
    %p491 = scmp.eq.s32.totalorder %s33, 1
    %p492 = scmp.ne.s32.totalorder %s487, %s489
    %p493 = scmp.eq.s32.totalorder %s33, 0
    %p494 = por %p492, %p493
    %p495 = scmp.ne.s32.totalorder %s487, %s489
    %p496 = scmp.eq.s32.totalorder %s38, 1
    %p497 = por %p495, %p496
    %p498 = scmp.ne.s32.totalorder %s489, %s490
    %p499 = scmp.eq.s32.totalorder %s38, 0
    %p500 = por %p498, %p499
    %p501 = scmp.ne.s32.totalorder %s489, %s490
    %p502 = scmp.eq.s32.totalorder %s39, 1
    %p503 = por %p501, %p502
    %p505 = scmp.ne.s32.totalorder %s490, %s504
    %p506 = scmp.eq.s32.totalorder %s39, 0
    %p507 = por %p505, %p506
    %s509 = sadd.s32 %s508, 1
    %p512 = scmp.eq.s32.totalorder %s33, 1
    %p513 = scmp.ne.s32.totalorder %s508, %s510
    %p514 = scmp.eq.s32.totalorder %s33, 0
    %p515 = por %p513, %p514
    %p516 = scmp.ne.s32.totalorder %s508, %s510
    %p517 = scmp.eq.s32.totalorder %s38, 1
    %p518 = por %p516, %p517
    %p519 = scmp.ne.s32.totalorder %s510, %s511
    %p520 = scmp.eq.s32.totalorder %s38, 0
    %p521 = por %p519, %p520
    %p522 = scmp.ne.s32.totalorder %s510, %s511
    %p523 = scmp.eq.s32.totalorder %s39, 1
    %p524 = por %p522, %p523
    %p526 = scmp.ne.s32.totalorder %s511, %s525
    %p527 = scmp.eq.s32.totalorder %s39, 0
    %p528 = por %p526, %p527
    %s530 = sadd.s32 %s529, 1
    %p533 = scmp.eq.s32.totalorder %s33, 1
    %p534 = scmp.ne.s32.totalorder %s529, %s531
    %p535 = scmp.eq.s32.totalorder %s33, 0
    %p536 = por %p534, %p535
    %p537 = scmp.ne.s32.totalorder %s529, %s531
    %p538 = scmp.eq.s32.totalorder %s38, 1
    %p539 = por %p537, %p538
    %p540 = scmp.ne.s32.totalorder %s531, %s532
    %p541 = scmp.eq.s32.totalorder %s38, 0
    %p542 = por %p540, %p541
    %p543 = scmp.ne.s32.totalorder %s531, %s532
    %p544 = scmp.eq.s32.totalorder %s39, 1
    %p545 = por %p543, %p544
    %p547 = scmp.ne.s32.totalorder %s532, %s546
    %p548 = scmp.eq.s32.totalorder %s39, 0
    %p549 = por %p547, %p548
    %s551 = sadd.s32 %s550, 1
    %p554 = scmp.eq.s32.totalorder %s33, 1
    %p555 = scmp.ne.s32.totalorder %s550, %s552
    %p556 = scmp.eq.s32.totalorder %s33, 0
    %p557 = por %p555, %p556
    %p558 = scmp.ne.s32.totalorder %s550, %s552
    %p559 = scmp.eq.s32.totalorder %s38, 1
    %p560 = por %p558, %p559
    %p561 = scmp.ne.s32.totalorder %s552, %s553
    %p562 = scmp.eq.s32.totalorder %s38, 0
    %p563 = por %p561, %p562
    %p564 = scmp.ne.s32.totalorder %s552, %s553
    %p565 = scmp.eq.s32.totalorder %s39, 1
    %p566 = por %p564, %p565
    %p568 = scmp.ne.s32.totalorder %s553, %s567
    %p569 = scmp.eq.s32.totalorder %s39, 0
    %p570 = por %p568, %p569
    %s572 = sadd.s32 %s571, 1
    %p575 = scmp.eq.s32.totalorder %s33, 1
    %p576 = scmp.ne.s32.totalorder %s571, %s573
    %p577 = scmp.eq.s32.totalorder %s33, 0
    %p578 = por %p576, %p577
    %p579 = scmp.ne.s32.totalorder %s571, %s573
    %p580 = scmp.eq.s32.totalorder %s38, 1
    %p581 = por %p579, %p580
    %p582 = scmp.ne.s32.totalorder %s573, %s574
    %p583 = scmp.eq.s32.totalorder %s38, 0
    %p584 = por %p582, %p583
    %p585 = scmp.ne.s32.totalorder %s573, %s574
    %p586 = scmp.eq.s32.totalorder %s39, 1
    %p587 = por %p585, %p586
    %p589 = scmp.ne.s32.totalorder %s574, %s588
    %p590 = scmp.eq.s32.totalorder %s39, 0
    %p591 = por %p589, %p590
    %s593 = sadd.s32 %s592, 1
    %p596 = scmp.eq.s32.totalorder %s33, 1
    %p597 = scmp.ne.s32.totalorder %s592, %s594
    %p598 = scmp.eq.s32.totalorder %s33, 0
    %p599 = por %p597, %p598
    %p600 = scmp.ne.s32.totalorder %s592, %s594
    %p601 = scmp.eq.s32.totalorder %s38, 1
    %p602 = por %p600, %p601
    %p603 = scmp.ne.s32.totalorder %s594, %s595
    %p604 = scmp.eq.s32.totalorder %s38, 0
    %p605 = por %p603, %p604
    %p606 = scmp.ne.s32.totalorder %s594, %s595
    %p607 = scmp.eq.s32.totalorder %s39, 1
    %p608 = por %p606, %p607
    %p610 = scmp.ne.s32.totalorder %s595, %s609
    %p611 = scmp.eq.s32.totalorder %s39, 0
    %p612 = por %p610, %p611
    %s613 = ssub.s32 %s33, %s40
    %p614 = scmp.eq.s32.totalorder %s613, 0
    %s616 = sadd.s32 %s615, 1
    %s617 = scalar_select %p614, %s615, %s616
    %p620 = pneg %p614
    %p621 = scmp.eq.s32.totalorder %s33, 1
    %p622 = por %p620, %p621
    %p623 = scmp.ne.s32.totalorder %s615, %s618
    %p624 = scmp.eq.s32.totalorder %s33, 0
    %p625 = por %p623, %p624
    %p626 = scmp.ne.s32.totalorder %s615, %s618
    %p627 = scmp.eq.s32.totalorder %s38, 1
    %p628 = por %p626, %p627
    %p629 = scmp.ne.s32.totalorder %s618, %s619
    %p630 = scmp.eq.s32.totalorder %s38, 0
    %p631 = por %p629, %p630
    %p632 = scmp.ne.s32.totalorder %s618, %s619
    %p633 = scmp.eq.s32.totalorder %s39, 1
    %p634 = por %p632, %p633
    %p636 = scmp.ne.s32.totalorder %s619, %s635
    %p637 = scmp.eq.s32.totalorder %s39, 0
    %p638 = por %p636, %p637
    %p639 = scmp.le.s32.totalorder 1, %s33
    %p640 = scmp.lt.s32.totalorder %s33, 3
    %p641 = pnand %p639, %p640
    %p642 = pneg %p641
    // Predicated region
    $region9: #{_lambda_.1} parent=5 // pred_check
      _
    $region10: #{_lambda_.1} parent=5 // pred_check_branch
      %644 = sbr.rel (%p641) target = $region12
    $region11: #{_lambda_.1} parent=5 // pred_region
      %s645 = ssub.s32 %s33, 1
      // Predicated region
      $region13: #{_lambda_.1} parent=11 // pred_check
        %p646 = pneg %p80
      $region14: #{_lambda_.1} parent=11 // pred_check_branch
        %648 = sbr.rel (%p646) target = $region16
      $region15: #{_lambda_.1} parent=11 // pred_region
        _
      $region16: #{_lambda_.1} parent=11 // pred_fallthru
        _
      // Predicated region
      $region17: #{_lambda_.1} parent=11 // pred_check
        %p649 = pneg %p101
      $region18: #{_lambda_.1} parent=11 // pred_check_branch
        %651 = sbr.rel (%p649) target = $region20
      $region19: #{_lambda_.1} parent=11 // pred_region
        _
      $region20: #{_lambda_.1} parent=11 // pred_fallthru
        _
      // Predicated region
      $region21: #{_lambda_.1} parent=11 // pred_check
        %p652 = pneg %p122
      $region22: #{_lambda_.1} parent=11 // pred_check_branch
        %654 = sbr.rel (%p652) target = $region24
      $region23: #{_lambda_.1} parent=11 // pred_region
        _
      $region24: #{_lambda_.1} parent=11 // pred_fallthru
        _
      // Predicated region
      $region25: #{_lambda_.1} parent=11 // pred_check
        %p655 = pneg %p143
      $region26: #{_lambda_.1} parent=11 // pred_check_branch
        %657 = sbr.rel (%p655) target = $region28
      $region27: #{_lambda_.1} parent=11 // pred_region
        _
      $region28: #{_lambda_.1} parent=11 // pred_fallthru
        _
      // Predicated region
      $region29: #{_lambda_.1} parent=11 // pred_check
        %p658 = pneg %p164
      $region30: #{_lambda_.1} parent=11 // pred_check_branch
        %660 = sbr.rel (%p658) target = $region32
      $region31: #{_lambda_.1} parent=11 // pred_region
        _
      $region32: #{_lambda_.1} parent=11 // pred_fallthru
        _
      // Predicated region
      $region33: #{_lambda_.1} parent=11 // pred_check
        %p661 = pneg %p185
      $region34: #{_lambda_.1} parent=11 // pred_check_branch
        %663 = sbr.rel (%p661) target = $region36
      $region35: #{_lambda_.1} parent=11 // pred_region
        _
      $region36: #{_lambda_.1} parent=11 // pred_fallthru
        _
      // Predicated region
      $region37: #{_lambda_.1} parent=11 // pred_check
        %p664 = pneg %p206
      $region38: #{_lambda_.1} parent=11 // pred_check_branch
        %666 = sbr.rel (%p664) target = $region40
      $region39: #{_lambda_.1} parent=11 // pred_region
        _
      $region40: #{_lambda_.1} parent=11 // pred_fallthru
        _
      // Predicated region
      $region41: #{_lambda_.1} parent=11 // pred_check
        %p667 = pneg %p227
      $region42: #{_lambda_.1} parent=11 // pred_check_branch
        %669 = sbr.rel (%p667) target = $region44
      $region43: #{_lambda_.1} parent=11 // pred_region
        _
      $region44: #{_lambda_.1} parent=11 // pred_fallthru
        _
      // Predicated region
      $region45: #{_lambda_.1} parent=11 // pred_check
        %p670 = pneg %p248
      $region46: #{_lambda_.1} parent=11 // pred_check_branch
        %672 = sbr.rel (%p670) target = $region48
      $region47: #{_lambda_.1} parent=11 // pred_region
        _
      $region48: #{_lambda_.1} parent=11 // pred_fallthru
        _
      // Predicated region
      $region49: #{_lambda_.1} parent=11 // pred_check
        %p673 = pneg %p269
      $region50: #{_lambda_.1} parent=11 // pred_check_branch
        %675 = sbr.rel (%p673) target = $region52
      $region51: #{_lambda_.1} parent=11 // pred_region
        _
      $region52: #{_lambda_.1} parent=11 // pred_fallthru
        _
      // Predicated region
      $region53: #{_lambda_.1} parent=11 // pred_check
        %p676 = pneg %p290
      $region54: #{_lambda_.1} parent=11 // pred_check_branch
        %678 = sbr.rel (%p676) target = $region56
      $region55: #{_lambda_.1} parent=11 // pred_region
        _
      $region56: #{_lambda_.1} parent=11 // pred_fallthru
        _
      // Predicated region
      $region57: #{_lambda_.1} parent=11 // pred_check
        %p679 = pneg %p311
      $region58: #{_lambda_.1} parent=11 // pred_check_branch
        %681 = sbr.rel (%p679) target = $region60
      $region59: #{_lambda_.1} parent=11 // pred_region
        _
      $region60: #{_lambda_.1} parent=11 // pred_fallthru
        _
      // Predicated region
      $region61: #{_lambda_.1} parent=11 // pred_check
        %p682 = pneg %p332
      $region62: #{_lambda_.1} parent=11 // pred_check_branch
        %684 = sbr.rel (%p682) target = $region64
      $region63: #{_lambda_.1} parent=11 // pred_region
        _
      $region64: #{_lambda_.1} parent=11 // pred_fallthru
        _
      // Predicated region
      $region65: #{_lambda_.1} parent=11 // pred_check
        %p685 = pneg %p353
      $region66: #{_lambda_.1} parent=11 // pred_check_branch
        %687 = sbr.rel (%p685) target = $region68
      $region67: #{_lambda_.1} parent=11 // pred_region
        _
      $region68: #{_lambda_.1} parent=11 // pred_fallthru
        _
      // Predicated region
      $region69: #{_lambda_.1} parent=11 // pred_check
        %p688 = pneg %p374
      $region70: #{_lambda_.1} parent=11 // pred_check_branch
        %690 = sbr.rel (%p688) target = $region72
      $region71: #{_lambda_.1} parent=11 // pred_region
        _
      $region72: #{_lambda_.1} parent=11 // pred_fallthru
        _
      // Predicated region
      $region73: #{_lambda_.1} parent=11 // pred_check
        %p691 = pneg %p395
      $region74: #{_lambda_.1} parent=11 // pred_check_branch
        %693 = sbr.rel (%p691) target = $region76
      $region75: #{_lambda_.1} parent=11 // pred_region
        _
      $region76: #{_lambda_.1} parent=11 // pred_fallthru
        _
      // Predicated region
      $region77: #{_lambda_.1} parent=11 // pred_check
        %p694 = pneg %p416
      $region78: #{_lambda_.1} parent=11 // pred_check_branch
        %696 = sbr.rel (%p694) target = $region80
      $region79: #{_lambda_.1} parent=11 // pred_region
        _
      $region80: #{_lambda_.1} parent=11 // pred_fallthru
        _
      // Predicated region
      $region81: #{_lambda_.1} parent=11 // pred_check
        %p697 = pneg %p437
      $region82: #{_lambda_.1} parent=11 // pred_check_branch
        %699 = sbr.rel (%p697) target = $region84
      $region83: #{_lambda_.1} parent=11 // pred_region
        _
      $region84: #{_lambda_.1} parent=11 // pred_fallthru
        _
      // Predicated region
      $region85: #{_lambda_.1} parent=11 // pred_check
        %p700 = pneg %p458
      $region86: #{_lambda_.1} parent=11 // pred_check_branch
        %702 = sbr.rel (%p700) target = $region88
      $region87: #{_lambda_.1} parent=11 // pred_region
        _
      $region88: #{_lambda_.1} parent=11 // pred_fallthru
        _
      // Predicated region
      $region89: #{_lambda_.1} parent=11 // pred_check
        %p703 = pneg %p479
      $region90: #{_lambda_.1} parent=11 // pred_check_branch
        %705 = sbr.rel (%p703) target = $region92
      $region91: #{_lambda_.1} parent=11 // pred_region
        _
      $region92: #{_lambda_.1} parent=11 // pred_fallthru
        _
      // Predicated region
      $region93: #{_lambda_.1} parent=11 // pred_check
        %p706 = pneg %p500
      $region94: #{_lambda_.1} parent=11 // pred_check_branch
        %708 = sbr.rel (%p706) target = $region96
      $region95: #{_lambda_.1} parent=11 // pred_region
        _
      $region96: #{_lambda_.1} parent=11 // pred_fallthru
        _
      // Predicated region
      $region97: #{_lambda_.1} parent=11 // pred_check
        %p709 = pneg %p521
      $region98: #{_lambda_.1} parent=11 // pred_check_branch
        %711 = sbr.rel (%p709) target = $region100
      $region99: #{_lambda_.1} parent=11 // pred_region
        _
      $region100: #{_lambda_.1} parent=11 // pred_fallthru
        _
      // Predicated region
      $region101: #{_lambda_.1} parent=11 // pred_check
        %p712 = pneg %p542
      $region102: #{_lambda_.1} parent=11 // pred_check_branch
        %714 = sbr.rel (%p712) target = $region104
      $region103: #{_lambda_.1} parent=11 // pred_region
        _
      $region104: #{_lambda_.1} parent=11 // pred_fallthru
        _
      // Predicated region
      $region105: #{_lambda_.1} parent=11 // pred_check
        %p715 = pneg %p563
      $region106: #{_lambda_.1} parent=11 // pred_check_branch
        %717 = sbr.rel (%p715) target = $region108
      $region107: #{_lambda_.1} parent=11 // pred_region
        _
      $region108: #{_lambda_.1} parent=11 // pred_fallthru
        _
      // Predicated region
      $region109: #{_lambda_.1} parent=11 // pred_check
        %p718 = pneg %p584
      $region110: #{_lambda_.1} parent=11 // pred_check_branch
        %720 = sbr.rel (%p718) target = $region112
      $region111: #{_lambda_.1} parent=11 // pred_region
        _
      $region112: #{_lambda_.1} parent=11 // pred_fallthru
        _
      // Predicated region
      $region113: #{_lambda_.1} parent=11 // pred_check
        %p721 = pneg %p605
      $region114: #{_lambda_.1} parent=11 // pred_check_branch
        %723 = sbr.rel (%p721) target = $region116
      $region115: #{_lambda_.1} parent=11 // pred_region
        _
      $region116: #{_lambda_.1} parent=11 // pred_fallthru
        _
    $region12: #{_lambda_.1} parent=5 // pred_fallthru
      _
    %p724 = scmp.lt.s32.totalorder %s33, 2
    // Predicated region
    $region117: #{_lambda_.1} parent=5 // pred_check
      %p725 = pneg %p724
    $region118: #{_lambda_.1} parent=5 // pred_check_branch
      %727 = sbr.rel (%p725) target = $region120
    $region119: #{_lambda_.1} parent=5 // pred_region
      // Predicated region
      $region121: #{_lambda_.1} parent=119 // pred_check
        %p728 = pneg %p53
      $region122: #{_lambda_.1} parent=119 // pred_check_branch
        %730 = sbr.rel (%p728) target = $region124
      $region123: #{_lambda_.1} parent=119 // pred_region
        %p731 = scmp.lt.s32.totalorder %s33, 1
        %s732 = scalar_select %p731, %s33, 1
        %s733 = smul.addr %s732, 32
        %s734 = smul.addr %s733, 4
        %s735 = scalar_lea.vmem %s0, %s734
      $region124: #{_lambda_.1} parent=119 // pred_fallthru
        _
    $region120: #{_lambda_.1} parent=5 // pred_fallthru
      _
    %p736 = scmp.le.s32.totalorder 1, %s33
    %p737 = scmp.lt.s32.totalorder %s33, 3
    %p738 = pnand %p736, %p737
    %p739 = pneg %p738
    // Predicated region
    $region125: #{_lambda_.1} parent=5 // pred_check
      _
    $region126: #{_lambda_.1} parent=5 // pred_check_branch
      %741 = sbr.rel (%p738) target = $region128
    $region127: #{_lambda_.1} parent=5 // pred_region
      %s742 = ssub.s32 %s33, 1
      %p743 = scmp.lt.s32.totalorder %s38, 1
      %s744 = scalar_select %p743, %s38, 1
      %s745 = smul.addr %s744, 32
      %s746 = smul.addr %s745, 4
      %s747 = scalar_lea.vmem %s0, %s746
      %p748 = pneg %p59
      %p749 = pneg %p56
      %p750 = pneg %p80
      %p751 = pneg %p77
      %p752 = pneg %p101
      %p753 = pneg %p98
      %p754 = pneg %p122
      %p755 = pneg %p119
      %p756 = pneg %p143
      %p757 = pneg %p140
      %p758 = pneg %p164
      %p759 = pneg %p161
      %p760 = pneg %p185
      %p761 = pneg %p182
      %p762 = pneg %p206
      %p763 = pneg %p203
      %p764 = pneg %p227
      %p765 = pneg %p224
      %p766 = pneg %p248
      %p767 = pneg %p245
      %p768 = pneg %p269
      %p769 = pneg %p266
      %p770 = pneg %p290
      %p771 = pneg %p287
      %p772 = pneg %p311
      %p773 = pneg %p308
      %p774 = pneg %p332
      %p775 = pneg %p329
      %p776 = pneg %p353
      %p777 = pneg %p350
      %p778 = pneg %p374
      %p779 = pneg %p371
      %p780 = pneg %p395
      %p781 = pneg %p392
      %p782 = pneg %p416
      %p783 = pneg %p413
      %p784 = pneg %p437
      %p785 = pneg %p434
      %p786 = pneg %p458
      %p787 = pneg %p455
      %p788 = pneg %p479
      %p789 = pneg %p476
      %p790 = pneg %p500
      %p791 = pneg %p497
      %p792 = pneg %p521
      %p793 = pneg %p518
      %p794 = pneg %p542
      %p795 = pneg %p539
      %p796 = pneg %p563
      %p797 = pneg %p560
      %p798 = pneg %p584
      %p799 = pneg %p581
      %p800 = pneg %p605
      %p801 = pneg %p602
      %p802 = pneg %p631
      %p803 = pneg %p628
      %p804 = scmp.lt.s32.totalorder %s38, 1
      %s805 = scalar_select %p804, %s38, 1
      %s806 = smul.addr %s805, 8
      %s807 = smul.addr %s806, 8
      %s808 = scalar_lea.vmem %s27, %s807
      %p809 = scmp.lt.s32.totalorder %s38, 1
      %s810 = scalar_select %p809, %s38, 1
      %s811 = smul.addr %s810, 32
      %s812 = smul.addr %s811, 4
      %s813 = scalar_lea.vmem %s0, %s812
      %p814 = scmp.lt.s32.totalorder %s38, 1
      %s815 = scalar_select %p814, %s38, 1
      %s816 = smul.addr %s815, 8
      %s817 = smul.addr %s816, 8
      %s818 = scalar_lea.vmem %s27, %s817
      %vm820 = vcmask 97280
      %821 = vst.msk [vmem:[#allocation2] sm:$0xff] %vm820, 0.0
      %vm822 = vcmask 90112
      %823 = vst.msk [vmem:[#allocation2 + $0x8] sm:$0x1] %vm822, 0.0
      %824 = vst.msk [vmem:[#allocation2] sm:$0x1] %vm822, 0.0
      %825 = vst.msk [vmem:[#allocation2 + $0x10] sm:$0x1] %vm822, 0.0
      %826 = vst.msk [vmem:[#allocation2 + $0x20] sm:$0x1] %vm822, 0.0
      %827 = vst.msk [vmem:[#allocation2 + $0x30] sm:$0x1] %vm822, 0.0
      %828 = vst.msk [vmem:[#allocation2 + $0x40] sm:$0x1] %vm822, 0.0
      %829 = vst.msk [vmem:[#allocation2 + $0x50] sm:$0x1] %vm822, 0.0
      %830 = vst.msk [vmem:[#allocation2 + $0x60] sm:$0x1] %vm822, 0.0
      %831 = vst.msk [vmem:[#allocation2 + $0x70] sm:$0x1] %vm822, 0.0
      %832 = vst.msk [vmem:[#allocation2 + $0x80] sm:$0x1] %vm822, 0.0
      %v833 = vld [vmem:[%s813] sm:$0xf]
      %v834 = vld [vmem:[%s813 + $0x4] sm:$0xf]
      %v835 = vld [vmem:[%s813 + $0x8] sm:$0xf]
      %v836 = vld [vmem:[%s813 + $0xc] sm:$0xf]
      %v837 = vld [vmem:[%s813 + $0x10] sm:$0xf]
      %v838 = vld [vmem:[%s813 + $0x14] sm:$0xf]
      %v839 = vld [vmem:[%s813 + $0x18] sm:$0xf]
      %v840 = vld [vmem:[%s813 + $0x1c] sm:$0xf]
      %v841 = vunpack.c.l.bf16 %v833
      %v842 = vunpack.c.l.bf16 %v834
      %v843 = vunpack.c.l.bf16 %v835
      %v844 = vunpack.c.l.bf16 %v836
      %v845 = vunpack.c.l.bf16 %v837
      %v846 = vunpack.c.l.bf16 %v838
      %v847 = vunpack.c.l.bf16 %v839
      %v848 = vunpack.c.l.bf16 %v840
      %v849 = vld [vmem:[%s1] sm:$0x1]
      %v851 = vperm.slane %v849, 0
      %v853 = vmul.f32 %v841, %v851
      %v854 = vmul.f32 %v842, %v851
      %v855 = vmul.f32 %v843, %v851
      %v856 = vmul.f32 %v844, %v851
      %v857 = vmul.f32 %v845, %v851
      %v858 = vmul.f32 %v846, %v851
      %v859 = vmul.f32 %v847, %v851
      %v860 = vmul.f32 %v848, %v851
      %v861 = vld [vmem:[%s2] sm:$0x1]
      %v863 = vperm.slane %v861, 0
      %v865 = vadd.f32 %v853, %v863
      %v866 = vadd.f32 %v854, %v863
      %v867 = vadd.f32 %v855, %v863
      %v868 = vadd.f32 %v856, %v863
      %v869 = vadd.f32 %v857, %v863
      %v870 = vadd.f32 %v858, %v863
      %v871 = vadd.f32 %v859, %v863
      %v872 = vadd.f32 %v860, %v863
      %v873 = vmax.f32 %v865, 0.0
      %v874 = vmax.f32 %v866, 0.0
      %v875 = vmax.f32 %v867, 0.0
      %v876 = vmax.f32 %v868, 0.0
      %v877 = vmax.f32 %v869, 0.0
      %v878 = vmax.f32 %v870, 0.0
      %v879 = vmax.f32 %v871, 0.0
      %v880 = vmax.f32 %v872, 0.0
      %v881 = vpack.c.bf16 %v874, %v873
      %v882 = vpack.c.bf16 %v876, %v875
      %v883 = vpack.c.bf16 %v878, %v877
      %v884 = vpack.c.bf16 %v880, %v879
      %v885 = vld [vmem:[%s3] sm:$0xf]
      %v886 = vld [vmem:[%s3 + $0x4] sm:$0xf]
      %v889 = vunpack.c.l.b16 %v885
      %v890 = vunpack.c.l.b16 %v886
      %v891 = vpack.c.b16 %v890, %v889
      %vm893 = vcmask 130048
      %v895 = vsel %vm893, %v881, 0
      %v898 = vsel %vm893, %v882, 0
      %v901 = vsel %vm893, %v883, 0
      %v904 = vsel %vm893, %v884, 0
      %906 = vmatpush.bf16.msra.mxu0 0
      %907 = vmatpush.bf16.msra.mxu0 0
      %908 = vmatpush.bf16.msra.mxu0 0
      %909 = vmatpush.bf16.msra.mxu0 0
      %910 = vmatpush.bf16.msra.mxu0 0
      %911 = vmatpush.bf16.msra.mxu0 0
      %912 = vmatpush.bf16.msra.mxu0 0
      %913 = vmatpush.bf16.msra.mxu0 %v891
      %914 = vmatmul.bf16.gmra.mxu0 %v895
      %v915 = vpop.f32.mrf.mxu0
      %v916 = vadd.f32 0.0, %v915
      %v917 = vpop.f32.mrf.mxu0
      %v918 = vadd.f32 0.0, %v917
      %919 = vmatmul.bf16.gmra.mxu0 %v898
      %v920 = vpop.f32.mrf.mxu0
      %v921 = vadd.f32 0.0, %v920
      %v922 = vpop.f32.mrf.mxu0
      %v923 = vadd.f32 0.0, %v922
      %924 = vmatmul.bf16.gmra.mxu0 %v901
      %v925 = vpop.f32.mrf.mxu0
      %v926 = vadd.f32 0.0, %v925
      %v927 = vpop.f32.mrf.mxu0
      %v928 = vadd.f32 0.0, %v927
      %929 = vmatmul.bf16.gmra.mxu0 %v904
      %v930 = vpop.f32.mrf.mxu0
      %v931 = vadd.f32 0.0, %v930
      %v932 = vpop.f32.mrf.mxu0
      %v933 = vadd.f32 0.0, %v932
      %934 = vdwg.mxu0
      %v935 = vld [vmem:[%s4] sm:$0x1]
      %v937 = vperm.slane %v935, 0
      %v939 = vmul.f32 %v916, %v937
      %v940 = vmul.f32 %v918, %v937
      %v941 = vmul.f32 %v921, %v937
      %v942 = vmul.f32 %v923, %v937
      %v943 = vmul.f32 %v926, %v937
      %v944 = vmul.f32 %v928, %v937
      %v945 = vmul.f32 %v931, %v937
      %v946 = vmul.f32 %v933, %v937
      %v947 = vld [vmem:[%s5] sm:$0x1]
      %v949 = vperm.slane %v947, 0
      %v951 = vadd.f32 %v939, %v949
      %v952 = vadd.f32 %v940, %v949
      %v953 = vadd.f32 %v941, %v949
      %v954 = vadd.f32 %v942, %v949
      %v955 = vadd.f32 %v943, %v949
      %v956 = vadd.f32 %v944, %v949
      %v957 = vadd.f32 %v945, %v949
      %v958 = vadd.f32 %v946, %v949
      %v959 = vmax.f32 %v951, 0.0
      %v960 = vmax.f32 %v952, 0.0
      %v961 = vmax.f32 %v953, 0.0
      %v962 = vmax.f32 %v954, 0.0
      %v963 = vmax.f32 %v955, 0.0
      %v964 = vmax.f32 %v956, 0.0
      %v965 = vmax.f32 %v957, 0.0
      %v966 = vmax.f32 %v958, 0.0
      %s967 = scalar_lea.vmem [#allocation2], 16
      %968 = vst.msk [vmem:[%s967 + $0x1] sm:$0xff] %vm820, %v959
      %969 = vst.msk [vmem:[%s967 + $0x11] sm:$0xff] %vm820, %v960
      %970 = vst.msk [vmem:[%s967 + $0x21] sm:$0xff] %vm820, %v961
      %971 = vst.msk [vmem:[%s967 + $0x31] sm:$0xff] %vm820, %v962
      %972 = vst.msk [vmem:[%s967 + $0x41] sm:$0xff] %vm820, %v963
      %973 = vst.msk [vmem:[%s967 + $0x51] sm:$0xff] %vm820, %v964
      %974 = vst.msk [vmem:[%s967 + $0x61] sm:$0xff] %vm820, %v965
      %975 = vst.msk [vmem:[%s967 + $0x71] sm:$0xff] %vm820, %v966
      %s976 = scalar_lea.vmem [#allocation2], 144
      %977 = vst.msk [vmem:[%s976] sm:$0xff] %vm820, 0.0
      %978 = vst.msk [vmem:[%s976 + $0x8] sm:$0x1] %vm822, 0.0
      %979 = vst.msk [vmem:[%s976 + $0x8] sm:$0x1] %vm822, 0.0
      %980 = vst.msk [vmem:[%s976 + $0x18] sm:$0x1] %vm822, 0.0
      %981 = vst.msk [vmem:[%s976 + $0x28] sm:$0x1] %vm822, 0.0
      %982 = vst.msk [vmem:[%s976 + $0x38] sm:$0x1] %vm822, 0.0
      %983 = vst.msk [vmem:[%s976 + $0x48] sm:$0x1] %vm822, 0.0
      %984 = vst.msk [vmem:[%s976 + $0x58] sm:$0x1] %vm822, 0.0
      %985 = vst.msk [vmem:[%s976 + $0x68] sm:$0x1] %vm822, 0.0
      %986 = vst.msk [vmem:[%s976 + $0x78] sm:$0x1] %vm822, 0.0
      %987 = vst.msk [vmem:[%s976 + $0x88] sm:$0x1] %vm822, 0.0
      %v988 = vld [vmem:[%s813 + $0x20] sm:$0xf]
      %v989 = vld [vmem:[%s813 + $0x24] sm:$0xf]
      %v990 = vld [vmem:[%s813 + $0x28] sm:$0xf]
      %v991 = vld [vmem:[%s813 + $0x2c] sm:$0xf]
      %v992 = vld [vmem:[%s813 + $0x30] sm:$0xf]
      %v993 = vld [vmem:[%s813 + $0x34] sm:$0xf]
      %v994 = vld [vmem:[%s813 + $0x38] sm:$0xf]
      %v995 = vld [vmem:[%s813 + $0x3c] sm:$0xf]
      %v996 = vunpack.c.l.bf16 %v988
      %v997 = vunpack.c.l.bf16 %v989
      %v998 = vunpack.c.l.bf16 %v990
      %v999 = vunpack.c.l.bf16 %v991
      %v1000 = vunpack.c.l.bf16 %v992
      %v1001 = vunpack.c.l.bf16 %v993
      %v1002 = vunpack.c.l.bf16 %v994
      %v1003 = vunpack.c.l.bf16 %v995
      %v1004 = vld [vmem:[%s1] sm:$0x1]
      %v1006 = vperm.slane %v1004, 0
      %v1008 = vmul.f32 %v996, %v1006
      %v1009 = vmul.f32 %v997, %v1006
      %v1010 = vmul.f32 %v998, %v1006
      %v1011 = vmul.f32 %v999, %v1006
      %v1012 = vmul.f32 %v1000, %v1006
      %v1013 = vmul.f32 %v1001, %v1006
      %v1014 = vmul.f32 %v1002, %v1006
      %v1015 = vmul.f32 %v1003, %v1006
      %v1016 = vld [vmem:[%s2] sm:$0x1]
      %v1018 = vperm.slane %v1016, 0
      %v1020 = vadd.f32 %v1008, %v1018
      %v1021 = vadd.f32 %v1009, %v1018
      %v1022 = vadd.f32 %v1010, %v1018
      %v1023 = vadd.f32 %v1011, %v1018
      %v1024 = vadd.f32 %v1012, %v1018
      %v1025 = vadd.f32 %v1013, %v1018
      %v1026 = vadd.f32 %v1014, %v1018
      %v1027 = vadd.f32 %v1015, %v1018
      %v1028 = vmax.f32 %v1020, 0.0
      %v1029 = vmax.f32 %v1021, 0.0
      %v1030 = vmax.f32 %v1022, 0.0
      %v1031 = vmax.f32 %v1023, 0.0
      %v1032 = vmax.f32 %v1024, 0.0
      %v1033 = vmax.f32 %v1025, 0.0
      %v1034 = vmax.f32 %v1026, 0.0
      %v1035 = vmax.f32 %v1027, 0.0
      %v1036 = vpack.c.bf16 %v1029, %v1028
      %v1037 = vpack.c.bf16 %v1031, %v1030
      %v1038 = vpack.c.bf16 %v1033, %v1032
      %v1039 = vpack.c.bf16 %v1035, %v1034
      %v1040 = vld [vmem:[%s3] sm:$0xf]
      %v1041 = vld [vmem:[%s3 + $0x4] sm:$0xf]
      %v1044 = vunpack.c.l.b16 %v1040
      %v1045 = vunpack.c.l.b16 %v1041
      %v1046 = vpack.c.b16 %v1045, %v1044
      %v1049 = vsel %vm893, %v1036, 0
      %v1052 = vsel %vm893, %v1037, 0
      %v1055 = vsel %vm893, %v1038, 0
      %v1058 = vsel %vm893, %v1039, 0
      %1060 = vmatpush.bf16.msra.mxu0 0
      %1061 = vmatpush.bf16.msra.mxu0 0
      %1062 = vmatpush.bf16.msra.mxu0 0
      %1063 = vmatpush.bf16.msra.mxu0 0
      %1064 = vmatpush.bf16.msra.mxu0 0
      %1065 = vmatpush.bf16.msra.mxu0 0
      %1066 = vmatpush.bf16.msra.mxu0 0
      %1067 = vmatpush.bf16.msra.mxu0 %v1046
      %1068 = vmatmul.bf16.gmra.mxu0 %v1049
      %v1069 = vpop.f32.mrf.mxu0
      %v1070 = vadd.f32 0.0, %v1069
      %v1071 = vpop.f32.mrf.mxu0
      %v1072 = vadd.f32 0.0, %v1071
      %1073 = vmatmul.bf16.gmra.mxu0 %v1052
      %v1074 = vpop.f32.mrf.mxu0
      %v1075 = vadd.f32 0.0, %v1074
      %v1076 = vpop.f32.mrf.mxu0
      %v1077 = vadd.f32 0.0, %v1076
      %1078 = vmatmul.bf16.gmra.mxu0 %v1055
      %v1079 = vpop.f32.mrf.mxu0
      %v1080 = vadd.f32 0.0, %v1079
      %v1081 = vpop.f32.mrf.mxu0
      %v1082 = vadd.f32 0.0, %v1081
      %1083 = vmatmul.bf16.gmra.mxu0 %v1058
      %v1084 = vpop.f32.mrf.mxu0
      %v1085 = vadd.f32 0.0, %v1084
      %v1086 = vpop.f32.mrf.mxu0
      %v1087 = vadd.f32 0.0, %v1086
      %1088 = vdwg.mxu0
      %v1089 = vld [vmem:[%s4] sm:$0x1]
      %v1091 = vperm.slane %v1089, 0
      %v1093 = vmul.f32 %v1070, %v1091
      %v1094 = vmul.f32 %v1072, %v1091
      %v1095 = vmul.f32 %v1075, %v1091
      %v1096 = vmul.f32 %v1077, %v1091
      %v1097 = vmul.f32 %v1080, %v1091
      %v1098 = vmul.f32 %v1082, %v1091
      %v1099 = vmul.f32 %v1085, %v1091
      %v1100 = vmul.f32 %v1087, %v1091
      %v1101 = vld [vmem:[%s5] sm:$0x1]
      %v1103 = vperm.slane %v1101, 0
      %v1105 = vadd.f32 %v1093, %v1103
      %v1106 = vadd.f32 %v1094, %v1103
      %v1107 = vadd.f32 %v1095, %v1103
      %v1108 = vadd.f32 %v1096, %v1103
      %v1109 = vadd.f32 %v1097, %v1103
      %v1110 = vadd.f32 %v1098, %v1103
      %v1111 = vadd.f32 %v1099, %v1103
      %v1112 = vadd.f32 %v1100, %v1103
      %v1113 = vmax.f32 %v1105, 0.0
      %v1114 = vmax.f32 %v1106, 0.0
      %v1115 = vmax.f32 %v1107, 0.0
      %v1116 = vmax.f32 %v1108, 0.0
      %v1117 = vmax.f32 %v1109, 0.0
      %v1118 = vmax.f32 %v1110, 0.0
      %v1119 = vmax.f32 %v1111, 0.0
      %v1120 = vmax.f32 %v1112, 0.0
      %s1121 = scalar_lea.vmem [#allocation2], 160
      %1122 = vst.msk [vmem:[%s1121] sm:$0xff] %vm820, %v1113
      %1123 = vst.msk [vmem:[%s1121 + $0x10] sm:$0xff] %vm820, %v1114
      %1124 = vst.msk [vmem:[%s1121 + $0x20] sm:$0xff] %vm820, %v1115
      %1125 = vst.msk [vmem:[%s1121 + $0x30] sm:$0xff] %vm820, %v1116
      %1126 = vst.msk [vmem:[%s1121 + $0x40] sm:$0xff] %vm820, %v1117
      %1127 = vst.msk [vmem:[%s1121 + $0x50] sm:$0xff] %vm820, %v1118
      %1128 = vst.msk [vmem:[%s1121 + $0x60] sm:$0xff] %vm820, %v1119
      %1129 = vst.msk [vmem:[%s1121 + $0x70] sm:$0xff] %vm820, %v1120
      %s1130 = scalar_lea.vmem [#allocation2], 416
      %1131 = vst.msk [vmem:[%s1130] sm:$0xff] %vm820, 0.0
      %1132 = vst.msk [vmem:[%s1130 + $0x8] sm:$0x1] %vm822, 0.0
      %s1133 = scalar_lea.vmem [#allocation2], 288
      %1134 = vst.msk [vmem:[%s1133] sm:$0x1] %vm822, 0.0
      %1135 = vst.msk [vmem:[%s1133 + $0x10] sm:$0x1] %vm822, 0.0
      %1136 = vst.msk [vmem:[%s1133 + $0x20] sm:$0x1] %vm822, 0.0
      %1137 = vst.msk [vmem:[%s1133 + $0x30] sm:$0x1] %vm822, 0.0
      %1138 = vst.msk [vmem:[%s1133 + $0x40] sm:$0x1] %vm822, 0.0
      %1139 = vst.msk [vmem:[%s1133 + $0x50] sm:$0x1] %vm822, 0.0
      %1140 = vst.msk [vmem:[%s1133 + $0x60] sm:$0x1] %vm822, 0.0
      %1141 = vst.msk [vmem:[%s1133 + $0x70] sm:$0x1] %vm822, 0.0
      %1142 = vst.msk [vmem:[%s1133 + $0x80] sm:$0x1] %vm822, 0.0
      %v1143 = vld [vmem:[%s813 + $0x40] sm:$0xf]
      %v1144 = vld [vmem:[%s813 + $0x44] sm:$0xf]
      %v1145 = vld [vmem:[%s813 + $0x48] sm:$0xf]
      %v1146 = vld [vmem:[%s813 + $0x4c] sm:$0xf]
      %v1147 = vld [vmem:[%s813 + $0x50] sm:$0xf]
      %v1148 = vld [vmem:[%s813 + $0x54] sm:$0xf]
      %v1149 = vld [vmem:[%s813 + $0x58] sm:$0xf]
      %v1150 = vld [vmem:[%s813 + $0x5c] sm:$0xf]
      %v1151 = vunpack.c.l.bf16 %v1143
      %v1152 = vunpack.c.l.bf16 %v1144
      %v1153 = vunpack.c.l.bf16 %v1145
      %v1154 = vunpack.c.l.bf16 %v1146
      %v1155 = vunpack.c.l.bf16 %v1147
      %v1156 = vunpack.c.l.bf16 %v1148
      %v1157 = vunpack.c.l.bf16 %v1149
      %v1158 = vunpack.c.l.bf16 %v1150
      %v1159 = vld [vmem:[%s1] sm:$0x1]
      %v1161 = vperm.slane %v1159, 0
      %v1163 = vmul.f32 %v1151, %v1161
      %v1164 = vmul.f32 %v1152, %v1161
      %v1165 = vmul.f32 %v1153, %v1161
      %v1166 = vmul.f32 %v1154, %v1161
      %v1167 = vmul.f32 %v1155, %v1161
      %v1168 = vmul.f32 %v1156, %v1161
      %v1169 = vmul.f32 %v1157, %v1161
      %v1170 = vmul.f32 %v1158, %v1161
      %v1171 = vld [vmem:[%s2] sm:$0x1]
      %v1173 = vperm.slane %v1171, 0
      %v1175 = vadd.f32 %v1163, %v1173
      %v1176 = vadd.f32 %v1164, %v1173
      %v1177 = vadd.f32 %v1165, %v1173
      %v1178 = vadd.f32 %v1166, %v1173
      %v1179 = vadd.f32 %v1167, %v1173
      %v1180 = vadd.f32 %v1168, %v1173
      %v1181 = vadd.f32 %v1169, %v1173
      %v1182 = vadd.f32 %v1170, %v1173
      %v1183 = vmax.f32 %v1175, 0.0
      %v1184 = vmax.f32 %v1176, 0.0
      %v1185 = vmax.f32 %v1177, 0.0
      %v1186 = vmax.f32 %v1178, 0.0
      %v1187 = vmax.f32 %v1179, 0.0
      %v1188 = vmax.f32 %v1180, 0.0
      %v1189 = vmax.f32 %v1181, 0.0
      %v1190 = vmax.f32 %v1182, 0.0
      %v1191 = vpack.c.bf16 %v1184, %v1183
      %v1192 = vpack.c.bf16 %v1186, %v1185
      %v1193 = vpack.c.bf16 %v1188, %v1187
      %v1194 = vpack.c.bf16 %v1190, %v1189
      %v1195 = vld [vmem:[%s3] sm:$0xf]
      %v1196 = vld [vmem:[%s3 + $0x4] sm:$0xf]
      %v1199 = vunpack.c.l.b16 %v1195
      %v1200 = vunpack.c.l.b16 %v1196
      %v1201 = vpack.c.b16 %v1200, %v1199
      %v1204 = vsel %vm893, %v1191, 0
      %v1207 = vsel %vm893, %v1192, 0
      %v1210 = vsel %vm893, %v1193, 0
      %v1213 = vsel %vm893, %v1194, 0
      %1215 = vmatpush.bf16.msra.mxu0 0
      %1216 = vmatpush.bf16.msra.mxu0 0
      %1217 = vmatpush.bf16.msra.mxu0 0
      %1218 = vmatpush.bf16.msra.mxu0 0
      %1219 = vmatpush.bf16.msra.mxu0 0
      %1220 = vmatpush.bf16.msra.mxu0 0
      %1221 = vmatpush.bf16.msra.mxu0 0
      %1222 = vmatpush.bf16.msra.mxu0 %v1201
      %1223 = vmatmul.bf16.gmra.mxu0 %v1204
      %v1224 = vpop.f32.mrf.mxu0
      %v1225 = vadd.f32 0.0, %v1224
      %v1226 = vpop.f32.mrf.mxu0
      %v1227 = vadd.f32 0.0, %v1226
      %1228 = vmatmul.bf16.gmra.mxu0 %v1207
      %v1229 = vpop.f32.mrf.mxu0
      %v1230 = vadd.f32 0.0, %v1229
      %v1231 = vpop.f32.mrf.mxu0
      %v1232 = vadd.f32 0.0, %v1231
      %1233 = vmatmul.bf16.gmra.mxu0 %v1210
      %v1234 = vpop.f32.mrf.mxu0
      %v1235 = vadd.f32 0.0, %v1234
      %v1236 = vpop.f32.mrf.mxu0
      %v1237 = vadd.f32 0.0, %v1236
      %1238 = vmatmul.bf16.gmra.mxu0 %v1213
      %v1239 = vpop.f32.mrf.mxu0
      %v1240 = vadd.f32 0.0, %v1239
      %v1241 = vpop.f32.mrf.mxu0
      %v1242 = vadd.f32 0.0, %v1241
      %1243 = vdwg.mxu0
      %v1244 = vld [vmem:[%s4] sm:$0x1]
      %v1246 = vperm.slane %v1244, 0
      %v1248 = vmul.f32 %v1225, %v1246
      %v1249 = vmul.f32 %v1227, %v1246
      %v1250 = vmul.f32 %v1230, %v1246
      %v1251 = vmul.f32 %v1232, %v1246
      %v1252 = vmul.f32 %v1235, %v1246
      %v1253 = vmul.f32 %v1237, %v1246
      %v1254 = vmul.f32 %v1240, %v1246
      %v1255 = vmul.f32 %v1242, %v1246
      %v1256 = vld [vmem:[%s5] sm:$0x1]
      %v1258 = vperm.slane %v1256, 0
      %v1260 = vadd.f32 %v1248, %v1258
      %v1261 = vadd.f32 %v1249, %v1258
      %v1262 = vadd.f32 %v1250, %v1258
      %v1263 = vadd.f32 %v1251, %v1258
      %v1264 = vadd.f32 %v1252, %v1258
      %v1265 = vadd.f32 %v1253, %v1258
      %v1266 = vadd.f32 %v1254, %v1258
      %v1267 = vadd.f32 %v1255, %v1258
      %v1268 = vmax.f32 %v1260, 0.0
      %v1269 = vmax.f32 %v1261, 0.0
      %v1270 = vmax.f32 %v1262, 0.0
      %v1271 = vmax.f32 %v1263, 0.0
      %v1272 = vmax.f32 %v1264, 0.0
      %v1273 = vmax.f32 %v1265, 0.0
      %v1274 = vmax.f32 %v1266, 0.0
      %v1275 = vmax.f32 %v1267, 0.0
      %1276 = vst.msk [vmem:[%s1133 + $0x1] sm:$0xff] %vm820, %v1268
      %1277 = vst.msk [vmem:[%s1133 + $0x11] sm:$0xff] %vm820, %v1269
      %1278 = vst.msk [vmem:[%s1133 + $0x21] sm:$0xff] %vm820, %v1270
      %1279 = vst.msk [vmem:[%s1133 + $0x31] sm:$0xff] %vm820, %v1271
      %1280 = vst.msk [vmem:[%s1133 + $0x41] sm:$0xff] %vm820, %v1272
      %1281 = vst.msk [vmem:[%s1133 + $0x51] sm:$0xff] %vm820, %v1273
      %1282 = vst.msk [vmem:[%s1133 + $0x61] sm:$0xff] %vm820, %v1274
      %1283 = vst.msk [vmem:[%s1133 + $0x71] sm:$0xff] %vm820, %v1275
      %s1284 = scalar_lea.vmem [#allocation2], 560
      %1285 = vst.msk [vmem:[%s1284] sm:$0xff] %vm820, 0.0
      %1286 = vst.msk [vmem:[%s1284 + $0x8] sm:$0x1] %vm822, 0.0
      %s1287 = scalar_lea.vmem [#allocation2], 432
      %1288 = vst.msk [vmem:[%s1287 + $0x8] sm:$0x1] %vm822, 0.0
      %1289 = vst.msk [vmem:[%s1287 + $0x18] sm:$0x1] %vm822, 0.0
      %1290 = vst.msk [vmem:[%s1287 + $0x28] sm:$0x1] %vm822, 0.0
      %1291 = vst.msk [vmem:[%s1287 + $0x38] sm:$0x1] %vm822, 0.0
      %1292 = vst.msk [vmem:[%s1287 + $0x48] sm:$0x1] %vm822, 0.0
      %1293 = vst.msk [vmem:[%s1287 + $0x58] sm:$0x1] %vm822, 0.0
      %1294 = vst.msk [vmem:[%s1287 + $0x68] sm:$0x1] %vm822, 0.0
      %1295 = vst.msk [vmem:[%s1287 + $0x78] sm:$0x1] %vm822, 0.0
      %1296 = vst.msk [vmem:[%s1287 + $0x88] sm:$0x1] %vm822, 0.0
      %v1297 = vld [vmem:[%s813 + $0x60] sm:$0xf]
      %v1298 = vld [vmem:[%s813 + $0x64] sm:$0xf]
      %v1299 = vld [vmem:[%s813 + $0x68] sm:$0xf]
      %v1300 = vld [vmem:[%s813 + $0x6c] sm:$0xf]
      %v1301 = vld [vmem:[%s813 + $0x70] sm:$0xf]
      %v1302 = vld [vmem:[%s813 + $0x74] sm:$0xf]
      %v1303 = vld [vmem:[%s813 + $0x78] sm:$0xf]
      %v1304 = vld [vmem:[%s813 + $0x7c] sm:$0xf]
      %v1305 = vunpack.c.l.bf16 %v1297
      %v1306 = vunpack.c.l.bf16 %v1298
      %v1307 = vunpack.c.l.bf16 %v1299
      %v1308 = vunpack.c.l.bf16 %v1300
      %v1309 = vunpack.c.l.bf16 %v1301
      %v1310 = vunpack.c.l.bf16 %v1302
      %v1311 = vunpack.c.l.bf16 %v1303
      %v1312 = vunpack.c.l.bf16 %v1304
      %v1313 = vld [vmem:[%s1] sm:$0x1]
      %v1315 = vperm.slane %v1313, 0
      %v1317 = vmul.f32 %v1305, %v1315
      %v1318 = vmul.f32 %v1306, %v1315
      %v1319 = vmul.f32 %v1307, %v1315
      %v1320 = vmul.f32 %v1308, %v1315
      %v1321 = vmul.f32 %v1309, %v1315
      %v1322 = vmul.f32 %v1310, %v1315
      %v1323 = vmul.f32 %v1311, %v1315
      %v1324 = vmul.f32 %v1312, %v1315
      %v1325 = vld [vmem:[%s2] sm:$0x1]
      %v1327 = vperm.slane %v1325, 0
      %v1329 = vadd.f32 %v1317, %v1327
      %v1330 = vadd.f32 %v1318, %v1327
      %v1331 = vadd.f32 %v1319, %v1327
      %v1332 = vadd.f32 %v1320, %v1327
      %v1333 = vadd.f32 %v1321, %v1327
      %v1334 = vadd.f32 %v1322, %v1327
      %v1335 = vadd.f32 %v1323, %v1327
      %v1336 = vadd.f32 %v1324, %v1327
      %v1337 = vmax.f32 %v1329, 0.0
      %v1338 = vmax.f32 %v1330, 0.0
      %v1339 = vmax.f32 %v1331, 0.0
      %v1340 = vmax.f32 %v1332, 0.0
      %v1341 = vmax.f32 %v1333, 0.0
      %v1342 = vmax.f32 %v1334, 0.0
      %v1343 = vmax.f32 %v1335, 0.0
      %v1344 = vmax.f32 %v1336, 0.0
      %v1345 = vpack.c.bf16 %v1338, %v1337
      %v1346 = vpack.c.bf16 %v1340, %v1339
      %v1347 = vpack.c.bf16 %v1342, %v1341
      %v1348 = vpack.c.bf16 %v1344, %v1343
      %v1349 = vld [vmem:[%s3] sm:$0xf]
      %v1350 = vld [vmem:[%s3 + $0x4] sm:$0xf]
      %v1353 = vunpack.c.l.b16 %v1349
      %v1354 = vunpack.c.l.b16 %v1350
      %v1355 = vpack.c.b16 %v1354, %v1353
      %v1358 = vsel %vm893, %v1345, 0
      %v1361 = vsel %vm893, %v1346, 0
      %v1364 = vsel %vm893, %v1347, 0
      %v1367 = vsel %vm893, %v1348, 0
      %1369 = vmatpush.bf16.msra.mxu0 0
      %1370 = vmatpush.bf16.msra.mxu0 0
      %1371 = vmatpush.bf16.msra.mxu0 0
      %1372 = vmatpush.bf16.msra.mxu0 0
      %1373 = vmatpush.bf16.msra.mxu0 0
      %1374 = vmatpush.bf16.msra.mxu0 0
      %1375 = vmatpush.bf16.msra.mxu0 0
      %1376 = vmatpush.bf16.msra.mxu0 %v1355
      %1377 = vmatmul.bf16.gmra.mxu0 %v1358
      %v1378 = vpop.f32.mrf.mxu0
      %v1379 = vadd.f32 0.0, %v1378
      %v1380 = vpop.f32.mrf.mxu0
      %v1381 = vadd.f32 0.0, %v1380
      %1382 = vmatmul.bf16.gmra.mxu0 %v1361
      %v1383 = vpop.f32.mrf.mxu0
      %v1384 = vadd.f32 0.0, %v1383
      %v1385 = vpop.f32.mrf.mxu0
      %v1386 = vadd.f32 0.0, %v1385
      %1387 = vmatmul.bf16.gmra.mxu0 %v1364
      %v1388 = vpop.f32.mrf.mxu0
      %v1389 = vadd.f32 0.0, %v1388
      %v1390 = vpop.f32.mrf.mxu0
      %v1391 = vadd.f32 0.0, %v1390
      %1392 = vmatmul.bf16.gmra.mxu0 %v1367
      %v1393 = vpop.f32.mrf.mxu0
      %v1394 = vadd.f32 0.0, %v1393
      %v1395 = vpop.f32.mrf.mxu0
      %v1396 = vadd.f32 0.0, %v1395
      %1397 = vdwg.mxu0
      %v1398 = vld [vmem:[%s4] sm:$0x1]
      %v1400 = vperm.slane %v1398, 0
      %v1402 = vmul.f32 %v1379, %v1400
      %v1403 = vmul.f32 %v1381, %v1400
      %v1404 = vmul.f32 %v1384, %v1400
      %v1405 = vmul.f32 %v1386, %v1400
      %v1406 = vmul.f32 %v1389, %v1400
      %v1407 = vmul.f32 %v1391, %v1400
      %v1408 = vmul.f32 %v1394, %v1400
      %v1409 = vmul.f32 %v1396, %v1400
      %v1410 = vld [vmem:[%s5] sm:$0x1]
      %v1412 = vperm.slane %v1410, 0
      %v1414 = vadd.f32 %v1402, %v1412
      %v1415 = vadd.f32 %v1403, %v1412
      %v1416 = vadd.f32 %v1404, %v1412
      %v1417 = vadd.f32 %v1405, %v1412
      %v1418 = vadd.f32 %v1406, %v1412
      %v1419 = vadd.f32 %v1407, %v1412
      %v1420 = vadd.f32 %v1408, %v1412
      %v1421 = vadd.f32 %v1409, %v1412
      %v1422 = vmax.f32 %v1414, 0.0
      %v1423 = vmax.f32 %v1415, 0.0
      %v1424 = vmax.f32 %v1416, 0.0
      %v1425 = vmax.f32 %v1417, 0.0
      %v1426 = vmax.f32 %v1418, 0.0
      %v1427 = vmax.f32 %v1419, 0.0
      %v1428 = vmax.f32 %v1420, 0.0
      %v1429 = vmax.f32 %v1421, 0.0
      %1430 = vst.msk [vmem:[%s1287] sm:$0xff] %vm820, %v1422
      %1431 = vst.msk [vmem:[%s1287 + $0x10] sm:$0xff] %vm820, %v1423
      %1432 = vst.msk [vmem:[%s1287 + $0x20] sm:$0xff] %vm820, %v1424
      %1433 = vst.msk [vmem:[%s1287 + $0x30] sm:$0xff] %vm820, %v1425
      %1434 = vst.msk [vmem:[%s1287 + $0x40] sm:$0xff] %vm820, %v1426
      %1435 = vst.msk [vmem:[%s1287 + $0x50] sm:$0xff] %vm820, %v1427
      %1436 = vst.msk [vmem:[%s1287 + $0x60] sm:$0xff] %vm820, %v1428
      %1437 = vst.msk [vmem:[%s1287 + $0x70] sm:$0xff] %vm820, %v1429
      %v1438 = vld [vmem:[%s6] sm:$0xf]
      %v1439 = vld [vmem:[%s6 + $0x4] sm:$0x3]
      %v1440 = vld [vmem:[%s6 + $0x8] sm:$0xf]
      %v1441 = vld [vmem:[%s6 + $0xc] sm:$0x3]
      %v1442 = vld [vmem:[%s6 + $0x10] sm:$0xf]
      %v1443 = vld [vmem:[%s6 + $0x14] sm:$0x3]
      %v1444 = vld [vmem:[%s6 + $0x18] sm:$0xf]
      %v1445 = vld [vmem:[%s6 + $0x1c] sm:$0x3]
      %v1446 = vld [vmem:[%s6 + $0x20] sm:$0xf]
      %v1447 = vld [vmem:[%s6 + $0x24] sm:$0x3]
      %v1448 = vld [vmem:[%s6 + $0x28] sm:$0xf]
      %v1449 = vld [vmem:[%s6 + $0x2c] sm:$0x3]
      %v1450 = vld [vmem:[%s6 + $0x30] sm:$0xf]
      %v1451 = vld [vmem:[%s6 + $0x34] sm:$0x3]
      %v1452 = vld [vmem:[%s6 + $0x38] sm:$0xf]
      %v1453 = vld [vmem:[%s6 + $0x3c] sm:$0x3]
      %v1454 = vld [vmem:[%s6 + $0x40] sm:$0xf]
      %v1455 = vld [vmem:[%s6 + $0x44] sm:$0x3]
      %v1456 = vld [vmem:[#allocation2] sm:$0xff]
      %v1457 = vld [vmem:[#allocation2 + $0x10] sm:$0xff]
      %v1458 = vld [vmem:[#allocation2 + $0x20] sm:$0xff]
      %v1459 = vld [vmem:[#allocation2 + $0x30] sm:$0xff]
      %v1460 = vld [vmem:[#allocation2 + $0x40] sm:$0xff]
      %v1461 = vld [vmem:[#allocation2 + $0x50] sm:$0xff]
      %v1462 = vld [vmem:[#allocation2 + $0x60] sm:$0xff]
      %v1463 = vld [vmem:[#allocation2 + $0x70] sm:$0xff]
      %v1464 = vpack.c.bf16 %v1457, %v1456
      %v1465 = vpack.c.bf16 %v1459, %v1458
      %v1466 = vpack.c.bf16 %v1461, %v1460
      %v1467 = vpack.c.bf16 %v1463, %v1462
      %v1468 = vld [vmem:[%s976] sm:$0xff]
      %v1469 = vld [vmem:[%s976 + $0x10] sm:$0xff]
      %v1470 = vld [vmem:[%s976 + $0x20] sm:$0xff]
      %v1471 = vld [vmem:[%s976 + $0x30] sm:$0xff]
      %v1472 = vld [vmem:[%s976 + $0x40] sm:$0xff]
      %v1473 = vld [vmem:[%s976 + $0x50] sm:$0xff]
      %v1474 = vld [vmem:[%s976 + $0x60] sm:$0xff]
      %v1475 = vld [vmem:[%s976 + $0x70] sm:$0xff]
      %v1476 = vpack.c.bf16 %v1469, %v1468
      %v1477 = vpack.c.bf16 %v1471, %v1470
      %v1478 = vpack.c.bf16 %v1473, %v1472
      %v1479 = vpack.c.bf16 %v1475, %v1474
      %v1482 = vunpack.c.l.b16 %v1440
      %v1483 = vunpack.c.l.b16 %v1441
      %v1484 = vpack.c.b16 %v1483, %v1482
      %v1486 = vsel %vm820, %v1476, 0
      %v1489 = vsel %vm820, %v1477, 0
      %v1492 = vsel %vm820, %v1478, 0
      %v1495 = vsel %vm820, %v1479, 0
      %vm1497 = vcmask 1045504
      %v1499 = vsel %vm1497, %v1484, 0
      %1501 = vmatpush.bf16.msra.mxu0 0
      %1502 = vmatpush.bf16.msra.mxu0 0
      %1503 = vmatpush.bf16.msra.mxu0 0
      %1504 = vmatpush.bf16.msra.mxu0 0
      %1505 = vmatpush.bf16.msra.mxu0 0
      %1506 = vmatpush.bf16.msra.mxu0 0
      %1507 = vmatpush.bf16.msra.mxu0 0
      %1508 = vmatpush.bf16.msra.mxu0 %v1499
      %1509 = vmatmul.bf16.gmra.mxu0 %v1486
      %v1510 = vpop.f32.mrf.mxu0
      %v1511 = vadd.f32 0.0, %v1510
      %v1512 = vpop.f32.mrf.mxu0
      %v1513 = vadd.f32 0.0, %v1512
      %1514 = vmatmul.bf16.gmra.mxu0 %v1489
      %v1515 = vpop.f32.mrf.mxu0
      %v1516 = vadd.f32 0.0, %v1515
      %v1517 = vpop.f32.mrf.mxu0
      %v1518 = vadd.f32 0.0, %v1517
      %1519 = vmatmul.bf16.gmra.mxu0 %v1492
      %v1520 = vpop.f32.mrf.mxu0
      %v1521 = vadd.f32 0.0, %v1520
      %v1522 = vpop.f32.mrf.mxu0
      %v1523 = vadd.f32 0.0, %v1522
      %1524 = vmatmul.bf16.gmra.mxu0 %v1495
      %v1525 = vpop.f32.mrf.mxu0
      %v1526 = vadd.f32 0.0, %v1525
      %v1527 = vpop.f32.mrf.mxu0
      %v1528 = vadd.f32 0.0, %v1527
      %1529 = vdwg.mxu0
      %v1532 = vunpack.c.l.b16 %v1438
      %v1533 = vunpack.c.l.b16 %v1439
      %v1534 = vpack.c.b16 %v1533, %v1532
      %v1536 = vsel %vm820, %v1464, 0
      %v1539 = vsel %vm820, %v1465, 0
      %v1542 = vsel %vm820, %v1466, 0
      %v1545 = vsel %vm820, %v1467, 0
      %v1548 = vsel %vm1497, %v1534, 0
      %1550 = vmatpush.bf16.msra.mxu0 0
      %1551 = vmatpush.bf16.msra.mxu0 0
      %1552 = vmatpush.bf16.msra.mxu0 0
      %1553 = vmatpush.bf16.msra.mxu0 0
      %1554 = vmatpush.bf16.msra.mxu0 0
      %1555 = vmatpush.bf16.msra.mxu0 0
      %1556 = vmatpush.bf16.msra.mxu0 0
      %1557 = vmatpush.bf16.msra.mxu0 %v1548
      %1558 = vmatmul.bf16.gmra.mxu0 %v1536
      %v1559 = vpop.f32.mrf.mxu0
      %v1560 = vadd.f32 %v1511, %v1559
      %v1561 = vpop.f32.mrf.mxu0
      %v1562 = vadd.f32 %v1513, %v1561
      %1563 = vmatmul.bf16.gmra.mxu0 %v1539
      %v1564 = vpop.f32.mrf.mxu0
      %v1565 = vadd.f32 %v1516, %v1564
      %v1566 = vpop.f32.mrf.mxu0
      %v1567 = vadd.f32 %v1518, %v1566
      %1568 = vmatmul.bf16.gmra.mxu0 %v1542
      %v1569 = vpop.f32.mrf.mxu0
      %v1570 = vadd.f32 %v1521, %v1569
      %v1571 = vpop.f32.mrf.mxu0
      %v1572 = vadd.f32 %v1523, %v1571
      %1573 = vmatmul.bf16.gmra.mxu0 %v1545
      %v1574 = vpop.f32.mrf.mxu0
      %v1575 = vadd.f32 %v1526, %v1574
      %v1576 = vpop.f32.mrf.mxu0
      %v1577 = vadd.f32 %v1528, %v1576
      %1578 = vdwg.mxu0
      %v1579 = vld [vmem:[#allocation2 + $0x1] sm:$0xff]
      %v1580 = vld [vmem:[#allocation2 + $0x11] sm:$0xff]
      %v1581 = vld [vmem:[#allocation2 + $0x21] sm:$0xff]
      %v1582 = vld [vmem:[#allocation2 + $0x31] sm:$0xff]
      %v1583 = vld [vmem:[#allocation2 + $0x41] sm:$0xff]
      %v1584 = vld [vmem:[#allocation2 + $0x51] sm:$0xff]
      %v1585 = vld [vmem:[#allocation2 + $0x61] sm:$0xff]
      %v1586 = vld [vmem:[#allocation2 + $0x71] sm:$0xff]
      %v1587 = vpack.c.bf16 %v1580, %v1579
      %v1588 = vpack.c.bf16 %v1582, %v1581
      %v1589 = vpack.c.bf16 %v1584, %v1583
      %v1590 = vpack.c.bf16 %v1586, %v1585
      %v1593 = vunpack.c.l.b16 %v1442
      %v1594 = vunpack.c.l.b16 %v1443
      %v1595 = vpack.c.b16 %v1594, %v1593
      %v1597 = vsel %vm820, %v1587, 0
      %v1600 = vsel %vm820, %v1588, 0
      %v1603 = vsel %vm820, %v1589, 0
      %v1606 = vsel %vm820, %v1590, 0
      %v1609 = vsel %vm1497, %v1595, 0
      %1611 = vmatpush.bf16.msra.mxu0 0
      %1612 = vmatpush.bf16.msra.mxu0 0
      %1613 = vmatpush.bf16.msra.mxu0 0
      %1614 = vmatpush.bf16.msra.mxu0 0
      %1615 = vmatpush.bf16.msra.mxu0 0
      %1616 = vmatpush.bf16.msra.mxu0 0
      %1617 = vmatpush.bf16.msra.mxu0 0
      %1618 = vmatpush.bf16.msra.mxu0 %v1609
      %1619 = vmatmul.bf16.gmra.mxu0 %v1597
      %v1620 = vpop.f32.mrf.mxu0
      %v1621 = vadd.f32 0.0, %v1620
      %v1622 = vpop.f32.mrf.mxu0
      %v1623 = vadd.f32 0.0, %v1622
      %1624 = vmatmul.bf16.gmra.mxu0 %v1600
      %v1625 = vpop.f32.mrf.mxu0
      %v1626 = vadd.f32 0.0, %v1625
      %v1627 = vpop.f32.mrf.mxu0
      %v1628 = vadd.f32 0.0, %v1627
      %1629 = vmatmul.bf16.gmra.mxu0 %v1603
      %v1630 = vpop.f32.mrf.mxu0
      %v1631 = vadd.f32 0.0, %v1630
      %v1632 = vpop.f32.mrf.mxu0
      %v1633 = vadd.f32 0.0, %v1632
      %1634 = vmatmul.bf16.gmra.mxu0 %v1606
      %v1635 = vpop.f32.mrf.mxu0
      %v1636 = vadd.f32 0.0, %v1635
      %v1637 = vpop.f32.mrf.mxu0
      %v1638 = vadd.f32 0.0, %v1637
      %1639 = vdwg.mxu0
      %v1640 = vadd.f32 %v1560, %v1621
      %v1641 = vadd.f32 %v1562, %v1623
      %v1642 = vadd.f32 %v1565, %v1626
      %v1643 = vadd.f32 %v1567, %v1628
      %v1644 = vadd.f32 %v1570, %v1631
      %v1645 = vadd.f32 %v1572, %v1633
      %v1646 = vadd.f32 %v1575, %v1636
      %v1647 = vadd.f32 %v1577, %v1638
      %v1648 = vld [vmem:[%s1133] sm:$0xff]
      %v1649 = vld [vmem:[%s1133 + $0x10] sm:$0xff]
      %v1650 = vld [vmem:[%s1133 + $0x20] sm:$0xff]
      %v1651 = vld [vmem:[%s1133 + $0x30] sm:$0xff]
      %v1652 = vld [vmem:[%s1133 + $0x40] sm:$0xff]
      %v1653 = vld [vmem:[%s1133 + $0x50] sm:$0xff]
      %v1654 = vld [vmem:[%s1133 + $0x60] sm:$0xff]
      %v1655 = vld [vmem:[%s1133 + $0x70] sm:$0xff]
      %v1656 = vpack.c.bf16 %v1649, %v1648
      %v1657 = vpack.c.bf16 %v1651, %v1650
      %v1658 = vpack.c.bf16 %v1653, %v1652
      %v1659 = vpack.c.bf16 %v1655, %v1654
      %v1662 = vunpack.c.l.b16 %v1444
      %v1663 = vunpack.c.l.b16 %v1445
      %v1664 = vpack.c.b16 %v1663, %v1662
      %v1666 = vsel %vm820, %v1656, 0
      %v1669 = vsel %vm820, %v1657, 0
      %v1672 = vsel %vm820, %v1658, 0
      %v1675 = vsel %vm820, %v1659, 0
      %v1678 = vsel %vm1497, %v1664, 0
      %1680 = vmatpush.bf16.msra.mxu0 0
      %1681 = vmatpush.bf16.msra.mxu0 0
      %1682 = vmatpush.bf16.msra.mxu0 0
      %1683 = vmatpush.bf16.msra.mxu0 0
      %1684 = vmatpush.bf16.msra.mxu0 0
      %1685 = vmatpush.bf16.msra.mxu0 0
      %1686 = vmatpush.bf16.msra.mxu0 0
      %1687 = vmatpush.bf16.msra.mxu0 %v1678
      %1688 = vmatmul.bf16.gmra.mxu0 %v1666
      %v1689 = vpop.f32.mrf.mxu0
      %v1690 = vadd.f32 0.0, %v1689
      %v1691 = vpop.f32.mrf.mxu0
      %v1692 = vadd.f32 0.0, %v1691
      %1693 = vmatmul.bf16.gmra.mxu0 %v1669
      %v1694 = vpop.f32.mrf.mxu0
      %v1695 = vadd.f32 0.0, %v1694
      %v1696 = vpop.f32.mrf.mxu0
      %v1697 = vadd.f32 0.0, %v1696
      %1698 = vmatmul.bf16.gmra.mxu0 %v1672
      %v1699 = vpop.f32.mrf.mxu0
      %v1700 = vadd.f32 0.0, %v1699
      %v1701 = vpop.f32.mrf.mxu0
      %v1702 = vadd.f32 0.0, %v1701
      %1703 = vmatmul.bf16.gmra.mxu0 %v1675
      %v1704 = vpop.f32.mrf.mxu0
      %v1705 = vadd.f32 0.0, %v1704
      %v1706 = vpop.f32.mrf.mxu0
      %v1707 = vadd.f32 0.0, %v1706
      %1708 = vdwg.mxu0
      %v1709 = vadd.f32 %v1640, %v1690
      %v1710 = vadd.f32 %v1641, %v1692
      %v1711 = vadd.f32 %v1642, %v1695
      %v1712 = vadd.f32 %v1643, %v1697
      %v1713 = vadd.f32 %v1644, %v1700
      %v1714 = vadd.f32 %v1645, %v1702
      %v1715 = vadd.f32 %v1646, %v1705
      %v1716 = vadd.f32 %v1647, %v1707
      %v1717 = vld [vmem:[%s1287] sm:$0xff]
      %v1718 = vld [vmem:[%s1287 + $0x10] sm:$0xff]
      %v1719 = vld [vmem:[%s1287 + $0x20] sm:$0xff]
      %v1720 = vld [vmem:[%s1287 + $0x30] sm:$0xff]
      %v1721 = vld [vmem:[%s1287 + $0x40] sm:$0xff]
      %v1722 = vld [vmem:[%s1287 + $0x50] sm:$0xff]
      %v1723 = vld [vmem:[%s1287 + $0x60] sm:$0xff]
      %v1724 = vld [vmem:[%s1287 + $0x70] sm:$0xff]
      %v1725 = vpack.c.bf16 %v1718, %v1717
      %v1726 = vpack.c.bf16 %v1720, %v1719
      %v1727 = vpack.c.bf16 %v1722, %v1721
      %v1728 = vpack.c.bf16 %v1724, %v1723
      %v1731 = vunpack.c.l.b16 %v1446
      %v1732 = vunpack.c.l.b16 %v1447
      %v1733 = vpack.c.b16 %v1732, %v1731
      %v1735 = vsel %vm820, %v1725, 0
      %v1738 = vsel %vm820, %v1726, 0
      %v1741 = vsel %vm820, %v1727, 0
      %v1744 = vsel %vm820, %v1728, 0
      %v1747 = vsel %vm1497, %v1733, 0
      %1749 = vmatpush.bf16.msra.mxu0 0
      %1750 = vmatpush.bf16.msra.mxu0 0
      %1751 = vmatpush.bf16.msra.mxu0 0
      %1752 = vmatpush.bf16.msra.mxu0 0
      %1753 = vmatpush.bf16.msra.mxu0 0
      %1754 = vmatpush.bf16.msra.mxu0 0
      %1755 = vmatpush.bf16.msra.mxu0 0
      %1756 = vmatpush.bf16.msra.mxu0 %v1747
      %1757 = vmatmul.bf16.gmra.mxu0 %v1735
      %v1758 = vpop.f32.mrf.mxu0
      %v1759 = vadd.f32 0.0, %v1758
      %v1760 = vpop.f32.mrf.mxu0
      %v1761 = vadd.f32 0.0, %v1760
      %1762 = vmatmul.bf16.gmra.mxu0 %v1738
      %v1763 = vpop.f32.mrf.mxu0
      %v1764 = vadd.f32 0.0, %v1763
      %v1765 = vpop.f32.mrf.mxu0
      %v1766 = vadd.f32 0.0, %v1765
      %1767 = vmatmul.bf16.gmra.mxu0 %v1741
      %v1768 = vpop.f32.mrf.mxu0
      %v1769 = vadd.f32 0.0, %v1768
      %v1770 = vpop.f32.mrf.mxu0
      %v1771 = vadd.f32 0.0, %v1770
      %1772 = vmatmul.bf16.gmra.mxu0 %v1744
      %v1773 = vpop.f32.mrf.mxu0
      %v1774 = vadd.f32 0.0, %v1773
      %v1775 = vpop.f32.mrf.mxu0
      %v1776 = vadd.f32 0.0, %v1775
      %1777 = vdwg.mxu0
      %v1778 = vadd.f32 %v1709, %v1759
      %v1779 = vadd.f32 %v1710, %v1761
      %v1780 = vadd.f32 %v1711, %v1764
      %v1781 = vadd.f32 %v1712, %v1766
      %v1782 = vadd.f32 %v1713, %v1769
      %v1783 = vadd.f32 %v1714, %v1771
      %v1784 = vadd.f32 %v1715, %v1774
      %v1785 = vadd.f32 %v1716, %v1776
      %v1786 = vld [vmem:[%s1133 + $0x1] sm:$0xff]
      %v1787 = vld [vmem:[%s1133 + $0x11] sm:$0xff]
      %v1788 = vld [vmem:[%s1133 + $0x21] sm:$0xff]
      %v1789 = vld [vmem:[%s1133 + $0x31] sm:$0xff]
      %v1790 = vld [vmem:[%s1133 + $0x41] sm:$0xff]
      %v1791 = vld [vmem:[%s1133 + $0x51] sm:$0xff]
      %v1792 = vld [vmem:[%s1133 + $0x61] sm:$0xff]
      %v1793 = vld [vmem:[%s1133 + $0x71] sm:$0xff]
      %v1794 = vpack.c.bf16 %v1787, %v1786
      %v1795 = vpack.c.bf16 %v1789, %v1788
      %v1796 = vpack.c.bf16 %v1791, %v1790
      %v1797 = vpack.c.bf16 %v1793, %v1792
      %v1800 = vunpack.c.l.b16 %v1448
      %v1801 = vunpack.c.l.b16 %v1449
      %v1802 = vpack.c.b16 %v1801, %v1800
      %v1804 = vsel %vm820, %v1794, 0
      %v1807 = vsel %vm820, %v1795, 0
      %v1810 = vsel %vm820, %v1796, 0
      %v1813 = vsel %vm820, %v1797, 0
      %v1816 = vsel %vm1497, %v1802, 0
      %1818 = vmatpush.bf16.msra.mxu0 0
      %1819 = vmatpush.bf16.msra.mxu0 0
      %1820 = vmatpush.bf16.msra.mxu0 0
      %1821 = vmatpush.bf16.msra.mxu0 0
      %1822 = vmatpush.bf16.msra.mxu0 0
      %1823 = vmatpush.bf16.msra.mxu0 0
      %1824 = vmatpush.bf16.msra.mxu0 0
      %1825 = vmatpush.bf16.msra.mxu0 %v1816
      %1826 = vmatmul.bf16.gmra.mxu0 %v1804
      %v1827 = vpop.f32.mrf.mxu0
      %v1828 = vadd.f32 0.0, %v1827
      %v1829 = vpop.f32.mrf.mxu0
      %v1830 = vadd.f32 0.0, %v1829
      %1831 = vmatmul.bf16.gmra.mxu0 %v1807
      %v1832 = vpop.f32.mrf.mxu0
      %v1833 = vadd.f32 0.0, %v1832
      %v1834 = vpop.f32.mrf.mxu0
      %v1835 = vadd.f32 0.0, %v1834
      %1836 = vmatmul.bf16.gmra.mxu0 %v1810
      %v1837 = vpop.f32.mrf.mxu0
      %v1838 = vadd.f32 0.0, %v1837
      %v1839 = vpop.f32.mrf.mxu0
      %v1840 = vadd.f32 0.0, %v1839
      %1841 = vmatmul.bf16.gmra.mxu0 %v1813
      %v1842 = vpop.f32.mrf.mxu0
      %v1843 = vadd.f32 0.0, %v1842
      %v1844 = vpop.f32.mrf.mxu0
      %v1845 = vadd.f32 0.0, %v1844
      %1846 = vdwg.mxu0
      %v1847 = vadd.f32 %v1778, %v1828
      %v1848 = vadd.f32 %v1779, %v1830
      %v1849 = vadd.f32 %v1780, %v1833
      %v1850 = vadd.f32 %v1781, %v1835
      %v1851 = vadd.f32 %v1782, %v1838
      %v1852 = vadd.f32 %v1783, %v1840
      %v1853 = vadd.f32 %v1784, %v1843
      %v1854 = vadd.f32 %v1785, %v1845
      %v1855 = vld [vmem:[%s967] sm:$0xff]
      %v1856 = vld [vmem:[%s967 + $0x10] sm:$0xff]
      %v1857 = vld [vmem:[%s967 + $0x20] sm:$0xff]
      %v1858 = vld [vmem:[%s967 + $0x30] sm:$0xff]
      %v1859 = vld [vmem:[%s967 + $0x40] sm:$0xff]
      %v1860 = vld [vmem:[%s967 + $0x50] sm:$0xff]
      %v1861 = vld [vmem:[%s967 + $0x60] sm:$0xff]
      %v1862 = vld [vmem:[%s967 + $0x70] sm:$0xff]
      %v1863 = vpack.c.bf16 %v1856, %v1855
      %v1864 = vpack.c.bf16 %v1858, %v1857
      %v1865 = vpack.c.bf16 %v1860, %v1859
      %v1866 = vpack.c.bf16 %v1862, %v1861
      %v1869 = vunpack.c.l.b16 %v1450
      %v1870 = vunpack.c.l.b16 %v1451
      %v1871 = vpack.c.b16 %v1870, %v1869
      %v1873 = vsel %vm820, %v1863, 0
      %v1876 = vsel %vm820, %v1864, 0
      %v1879 = vsel %vm820, %v1865, 0
      %v1882 = vsel %vm820, %v1866, 0
      %v1885 = vsel %vm1497, %v1871, 0
      %1887 = vmatpush.bf16.msra.mxu0 0
      %1888 = vmatpush.bf16.msra.mxu0 0
      %1889 = vmatpush.bf16.msra.mxu0 0
      %1890 = vmatpush.bf16.msra.mxu0 0
      %1891 = vmatpush.bf16.msra.mxu0 0
      %1892 = vmatpush.bf16.msra.mxu0 0
      %1893 = vmatpush.bf16.msra.mxu0 0
      %1894 = vmatpush.bf16.msra.mxu0 %v1885
      %1895 = vmatmul.bf16.gmra.mxu0 %v1873
      %v1896 = vpop.f32.mrf.mxu0
      %v1897 = vadd.f32 0.0, %v1896
      %v1898 = vpop.f32.mrf.mxu0
      %v1899 = vadd.f32 0.0, %v1898
      %1900 = vmatmul.bf16.gmra.mxu0 %v1876
      %v1901 = vpop.f32.mrf.mxu0
      %v1902 = vadd.f32 0.0, %v1901
      %v1903 = vpop.f32.mrf.mxu0
      %v1904 = vadd.f32 0.0, %v1903
      %1905 = vmatmul.bf16.gmra.mxu0 %v1879
      %v1906 = vpop.f32.mrf.mxu0
      %v1907 = vadd.f32 0.0, %v1906
      %v1908 = vpop.f32.mrf.mxu0
      %v1909 = vadd.f32 0.0, %v1908
      %1910 = vmatmul.bf16.gmra.mxu0 %v1882
      %v1911 = vpop.f32.mrf.mxu0
      %v1912 = vadd.f32 0.0, %v1911
      %v1913 = vpop.f32.mrf.mxu0
      %v1914 = vadd.f32 0.0, %v1913
      %1915 = vdwg.mxu0
      %v1916 = vadd.f32 %v1847, %v1897
      %v1917 = vadd.f32 %v1848, %v1899
      %v1918 = vadd.f32 %v1849, %v1902
      %v1919 = vadd.f32 %v1850, %v1904
      %v1920 = vadd.f32 %v1851, %v1907
      %v1921 = vadd.f32 %v1852, %v1909
      %v1922 = vadd.f32 %v1853, %v1912
      %v1923 = vadd.f32 %v1854, %v1914
      %v1924 = vld [vmem:[%s1121] sm:$0xff]
      %v1925 = vld [vmem:[%s1121 + $0x10] sm:$0xff]
      %v1926 = vld [vmem:[%s1121 + $0x20] sm:$0xff]
      %v1927 = vld [vmem:[%s1121 + $0x30] sm:$0xff]
      %v1928 = vld [vmem:[%s1121 + $0x40] sm:$0xff]
      %v1929 = vld [vmem:[%s1121 + $0x50] sm:$0xff]
      %v1930 = vld [vmem:[%s1121 + $0x60] sm:$0xff]
      %v1931 = vld [vmem:[%s1121 + $0x70] sm:$0xff]
      %v1932 = vpack.c.bf16 %v1925, %v1924
      %v1933 = vpack.c.bf16 %v1927, %v1926
      %v1934 = vpack.c.bf16 %v1929, %v1928
      %v1935 = vpack.c.bf16 %v1931, %v1930
      %v1938 = vunpack.c.l.b16 %v1452
      %v1939 = vunpack.c.l.b16 %v1453
      %v1940 = vpack.c.b16 %v1939, %v1938
      %v1942 = vsel %vm820, %v1932, 0
      %v1945 = vsel %vm820, %v1933, 0
      %v1948 = vsel %vm820, %v1934, 0
      %v1951 = vsel %vm820, %v1935, 0
      %v1954 = vsel %vm1497, %v1940, 0
      %1956 = vmatpush.bf16.msra.mxu0 0
      %1957 = vmatpush.bf16.msra.mxu0 0
      %1958 = vmatpush.bf16.msra.mxu0 0
      %1959 = vmatpush.bf16.msra.mxu0 0
      %1960 = vmatpush.bf16.msra.mxu0 0
      %1961 = vmatpush.bf16.msra.mxu0 0
      %1962 = vmatpush.bf16.msra.mxu0 0
      %1963 = vmatpush.bf16.msra.mxu0 %v1954
      %1964 = vmatmul.bf16.gmra.mxu0 %v1942
      %v1965 = vpop.f32.mrf.mxu0
      %v1966 = vadd.f32 0.0, %v1965
      %v1967 = vpop.f32.mrf.mxu0
      %v1968 = vadd.f32 0.0, %v1967
      %1969 = vmatmul.bf16.gmra.mxu0 %v1945
      %v1970 = vpop.f32.mrf.mxu0
      %v1971 = vadd.f32 0.0, %v1970
      %v1972 = vpop.f32.mrf.mxu0
      %v1973 = vadd.f32 0.0, %v1972
      %1974 = vmatmul.bf16.gmra.mxu0 %v1948
      %v1975 = vpop.f32.mrf.mxu0
      %v1976 = vadd.f32 0.0, %v1975
      %v1977 = vpop.f32.mrf.mxu0
      %v1978 = vadd.f32 0.0, %v1977
      %1979 = vmatmul.bf16.gmra.mxu0 %v1951
      %v1980 = vpop.f32.mrf.mxu0
      %v1981 = vadd.f32 0.0, %v1980
      %v1982 = vpop.f32.mrf.mxu0
      %v1983 = vadd.f32 0.0, %v1982
      %1984 = vdwg.mxu0
      %v1985 = vadd.f32 %v1916, %v1966
      %v1986 = vadd.f32 %v1917, %v1968
      %v1987 = vadd.f32 %v1918, %v1971
      %v1988 = vadd.f32 %v1919, %v1973
      %v1989 = vadd.f32 %v1920, %v1976
      %v1990 = vadd.f32 %v1921, %v1978
      %v1991 = vadd.f32 %v1922, %v1981
      %v1992 = vadd.f32 %v1923, %v1983
      %v1993 = vld [vmem:[%s967 + $0x1] sm:$0xff]
      %v1994 = vld [vmem:[%s967 + $0x11] sm:$0xff]
      %v1995 = vld [vmem:[%s967 + $0x21] sm:$0xff]
      %v1996 = vld [vmem:[%s967 + $0x31] sm:$0xff]
      %v1997 = vld [vmem:[%s967 + $0x41] sm:$0xff]
      %v1998 = vld [vmem:[%s967 + $0x51] sm:$0xff]
      %v1999 = vld [vmem:[%s967 + $0x61] sm:$0xff]
      %v2000 = vld [vmem:[%s967 + $0x71] sm:$0xff]
      %v2001 = vpack.c.bf16 %v1994, %v1993
      %v2002 = vpack.c.bf16 %v1996, %v1995
      %v2003 = vpack.c.bf16 %v1998, %v1997
      %v2004 = vpack.c.bf16 %v2000, %v1999
      %v2007 = vunpack.c.l.b16 %v1454
      %v2008 = vunpack.c.l.b16 %v1455
      %v2009 = vpack.c.b16 %v2008, %v2007
      %v2011 = vsel %vm820, %v2001, 0
      %v2014 = vsel %vm820, %v2002, 0
      %v2017 = vsel %vm820, %v2003, 0
      %v2020 = vsel %vm820, %v2004, 0
      %v2023 = vsel %vm1497, %v2009, 0
      %2025 = vmatpush.bf16.msra.mxu0 0
      %2026 = vmatpush.bf16.msra.mxu0 0
      %2027 = vmatpush.bf16.msra.mxu0 0
      %2028 = vmatpush.bf16.msra.mxu0 0
      %2029 = vmatpush.bf16.msra.mxu0 0
      %2030 = vmatpush.bf16.msra.mxu0 0
      %2031 = vmatpush.bf16.msra.mxu0 0
      %2032 = vmatpush.bf16.msra.mxu0 %v2023
      %2033 = vmatmul.bf16.gmra.mxu0 %v2011
      %v2034 = vpop.f32.mrf.mxu0
      %v2035 = vadd.f32 0.0, %v2034
      %v2036 = vpop.f32.mrf.mxu0
      %v2037 = vadd.f32 0.0, %v2036
      %2038 = vmatmul.bf16.gmra.mxu0 %v2014
      %v2039 = vpop.f32.mrf.mxu0
      %v2040 = vadd.f32 0.0, %v2039
      %v2041 = vpop.f32.mrf.mxu0
      %v2042 = vadd.f32 0.0, %v2041
      %2043 = vmatmul.bf16.gmra.mxu0 %v2017
      %v2044 = vpop.f32.mrf.mxu0
      %v2045 = vadd.f32 0.0, %v2044
      %v2046 = vpop.f32.mrf.mxu0
      %v2047 = vadd.f32 0.0, %v2046
      %2048 = vmatmul.bf16.gmra.mxu0 %v2020
      %v2049 = vpop.f32.mrf.mxu0
      %v2050 = vadd.f32 0.0, %v2049
      %v2051 = vpop.f32.mrf.mxu0
      %v2052 = vadd.f32 0.0, %v2051
      %2053 = vdwg.mxu0
      %v2054 = vadd.f32 %v1985, %v2035
      %v2055 = vadd.f32 %v1986, %v2037
      %v2056 = vadd.f32 %v1987, %v2040
      %v2057 = vadd.f32 %v1988, %v2042
      %v2058 = vadd.f32 %v1989, %v2045
      %v2059 = vadd.f32 %v1990, %v2047
      %v2060 = vadd.f32 %v1991, %v2050
      %v2061 = vadd.f32 %v1992, %v2052
      %vm2062 = vcmask 64512
      %2063 = vst.msk [vmem:[#allocation3] sm:$0xff] %vm2062, 0.0
      %vm2064 = vcmask 60416
      %2065 = vst.msk [vmem:[#allocation3 + $0x8] sm:$0xf] %vm2064, 0.0
      %2066 = vst.msk [vmem:[#allocation3 + $0x10] sm:$0xff] %vm2062, 0.0
      %2067 = vst.msk [vmem:[#allocation3 + $0x18] sm:$0xf] %vm2064, 0.0
      %s2068 = scalar_lea.vmem [#allocation3], 160
      %2069 = vst.msk [vmem:[%s2068] sm:$0xff] %vm2062, 0.0
      %2070 = vst.msk [vmem:[%s2068 + $0x8] sm:$0xf] %vm2064, 0.0
      %2071 = vst.msk [vmem:[%s2068 + $0x10] sm:$0xff] %vm2062, 0.0
      %2072 = vst.msk [vmem:[%s2068 + $0x18] sm:$0xf] %vm2064, 0.0
      %vm2073 = vcmask 58368
      %2074 = vst.msk [vmem:[#allocation3] sm:$0x3] %vm2073, 0.0
      %2075 = vst.msk [vmem:[#allocation3 + $0x10] sm:$0x3] %vm2073, 0.0
      %2076 = vst.msk [vmem:[#allocation3 + $0x20] sm:$0x3] %vm2073, 0.0
      %2077 = vst.msk [vmem:[#allocation3 + $0x30] sm:$0x3] %vm2073, 0.0
      %2078 = vst.msk [vmem:[#allocation3 + $0x40] sm:$0x3] %vm2073, 0.0
      %2079 = vst.msk [vmem:[#allocation3 + $0x50] sm:$0x3] %vm2073, 0.0
      %2080 = vst.msk [vmem:[#allocation3 + $0x60] sm:$0x3] %vm2073, 0.0
      %2081 = vst.msk [vmem:[#allocation3 + $0x70] sm:$0x3] %vm2073, 0.0
      %2082 = vst.msk [vmem:[#allocation3 + $0x80] sm:$0x3] %vm2073, 0.0
      %2083 = vst.msk [vmem:[#allocation3 + $0x90] sm:$0x3] %vm2073, 0.0
      %2084 = vst.msk [vmem:[#allocation3 + $0xa0] sm:$0x3] %vm2073, 0.0
      %2085 = vst.msk [vmem:[#allocation3 + $0xb0] sm:$0x3] %vm2073, 0.0
      %2086 = vst.msk [vmem:[#allocation3 + $0xa] sm:$0x3] %vm2073, 0.0
      %2087 = vst.msk [vmem:[#allocation3 + $0x1a] sm:$0x3] %vm2073, 0.0
      %2088 = vst.msk [vmem:[#allocation3 + $0x2a] sm:$0x3] %vm2073, 0.0
      %2089 = vst.msk [vmem:[#allocation3 + $0x3a] sm:$0x3] %vm2073, 0.0
      %2090 = vst.msk [vmem:[#allocation3 + $0x4a] sm:$0x3] %vm2073, 0.0
      %2091 = vst.msk [vmem:[#allocation3 + $0x5a] sm:$0x3] %vm2073, 0.0
      %2092 = vst.msk [vmem:[#allocation3 + $0x6a] sm:$0x3] %vm2073, 0.0
      %2093 = vst.msk [vmem:[#allocation3 + $0x7a] sm:$0x3] %vm2073, 0.0
      %2094 = vst.msk [vmem:[#allocation3 + $0x8a] sm:$0x3] %vm2073, 0.0
      %2095 = vst.msk [vmem:[#allocation3 + $0x9a] sm:$0x3] %vm2073, 0.0
      %2096 = vst.msk [vmem:[#allocation3 + $0xaa] sm:$0x3] %vm2073, 0.0
      %2097 = vst.msk [vmem:[#allocation3 + $0xba] sm:$0x3] %vm2073, 0.0
      %v2098 = vld [vmem:[%s7] sm:$0x1]
      %v2099 = vld [vmem:[%s8] sm:$0x1]
      %v2100 = vld [vmem:[%s9] sm:$0xff]
      %v2101 = vld [vmem:[%s9 + $0x8] sm:$0x1]
      %v2103 = vperm.slane %v2098, 0
      %v2105 = vmul.f32 %v2054, %v2103
      %v2106 = vmul.f32 %v2055, %v2103
      %v2107 = vmul.f32 %v2056, %v2103
      %v2108 = vmul.f32 %v2057, %v2103
      %v2109 = vmul.f32 %v2058, %v2103
      %v2110 = vmul.f32 %v2059, %v2103
      %v2111 = vmul.f32 %v2060, %v2103
      %v2112 = vmul.f32 %v2061, %v2103
      %v2114 = vperm.slane %v2099, 0
      %v2116 = vadd.f32 %v2105, %v2114
      %v2117 = vadd.f32 %v2106, %v2114
      %v2118 = vadd.f32 %v2107, %v2114
      %v2119 = vadd.f32 %v2108, %v2114
      %v2120 = vadd.f32 %v2109, %v2114
      %v2121 = vadd.f32 %v2110, %v2114
      %v2122 = vadd.f32 %v2111, %v2114
      %v2123 = vadd.f32 %v2112, %v2114
      %v2124 = vmax.f32 %v2116, 0.0
      %v2125 = vmax.f32 %v2117, 0.0
      %v2126 = vmax.f32 %v2118, 0.0
      %v2127 = vmax.f32 %v2119, 0.0
      %v2128 = vmax.f32 %v2120, 0.0
      %v2129 = vmax.f32 %v2121, 0.0
      %v2130 = vmax.f32 %v2122, 0.0
      %v2131 = vmax.f32 %v2123, 0.0
      %s2132 = scalar_lea.vmem [#allocation3], 32
      %2133 = vst.msk [vmem:[%s2132 + $0x2] sm:$0xff] %vm2062, %v2124
      %2134 = vst.msk [vmem:[%s2132 + $0x12] sm:$0xff] %vm2062, %v2125
      %2135 = vst.msk [vmem:[%s2132 + $0x22] sm:$0xff] %vm2062, %v2126
      %2136 = vst.msk [vmem:[%s2132 + $0x32] sm:$0xff] %vm2062, %v2127
      %2137 = vst.msk [vmem:[%s2132 + $0x42] sm:$0xff] %vm2062, %v2128
      %2138 = vst.msk [vmem:[%s2132 + $0x52] sm:$0xff] %vm2062, %v2129
      %2139 = vst.msk [vmem:[%s2132 + $0x62] sm:$0xff] %vm2062, %v2130
      %2140 = vst.msk [vmem:[%s2132 + $0x72] sm:$0xff] %vm2062, %v2131
      %s2141 = scalar_lea.vmem [#allocation3], 16
      %v2142 = vld [vmem:[%s2141 + $0x1] sm:$0xff]
      %v2143 = vld [vmem:[%s2141 + $0x11] sm:$0xff]
      %v2144 = vld [vmem:[%s2141 + $0x21] sm:$0xff]
      %v2145 = vld [vmem:[%s2141 + $0x31] sm:$0xff]
      %v2146 = vld [vmem:[%s2141 + $0x41] sm:$0xff]
      %v2147 = vld [vmem:[%s2141 + $0x51] sm:$0xff]
      %v2148 = vld [vmem:[%s2141 + $0x61] sm:$0xff]
      %v2149 = vld [vmem:[%s2141 + $0x71] sm:$0xff]
      %v2150 = vperm.slane %v2100, 0
      %v2151 = vmul.f32 %v2142, %v2150
      %v2152 = vmul.f32 %v2143, %v2150
      %v2153 = vmul.f32 %v2144, %v2150
      %v2154 = vmul.f32 %v2145, %v2150
      %v2155 = vmul.f32 %v2146, %v2150
      %v2156 = vmul.f32 %v2147, %v2150
      %v2157 = vmul.f32 %v2148, %v2150
      %v2158 = vmul.f32 %v2149, %v2150
      %v2159 = vadd.f32 %v2151, 0.0
      %v2160 = vadd.f32 %v2152, 0.0
      %v2161 = vadd.f32 %v2153, 0.0
      %v2162 = vadd.f32 %v2154, 0.0
      %v2163 = vadd.f32 %v2155, 0.0
      %v2164 = vadd.f32 %v2156, 0.0
      %v2165 = vadd.f32 %v2157, 0.0
      %v2166 = vadd.f32 %v2158, 0.0
      %v2167 = vld [vmem:[%s2141 + $0x2] sm:$0xff]
      %v2168 = vld [vmem:[%s2141 + $0x12] sm:$0xff]
      %v2169 = vld [vmem:[%s2141 + $0x22] sm:$0xff]
      %v2170 = vld [vmem:[%s2141 + $0x32] sm:$0xff]
      %v2171 = vld [vmem:[%s2141 + $0x42] sm:$0xff]
      %v2172 = vld [vmem:[%s2141 + $0x52] sm:$0xff]
      %v2173 = vld [vmem:[%s2141 + $0x62] sm:$0xff]
      %v2174 = vld [vmem:[%s2141 + $0x72] sm:$0xff]
      %v2175 = vperm.slane %v2100, 1
      %v2176 = vmul.f32 %v2167, %v2175
      %v2177 = vmul.f32 %v2168, %v2175
      %v2178 = vmul.f32 %v2169, %v2175
      %v2179 = vmul.f32 %v2170, %v2175
      %v2180 = vmul.f32 %v2171, %v2175
      %v2181 = vmul.f32 %v2172, %v2175
      %v2182 = vmul.f32 %v2173, %v2175
      %v2183 = vmul.f32 %v2174, %v2175
      %v2184 = vadd.f32 %v2159, %v2176
      %v2185 = vadd.f32 %v2160, %v2177
      %v2186 = vadd.f32 %v2161, %v2178
      %v2187 = vadd.f32 %v2162, %v2179
      %v2188 = vadd.f32 %v2163, %v2180
      %v2189 = vadd.f32 %v2164, %v2181
      %v2190 = vadd.f32 %v2165, %v2182
      %v2191 = vadd.f32 %v2166, %v2183
      %v2192 = vld [vmem:[%s2141 + $0x3] sm:$0xff]
      %v2193 = vld [vmem:[%s2141 + $0x13] sm:$0xff]
      %v2194 = vld [vmem:[%s2141 + $0x23] sm:$0xff]
      %v2195 = vld [vmem:[%s2141 + $0x33] sm:$0xff]
      %v2196 = vld [vmem:[%s2141 + $0x43] sm:$0xff]
      %v2197 = vld [vmem:[%s2141 + $0x53] sm:$0xff]
      %v2198 = vld [vmem:[%s2141 + $0x63] sm:$0xff]
      %v2199 = vld [vmem:[%s2141 + $0x73] sm:$0xff]
      %v2200 = vperm.slane %v2100, 2
      %v2201 = vmul.f32 %v2192, %v2200
      %v2202 = vmul.f32 %v2193, %v2200
      %v2203 = vmul.f32 %v2194, %v2200
      %v2204 = vmul.f32 %v2195, %v2200
      %v2205 = vmul.f32 %v2196, %v2200
      %v2206 = vmul.f32 %v2197, %v2200
      %v2207 = vmul.f32 %v2198, %v2200
      %v2208 = vmul.f32 %v2199, %v2200
      %v2209 = vadd.f32 %v2184, %v2201
      %v2210 = vadd.f32 %v2185, %v2202
      %v2211 = vadd.f32 %v2186, %v2203
      %v2212 = vadd.f32 %v2187, %v2204
      %v2213 = vadd.f32 %v2188, %v2205
      %v2214 = vadd.f32 %v2189, %v2206
      %v2215 = vadd.f32 %v2190, %v2207
      %v2216 = vadd.f32 %v2191, %v2208
      %v2217 = vld [vmem:[%s2132 + $0x1] sm:$0xff]
      %v2218 = vld [vmem:[%s2132 + $0x11] sm:$0xff]
      %v2219 = vld [vmem:[%s2132 + $0x21] sm:$0xff]
      %v2220 = vld [vmem:[%s2132 + $0x31] sm:$0xff]
      %v2221 = vld [vmem:[%s2132 + $0x41] sm:$0xff]
      %v2222 = vld [vmem:[%s2132 + $0x51] sm:$0xff]
      %v2223 = vld [vmem:[%s2132 + $0x61] sm:$0xff]
      %v2224 = vld [vmem:[%s2132 + $0x71] sm:$0xff]
      %v2225 = vperm.slane %v2100, 3
      %v2226 = vmul.f32 %v2217, %v2225
      %v2227 = vmul.f32 %v2218, %v2225
      %v2228 = vmul.f32 %v2219, %v2225
      %v2229 = vmul.f32 %v2220, %v2225
      %v2230 = vmul.f32 %v2221, %v2225
      %v2231 = vmul.f32 %v2222, %v2225
      %v2232 = vmul.f32 %v2223, %v2225
      %v2233 = vmul.f32 %v2224, %v2225
      %v2234 = vadd.f32 %v2209, %v2226
      %v2235 = vadd.f32 %v2210, %v2227
      %v2236 = vadd.f32 %v2211, %v2228
      %v2237 = vadd.f32 %v2212, %v2229
      %v2238 = vadd.f32 %v2213, %v2230
      %v2239 = vadd.f32 %v2214, %v2231
      %v2240 = vadd.f32 %v2215, %v2232
      %v2241 = vadd.f32 %v2216, %v2233
      %v2242 = vld [vmem:[%s2132 + $0x2] sm:$0xff]
      %v2243 = vld [vmem:[%s2132 + $0x12] sm:$0xff]
      %v2244 = vld [vmem:[%s2132 + $0x22] sm:$0xff]
      %v2245 = vld [vmem:[%s2132 + $0x32] sm:$0xff]
      %v2246 = vld [vmem:[%s2132 + $0x42] sm:$0xff]
      %v2247 = vld [vmem:[%s2132 + $0x52] sm:$0xff]
      %v2248 = vld [vmem:[%s2132 + $0x62] sm:$0xff]
      %v2249 = vld [vmem:[%s2132 + $0x72] sm:$0xff]
      %v2250 = vperm.slane %v2100, 4
      %v2251 = vmul.f32 %v2242, %v2250
      %v2252 = vmul.f32 %v2243, %v2250
      %v2253 = vmul.f32 %v2244, %v2250
      %v2254 = vmul.f32 %v2245, %v2250
      %v2255 = vmul.f32 %v2246, %v2250
      %v2256 = vmul.f32 %v2247, %v2250
      %v2257 = vmul.f32 %v2248, %v2250
      %v2258 = vmul.f32 %v2249, %v2250
      %v2259 = vadd.f32 %v2234, %v2251
      %v2260 = vadd.f32 %v2235, %v2252
      %v2261 = vadd.f32 %v2236, %v2253
      %v2262 = vadd.f32 %v2237, %v2254
      %v2263 = vadd.f32 %v2238, %v2255
      %v2264 = vadd.f32 %v2239, %v2256
      %v2265 = vadd.f32 %v2240, %v2257
      %v2266 = vadd.f32 %v2241, %v2258
      %v2267 = vld [vmem:[%s2132 + $0x3] sm:$0xff]
      %v2268 = vld [vmem:[%s2132 + $0x13] sm:$0xff]
      %v2269 = vld [vmem:[%s2132 + $0x23] sm:$0xff]
      %v2270 = vld [vmem:[%s2132 + $0x33] sm:$0xff]
      %v2271 = vld [vmem:[%s2132 + $0x43] sm:$0xff]
      %v2272 = vld [vmem:[%s2132 + $0x53] sm:$0xff]
      %v2273 = vld [vmem:[%s2132 + $0x63] sm:$0xff]
      %v2274 = vld [vmem:[%s2132 + $0x73] sm:$0xff]
      %v2275 = vperm.slane %v2100, 5
      %v2276 = vmul.f32 %v2267, %v2275
      %v2277 = vmul.f32 %v2268, %v2275
      %v2278 = vmul.f32 %v2269, %v2275
      %v2279 = vmul.f32 %v2270, %v2275
      %v2280 = vmul.f32 %v2271, %v2275
      %v2281 = vmul.f32 %v2272, %v2275
      %v2282 = vmul.f32 %v2273, %v2275
      %v2283 = vmul.f32 %v2274, %v2275
      %v2284 = vadd.f32 %v2259, %v2276
      %v2285 = vadd.f32 %v2260, %v2277
      %v2286 = vadd.f32 %v2261, %v2278
      %v2287 = vadd.f32 %v2262, %v2279
      %v2288 = vadd.f32 %v2263, %v2280
      %v2289 = vadd.f32 %v2264, %v2281
      %v2290 = vadd.f32 %v2265, %v2282
      %v2291 = vadd.f32 %v2266, %v2283
      %s2292 = scalar_lea.vmem [#allocation3], 48
      %v2293 = vld [vmem:[%s2292 + $0x1] sm:$0xff]
      %v2294 = vld [vmem:[%s2292 + $0x11] sm:$0xff]
      %v2295 = vld [vmem:[%s2292 + $0x21] sm:$0xff]
      %v2296 = vld [vmem:[%s2292 + $0x31] sm:$0xff]
      %v2297 = vld [vmem:[%s2292 + $0x41] sm:$0xff]
      %v2298 = vld [vmem:[%s2292 + $0x51] sm:$0xff]
      %v2299 = vld [vmem:[%s2292 + $0x61] sm:$0xff]
      %v2300 = vld [vmem:[%s2292 + $0x71] sm:$0xff]
      %v2301 = vperm.slane %v2100, 6
      %v2302 = vmul.f32 %v2293, %v2301
      %v2303 = vmul.f32 %v2294, %v2301
      %v2304 = vmul.f32 %v2295, %v2301
      %v2305 = vmul.f32 %v2296, %v2301
      %v2306 = vmul.f32 %v2297, %v2301
      %v2307 = vmul.f32 %v2298, %v2301
      %v2308 = vmul.f32 %v2299, %v2301
      %v2309 = vmul.f32 %v2300, %v2301
      %v2310 = vadd.f32 %v2284, %v2302
      %v2311 = vadd.f32 %v2285, %v2303
      %v2312 = vadd.f32 %v2286, %v2304
      %v2313 = vadd.f32 %v2287, %v2305
      %v2314 = vadd.f32 %v2288, %v2306
      %v2315 = vadd.f32 %v2289, %v2307
      %v2316 = vadd.f32 %v2290, %v2308
      %v2317 = vadd.f32 %v2291, %v2309
      %v2318 = vld [vmem:[%s2292 + $0x2] sm:$0xff]
      %v2319 = vld [vmem:[%s2292 + $0x12] sm:$0xff]
      %v2320 = vld [vmem:[%s2292 + $0x22] sm:$0xff]
      %v2321 = vld [vmem:[%s2292 + $0x32] sm:$0xff]
      %v2322 = vld [vmem:[%s2292 + $0x42] sm:$0xff]
      %v2323 = vld [vmem:[%s2292 + $0x52] sm:$0xff]
      %v2324 = vld [vmem:[%s2292 + $0x62] sm:$0xff]
      %v2325 = vld [vmem:[%s2292 + $0x72] sm:$0xff]
      %v2326 = vperm.slane %v2100, 7
      %v2327 = vmul.f32 %v2318, %v2326
      %v2328 = vmul.f32 %v2319, %v2326
      %v2329 = vmul.f32 %v2320, %v2326
      %v2330 = vmul.f32 %v2321, %v2326
      %v2331 = vmul.f32 %v2322, %v2326
      %v2332 = vmul.f32 %v2323, %v2326
      %v2333 = vmul.f32 %v2324, %v2326
      %v2334 = vmul.f32 %v2325, %v2326
      %v2335 = vadd.f32 %v2310, %v2327
      %v2336 = vadd.f32 %v2311, %v2328
      %v2337 = vadd.f32 %v2312, %v2329
      %v2338 = vadd.f32 %v2313, %v2330
      %v2339 = vadd.f32 %v2314, %v2331
      %v2340 = vadd.f32 %v2315, %v2332
      %v2341 = vadd.f32 %v2316, %v2333
      %v2342 = vadd.f32 %v2317, %v2334
      %v2343 = vld [vmem:[%s2292 + $0x3] sm:$0xff]
      %v2344 = vld [vmem:[%s2292 + $0x13] sm:$0xff]
      %v2345 = vld [vmem:[%s2292 + $0x23] sm:$0xff]
      %v2346 = vld [vmem:[%s2292 + $0x33] sm:$0xff]
      %v2347 = vld [vmem:[%s2292 + $0x43] sm:$0xff]
      %v2348 = vld [vmem:[%s2292 + $0x53] sm:$0xff]
      %v2349 = vld [vmem:[%s2292 + $0x63] sm:$0xff]
      %v2350 = vld [vmem:[%s2292 + $0x73] sm:$0xff]
      %v2351 = vperm.slane %v2101, 0
      %v2352 = vmul.f32 %v2343, %v2351
      %v2353 = vmul.f32 %v2344, %v2351
      %v2354 = vmul.f32 %v2345, %v2351
      %v2355 = vmul.f32 %v2346, %v2351
      %v2356 = vmul.f32 %v2347, %v2351
      %v2357 = vmul.f32 %v2348, %v2351
      %v2358 = vmul.f32 %v2349, %v2351
      %v2359 = vmul.f32 %v2350, %v2351
      %v2360 = vadd.f32 %v2335, %v2352
      %v2361 = vadd.f32 %v2336, %v2353
      %v2362 = vadd.f32 %v2337, %v2354
      %v2363 = vadd.f32 %v2338, %v2355
      %v2364 = vadd.f32 %v2339, %v2356
      %v2365 = vadd.f32 %v2340, %v2357
      %v2366 = vadd.f32 %v2341, %v2358
      %v2367 = vadd.f32 %v2342, %v2359
      %v2368 = vld [vmem:[%s10] sm:$0x1]
      %v2369 = vld [vmem:[%s11] sm:$0x1]
      %v2370 = vld [vmem:[%s12] sm:$0xff]
      %v2371 = vld [vmem:[%s12 + $0x8] sm:$0x1]
      %v2373 = vperm.slane %v2368, 0
      %v2375 = vmul.f32 %v2054, %v2373
      %v2376 = vmul.f32 %v2055, %v2373
      %v2377 = vmul.f32 %v2056, %v2373
      %v2378 = vmul.f32 %v2057, %v2373
      %v2379 = vmul.f32 %v2058, %v2373
      %v2380 = vmul.f32 %v2059, %v2373
      %v2381 = vmul.f32 %v2060, %v2373
      %v2382 = vmul.f32 %v2061, %v2373
      %v2384 = vperm.slane %v2369, 0
      %v2386 = vadd.f32 %v2375, %v2384
      %v2387 = vadd.f32 %v2376, %v2384
      %v2388 = vadd.f32 %v2377, %v2384
      %v2389 = vadd.f32 %v2378, %v2384
      %v2390 = vadd.f32 %v2379, %v2384
      %v2391 = vadd.f32 %v2380, %v2384
      %v2392 = vadd.f32 %v2381, %v2384
      %v2393 = vadd.f32 %v2382, %v2384
      %v2394 = vmax.f32 %v2386, 0.0
      %v2395 = vmax.f32 %v2387, 0.0
      %v2396 = vmax.f32 %v2388, 0.0
      %v2397 = vmax.f32 %v2389, 0.0
      %v2398 = vmax.f32 %v2390, 0.0
      %v2399 = vmax.f32 %v2391, 0.0
      %v2400 = vmax.f32 %v2392, 0.0
      %v2401 = vmax.f32 %v2393, 0.0
      %2402 = vst.msk [vmem:[%s2132 + $0x2] sm:$0xff] %vm2062, %v2394
      %2403 = vst.msk [vmem:[%s2132 + $0x12] sm:$0xff] %vm2062, %v2395
      %2404 = vst.msk [vmem:[%s2132 + $0x22] sm:$0xff] %vm2062, %v2396
      %2405 = vst.msk [vmem:[%s2132 + $0x32] sm:$0xff] %vm2062, %v2397
      %2406 = vst.msk [vmem:[%s2132 + $0x42] sm:$0xff] %vm2062, %v2398
      %2407 = vst.msk [vmem:[%s2132 + $0x52] sm:$0xff] %vm2062, %v2399
      %2408 = vst.msk [vmem:[%s2132 + $0x62] sm:$0xff] %vm2062, %v2400
      %2409 = vst.msk [vmem:[%s2132 + $0x72] sm:$0xff] %vm2062, %v2401
      %v2410 = vld [vmem:[#allocation3] sm:$0xff]
      %v2411 = vld [vmem:[#allocation3 + $0x10] sm:$0xff]
      %v2412 = vld [vmem:[#allocation3 + $0x20] sm:$0xff]
      %v2413 = vld [vmem:[#allocation3 + $0x30] sm:$0xff]
      %v2414 = vld [vmem:[#allocation3 + $0x40] sm:$0xff]
      %v2415 = vld [vmem:[#allocation3 + $0x50] sm:$0xff]
      %v2416 = vld [vmem:[#allocation3 + $0x60] sm:$0xff]
      %v2417 = vld [vmem:[#allocation3 + $0x70] sm:$0xff]
      %v2418 = vperm.slane %v2370, 0
      %v2419 = vmul.f32 %v2410, %v2418
      %v2420 = vmul.f32 %v2411, %v2418
      %v2421 = vmul.f32 %v2412, %v2418
      %v2422 = vmul.f32 %v2413, %v2418
      %v2423 = vmul.f32 %v2414, %v2418
      %v2424 = vmul.f32 %v2415, %v2418
      %v2425 = vmul.f32 %v2416, %v2418
      %v2426 = vmul.f32 %v2417, %v2418
      %v2427 = vadd.f32 %v2419, 0.0
      %v2428 = vadd.f32 %v2420, 0.0
      %v2429 = vadd.f32 %v2421, 0.0
      %v2430 = vadd.f32 %v2422, 0.0
      %v2431 = vadd.f32 %v2423, 0.0
      %v2432 = vadd.f32 %v2424, 0.0
      %v2433 = vadd.f32 %v2425, 0.0
      %v2434 = vadd.f32 %v2426, 0.0
      %v2435 = vld [vmem:[#allocation3 + $0x2] sm:$0xff]
      %v2436 = vld [vmem:[#allocation3 + $0x12] sm:$0xff]
      %v2437 = vld [vmem:[#allocation3 + $0x22] sm:$0xff]
      %v2438 = vld [vmem:[#allocation3 + $0x32] sm:$0xff]
      %v2439 = vld [vmem:[#allocation3 + $0x42] sm:$0xff]
      %v2440 = vld [vmem:[#allocation3 + $0x52] sm:$0xff]
      %v2441 = vld [vmem:[#allocation3 + $0x62] sm:$0xff]
      %v2442 = vld [vmem:[#allocation3 + $0x72] sm:$0xff]
      %v2443 = vperm.slane %v2370, 1
      %v2444 = vmul.f32 %v2435, %v2443
      %v2445 = vmul.f32 %v2436, %v2443
      %v2446 = vmul.f32 %v2437, %v2443
      %v2447 = vmul.f32 %v2438, %v2443
      %v2448 = vmul.f32 %v2439, %v2443
      %v2449 = vmul.f32 %v2440, %v2443
      %v2450 = vmul.f32 %v2441, %v2443
      %v2451 = vmul.f32 %v2442, %v2443
      %v2452 = vadd.f32 %v2427, %v2444
      %v2453 = vadd.f32 %v2428, %v2445
      %v2454 = vadd.f32 %v2429, %v2446
      %v2455 = vadd.f32 %v2430, %v2447
      %v2456 = vadd.f32 %v2431, %v2448
      %v2457 = vadd.f32 %v2432, %v2449
      %v2458 = vadd.f32 %v2433, %v2450
      %v2459 = vadd.f32 %v2434, %v2451
      %v2460 = vld [vmem:[#allocation3 + $0x4] sm:$0xff]
      %v2461 = vld [vmem:[#allocation3 + $0x14] sm:$0xff]
      %v2462 = vld [vmem:[#allocation3 + $0x24] sm:$0xff]
      %v2463 = vld [vmem:[#allocation3 + $0x34] sm:$0xff]
      %v2464 = vld [vmem:[#allocation3 + $0x44] sm:$0xff]
      %v2465 = vld [vmem:[#allocation3 + $0x54] sm:$0xff]
      %v2466 = vld [vmem:[#allocation3 + $0x64] sm:$0xff]
      %v2467 = vld [vmem:[#allocation3 + $0x74] sm:$0xff]
      %v2468 = vperm.slane %v2370, 2
      %v2469 = vmul.f32 %v2460, %v2468
      %v2470 = vmul.f32 %v2461, %v2468
      %v2471 = vmul.f32 %v2462, %v2468
      %v2472 = vmul.f32 %v2463, %v2468
      %v2473 = vmul.f32 %v2464, %v2468
      %v2474 = vmul.f32 %v2465, %v2468
      %v2475 = vmul.f32 %v2466, %v2468
      %v2476 = vmul.f32 %v2467, %v2468
      %v2477 = vadd.f32 %v2452, %v2469
      %v2478 = vadd.f32 %v2453, %v2470
      %v2479 = vadd.f32 %v2454, %v2471
      %v2480 = vadd.f32 %v2455, %v2472
      %v2481 = vadd.f32 %v2456, %v2473
      %v2482 = vadd.f32 %v2457, %v2474
      %v2483 = vadd.f32 %v2458, %v2475
      %v2484 = vadd.f32 %v2459, %v2476
      %v2485 = vld [vmem:[%s2132] sm:$0xff]
      %v2486 = vld [vmem:[%s2132 + $0x10] sm:$0xff]
      %v2487 = vld [vmem:[%s2132 + $0x20] sm:$0xff]
      %v2488 = vld [vmem:[%s2132 + $0x30] sm:$0xff]
      %v2489 = vld [vmem:[%s2132 + $0x40] sm:$0xff]
      %v2490 = vld [vmem:[%s2132 + $0x50] sm:$0xff]
      %v2491 = vld [vmem:[%s2132 + $0x60] sm:$0xff]
      %v2492 = vld [vmem:[%s2132 + $0x70] sm:$0xff]
      %v2493 = vperm.slane %v2370, 3
      %v2494 = vmul.f32 %v2485, %v2493
      %v2495 = vmul.f32 %v2486, %v2493
      %v2496 = vmul.f32 %v2487, %v2493
      %v2497 = vmul.f32 %v2488, %v2493
      %v2498 = vmul.f32 %v2489, %v2493
      %v2499 = vmul.f32 %v2490, %v2493
      %v2500 = vmul.f32 %v2491, %v2493
      %v2501 = vmul.f32 %v2492, %v2493
      %v2502 = vadd.f32 %v2477, %v2494
      %v2503 = vadd.f32 %v2478, %v2495
      %v2504 = vadd.f32 %v2479, %v2496
      %v2505 = vadd.f32 %v2480, %v2497
      %v2506 = vadd.f32 %v2481, %v2498
      %v2507 = vadd.f32 %v2482, %v2499
      %v2508 = vadd.f32 %v2483, %v2500
      %v2509 = vadd.f32 %v2484, %v2501
      %v2510 = vld [vmem:[%s2132 + $0x2] sm:$0xff]
      %v2511 = vld [vmem:[%s2132 + $0x12] sm:$0xff]
      %v2512 = vld [vmem:[%s2132 + $0x22] sm:$0xff]
      %v2513 = vld [vmem:[%s2132 + $0x32] sm:$0xff]
      %v2514 = vld [vmem:[%s2132 + $0x42] sm:$0xff]
      %v2515 = vld [vmem:[%s2132 + $0x52] sm:$0xff]
      %v2516 = vld [vmem:[%s2132 + $0x62] sm:$0xff]
      %v2517 = vld [vmem:[%s2132 + $0x72] sm:$0xff]
      %v2518 = vperm.slane %v2370, 4
      %v2519 = vmul.f32 %v2510, %v2518
      %v2520 = vmul.f32 %v2511, %v2518
      %v2521 = vmul.f32 %v2512, %v2518
      %v2522 = vmul.f32 %v2513, %v2518
      %v2523 = vmul.f32 %v2514, %v2518
      %v2524 = vmul.f32 %v2515, %v2518
      %v2525 = vmul.f32 %v2516, %v2518
      %v2526 = vmul.f32 %v2517, %v2518
      %v2527 = vadd.f32 %v2502, %v2519
      %v2528 = vadd.f32 %v2503, %v2520
      %v2529 = vadd.f32 %v2504, %v2521
      %v2530 = vadd.f32 %v2505, %v2522
      %v2531 = vadd.f32 %v2506, %v2523
      %v2532 = vadd.f32 %v2507, %v2524
      %v2533 = vadd.f32 %v2508, %v2525
      %v2534 = vadd.f32 %v2509, %v2526
      %v2535 = vld [vmem:[%s2132 + $0x4] sm:$0xff]
      %v2536 = vld [vmem:[%s2132 + $0x14] sm:$0xff]
      %v2537 = vld [vmem:[%s2132 + $0x24] sm:$0xff]
      %v2538 = vld [vmem:[%s2132 + $0x34] sm:$0xff]
      %v2539 = vld [vmem:[%s2132 + $0x44] sm:$0xff]
      %v2540 = vld [vmem:[%s2132 + $0x54] sm:$0xff]
      %v2541 = vld [vmem:[%s2132 + $0x64] sm:$0xff]
      %v2542 = vld [vmem:[%s2132 + $0x74] sm:$0xff]
      %v2543 = vperm.slane %v2370, 5
      %v2544 = vmul.f32 %v2535, %v2543
      %v2545 = vmul.f32 %v2536, %v2543
      %v2546 = vmul.f32 %v2537, %v2543
      %v2547 = vmul.f32 %v2538, %v2543
      %v2548 = vmul.f32 %v2539, %v2543
      %v2549 = vmul.f32 %v2540, %v2543
      %v2550 = vmul.f32 %v2541, %v2543
      %v2551 = vmul.f32 %v2542, %v2543
      %v2552 = vadd.f32 %v2527, %v2544
      %v2553 = vadd.f32 %v2528, %v2545
      %v2554 = vadd.f32 %v2529, %v2546
      %v2555 = vadd.f32 %v2530, %v2547
      %v2556 = vadd.f32 %v2531, %v2548
      %v2557 = vadd.f32 %v2532, %v2549
      %v2558 = vadd.f32 %v2533, %v2550
      %v2559 = vadd.f32 %v2534, %v2551
      %s2560 = scalar_lea.vmem [#allocation3], 64
      %v2561 = vld [vmem:[%s2560] sm:$0xff]
      %v2562 = vld [vmem:[%s2560 + $0x10] sm:$0xff]
      %v2563 = vld [vmem:[%s2560 + $0x20] sm:$0xff]
      %v2564 = vld [vmem:[%s2560 + $0x30] sm:$0xff]
      %v2565 = vld [vmem:[%s2560 + $0x40] sm:$0xff]
      %v2566 = vld [vmem:[%s2560 + $0x50] sm:$0xff]
      %v2567 = vld [vmem:[%s2560 + $0x60] sm:$0xff]
      %v2568 = vld [vmem:[%s2560 + $0x70] sm:$0xff]
      %v2569 = vperm.slane %v2370, 6
      %v2570 = vmul.f32 %v2561, %v2569
      %v2571 = vmul.f32 %v2562, %v2569
      %v2572 = vmul.f32 %v2563, %v2569
      %v2573 = vmul.f32 %v2564, %v2569
      %v2574 = vmul.f32 %v2565, %v2569
      %v2575 = vmul.f32 %v2566, %v2569
      %v2576 = vmul.f32 %v2567, %v2569
      %v2577 = vmul.f32 %v2568, %v2569
      %v2578 = vadd.f32 %v2552, %v2570
      %v2579 = vadd.f32 %v2553, %v2571
      %v2580 = vadd.f32 %v2554, %v2572
      %v2581 = vadd.f32 %v2555, %v2573
      %v2582 = vadd.f32 %v2556, %v2574
      %v2583 = vadd.f32 %v2557, %v2575
      %v2584 = vadd.f32 %v2558, %v2576
      %v2585 = vadd.f32 %v2559, %v2577
      %v2586 = vld [vmem:[%s2560 + $0x2] sm:$0xff]
      %v2587 = vld [vmem:[%s2560 + $0x12] sm:$0xff]
      %v2588 = vld [vmem:[%s2560 + $0x22] sm:$0xff]
      %v2589 = vld [vmem:[%s2560 + $0x32] sm:$0xff]
      %v2590 = vld [vmem:[%s2560 + $0x42] sm:$0xff]
      %v2591 = vld [vmem:[%s2560 + $0x52] sm:$0xff]
      %v2592 = vld [vmem:[%s2560 + $0x62] sm:$0xff]
      %v2593 = vld [vmem:[%s2560 + $0x72] sm:$0xff]
      %v2594 = vperm.slane %v2370, 7
      %v2595 = vmul.f32 %v2586, %v2594
      %v2596 = vmul.f32 %v2587, %v2594
      %v2597 = vmul.f32 %v2588, %v2594
      %v2598 = vmul.f32 %v2589, %v2594
      %v2599 = vmul.f32 %v2590, %v2594
      %v2600 = vmul.f32 %v2591, %v2594
      %v2601 = vmul.f32 %v2592, %v2594
      %v2602 = vmul.f32 %v2593, %v2594
      %v2603 = vadd.f32 %v2578, %v2595
      %v2604 = vadd.f32 %v2579, %v2596
      %v2605 = vadd.f32 %v2580, %v2597
      %v2606 = vadd.f32 %v2581, %v2598
      %v2607 = vadd.f32 %v2582, %v2599
      %v2608 = vadd.f32 %v2583, %v2600
      %v2609 = vadd.f32 %v2584, %v2601
      %v2610 = vadd.f32 %v2585, %v2602
      %v2611 = vld [vmem:[%s2560 + $0x4] sm:$0xff]
      %v2612 = vld [vmem:[%s2560 + $0x14] sm:$0xff]
      %v2613 = vld [vmem:[%s2560 + $0x24] sm:$0xff]
      %v2614 = vld [vmem:[%s2560 + $0x34] sm:$0xff]
      %v2615 = vld [vmem:[%s2560 + $0x44] sm:$0xff]
      %v2616 = vld [vmem:[%s2560 + $0x54] sm:$0xff]
      %v2617 = vld [vmem:[%s2560 + $0x64] sm:$0xff]
      %v2618 = vld [vmem:[%s2560 + $0x74] sm:$0xff]
      %v2619 = vperm.slane %v2371, 0
      %v2620 = vmul.f32 %v2611, %v2619
      %v2621 = vmul.f32 %v2612, %v2619
      %v2622 = vmul.f32 %v2613, %v2619
      %v2623 = vmul.f32 %v2614, %v2619
      %v2624 = vmul.f32 %v2615, %v2619
      %v2625 = vmul.f32 %v2616, %v2619
      %v2626 = vmul.f32 %v2617, %v2619
      %v2627 = vmul.f32 %v2618, %v2619
      %v2628 = vadd.f32 %v2603, %v2620
      %v2629 = vadd.f32 %v2604, %v2621
      %v2630 = vadd.f32 %v2605, %v2622
      %v2631 = vadd.f32 %v2606, %v2623
      %v2632 = vadd.f32 %v2607, %v2624
      %v2633 = vadd.f32 %v2608, %v2625
      %v2634 = vadd.f32 %v2609, %v2626
      %v2635 = vadd.f32 %v2610, %v2627
      %v2636 = vld [vmem:[%s13] sm:$0x1]
      %v2638 = vperm.slane %v2636, 0
      %v2640 = vmul.f32 %v2054, %v2638
      %v2641 = vmul.f32 %v2055, %v2638
      %v2642 = vmul.f32 %v2056, %v2638
      %v2643 = vmul.f32 %v2057, %v2638
      %v2644 = vmul.f32 %v2058, %v2638
      %v2645 = vmul.f32 %v2059, %v2638
      %v2646 = vmul.f32 %v2060, %v2638
      %v2647 = vmul.f32 %v2061, %v2638
      %v2648 = vsel %vm2062, %v2640, 0.0
      %2649 = vadd.xlane.f32.xlu0 %v2648
      %v2650 = vpop.xlane.xlu0 %2649
      %v2651 = vsel %vm2062, %v2641, 0.0
      %2652 = vadd.xlane.f32.xlu0 %v2651
      %v2653 = vpop.xlane.xlu0 %2652
      %v2654 = vsel %vm2062, %v2642, 0.0
      %2655 = vadd.xlane.f32.xlu0 %v2654
      %v2656 = vpop.xlane.xlu0 %2655
      %v2657 = vsel %vm2062, %v2643, 0.0
      %2658 = vadd.xlane.f32.xlu0 %v2657
      %v2659 = vpop.xlane.xlu0 %2658
      %v2660 = vsel %vm2062, %v2644, 0.0
      %2661 = vadd.xlane.f32.xlu0 %v2660
      %v2662 = vpop.xlane.xlu0 %2661
      %v2663 = vsel %vm2062, %v2645, 0.0
      %2664 = vadd.xlane.f32.xlu0 %v2663
      %v2665 = vpop.xlane.xlu0 %2664
      %v2666 = vsel %vm2062, %v2646, 0.0
      %2667 = vadd.xlane.f32.xlu0 %v2666
      %v2668 = vpop.xlane.xlu0 %2667
      %v2669 = vsel %vm2062, %v2647, 0.0
      %2670 = vadd.xlane.f32.xlu0 %v2669
      %v2671 = vpop.xlane.xlu0 %2670
      %v2672 = vmax.f32 %v2650, %v2662
      %v2673 = vmax.f32 %v2653, %v2665
      %v2674 = vmax.f32 %v2656, %v2668
      %v2675 = vmax.f32 %v2659, %v2671
      %v2676 = vmax.f32 %v2672, %v2673
      %v2677 = vmax.f32 %v2674, %v2675
      %v2678 = vmax.f32 %v2676, %v2677
      %v2679 = vrot.slane %v2678, 4
      %v2680 = vmax.f32 %v2678, %v2679
      %v2681 = vrot.slane %v2680, 2
      %v2682 = vmax.f32 %v2680, %v2681
      %v2683 = vrot.slane %v2682, 1
      %v2684 = vmax.f32 %v2682, %v2683
      %v2685 = vsub.f32 %v2650, %v2684
      %v2686 = vsub.f32 %v2653, %v2684
      %v2687 = vsub.f32 %v2656, %v2684
      %v2688 = vsub.f32 %v2659, %v2684
      %v2689 = vsub.f32 %v2662, %v2684
      %v2690 = vsub.f32 %v2665, %v2684
      %v2691 = vsub.f32 %v2668, %v2684
      %v2692 = vsub.f32 %v2671, %v2684
      %v2693 = vmul.f32 %v2685, 1.442695
      %v2694 = vpow.pop %v2693
      %v2695 = vmul.f32 %v2686, 1.442695
      %v2696 = vpow.pop %v2695
      %v2697 = vmul.f32 %v2687, 1.442695
      %v2698 = vpow.pop %v2697
      %v2699 = vmul.f32 %v2688, 1.442695
      %v2700 = vpow.pop %v2699
      %v2701 = vmul.f32 %v2689, 1.442695
      %v2702 = vpow.pop %v2701
      %v2703 = vmul.f32 %v2690, 1.442695
      %v2704 = vpow.pop %v2703
      %v2705 = vmul.f32 %v2691, 1.442695
      %v2706 = vpow.pop %v2705
      %v2707 = vmul.f32 %v2692, 1.442695
      %v2708 = vpow.pop %v2707
      %v2709 = vadd.f32 %v2694, %v2696
      %v2710 = vadd.f32 %v2709, %v2698
      %v2711 = vadd.f32 %v2710, %v2700
      %v2712 = vadd.f32 %v2711, %v2702
      %v2713 = vadd.f32 %v2712, %v2704
      %v2714 = vadd.f32 %v2713, %v2706
      %v2715 = vadd.f32 %v2714, %v2708
      %v2716 = vrot.slane %v2715, 4
      %v2717 = vadd.f32 %v2715, %v2716
      %v2718 = vrot.slane %v2717, 2
      %v2719 = vadd.f32 %v2717, %v2718
      %v2720 = vrot.slane %v2719, 1
      %v2721 = vadd.f32 %v2719, %v2720
      %v2722 = vrcp.pop %v2721
      %v2723 = vmul.f32 %v2721, %v2722
      %v2724 = vsub.f32 1.0, %v2723
      %v2725 = vmul.f32 %v2722, %v2724
      %v2726 = vadd.f32 %v2722, %v2725
      %vm2727 = vweird.f32 %v2721
      %vm2728 = vweird.f32 %v2722
      %vm2729 = vmor %vm2727, %vm2728
      %v2730 = vsel %vm2729, %v2722, %v2726
      %v2731 = vand.u32 2147483647, %v2721
      %vm2732 = vcmp.eq.f32.partialorder %v2731, 8.507059e+37
      %v2733 = vand.u32 %v2721, 2147483648
      %v2734 = vor.u32 1.1754944e-38, %v2733
      %v2735 = vsel %vm2732, %v2734, %v2730
      %v2736 = vmul.f32 %v2694, %v2735
      %v2737 = vmul.f32 %v2696, %v2735
      %v2738 = vmul.f32 %v2698, %v2735
      %v2739 = vmul.f32 %v2700, %v2735
      %v2740 = vmul.f32 %v2702, %v2735
      %v2741 = vmul.f32 %v2704, %v2735
      %v2742 = vmul.f32 %v2706, %v2735
      %v2743 = vmul.f32 %v2708, %v2735
      %v2744 = vmul.f32 %v2054, %v2736
      %v2745 = vmul.f32 %v2055, %v2737
      %v2746 = vmul.f32 %v2056, %v2738
      %v2747 = vmul.f32 %v2057, %v2739
      %v2748 = vmul.f32 %v2058, %v2740
      %v2749 = vmul.f32 %v2059, %v2741
      %v2750 = vmul.f32 %v2060, %v2742
      %v2751 = vmul.f32 %v2061, %v2743
      %v2752 = vsel %vm2062, %v2744, 0.0
      %v2753 = vsel %vm2062, %v2745, 0.0
      %v2754 = vadd.f32 %v2752, %v2753
      %v2755 = vsel %vm2062, %v2746, 0.0
      %v2756 = vadd.f32 %v2754, %v2755
      %v2757 = vsel %vm2062, %v2747, 0.0
      %v2758 = vadd.f32 %v2756, %v2757
      %v2759 = vsel %vm2062, %v2748, 0.0
      %v2760 = vadd.f32 %v2758, %v2759
      %v2761 = vsel %vm2062, %v2749, 0.0
      %v2762 = vadd.f32 %v2760, %v2761
      %v2763 = vsel %vm2062, %v2750, 0.0
      %v2764 = vadd.f32 %v2762, %v2763
      %v2765 = vsel %vm2062, %v2751, 0.0
      %v2766 = vadd.f32 %v2764, %v2765
      %v2767 = vrot.slane %v2766, 4
      %v2768 = vadd.f32 %v2766, %v2767
      %v2769 = vrot.slane %v2768, 2
      %v2770 = vadd.f32 %v2768, %v2769
      %v2771 = vrot.slane %v2770, 1
      %v2772 = vadd.f32 %v2770, %v2771
      %v2773 = vld [vmem:[%s14] sm:$0x1]
      %v2775 = vperm.slane %v2773, 0
      %v2777 = vmul.f32 %v2360, %v2775
      %v2778 = vmul.f32 %v2361, %v2775
      %v2779 = vmul.f32 %v2362, %v2775
      %v2780 = vmul.f32 %v2363, %v2775
      %v2781 = vmul.f32 %v2364, %v2775
      %v2782 = vmul.f32 %v2365, %v2775
      %v2783 = vmul.f32 %v2366, %v2775
      %v2784 = vmul.f32 %v2367, %v2775
      %v2785 = vsel %vm2062, %v2777, 0.0
      %2786 = vadd.xlane.f32.xlu0 %v2785
      %v2787 = vpop.xlane.xlu0 %2786
      %v2788 = vsel %vm2062, %v2778, 0.0
      %2789 = vadd.xlane.f32.xlu0 %v2788
      %v2790 = vpop.xlane.xlu0 %2789
      %v2791 = vsel %vm2062, %v2779, 0.0
      %2792 = vadd.xlane.f32.xlu0 %v2791
      %v2793 = vpop.xlane.xlu0 %2792
      %v2794 = vsel %vm2062, %v2780, 0.0
      %2795 = vadd.xlane.f32.xlu0 %v2794
      %v2796 = vpop.xlane.xlu0 %2795
      %v2797 = vsel %vm2062, %v2781, 0.0
      %2798 = vadd.xlane.f32.xlu0 %v2797
      %v2799 = vpop.xlane.xlu0 %2798
      %v2800 = vsel %vm2062, %v2782, 0.0
      %2801 = vadd.xlane.f32.xlu0 %v2800
      %v2802 = vpop.xlane.xlu0 %2801
      %v2803 = vsel %vm2062, %v2783, 0.0
      %2804 = vadd.xlane.f32.xlu0 %v2803
      %v2805 = vpop.xlane.xlu0 %2804
      %v2806 = vsel %vm2062, %v2784, 0.0
      %2807 = vadd.xlane.f32.xlu0 %v2806
      %v2808 = vpop.xlane.xlu0 %2807
      %v2809 = vmax.f32 %v2787, %v2799
      %v2810 = vmax.f32 %v2790, %v2802
      %v2811 = vmax.f32 %v2793, %v2805
      %v2812 = vmax.f32 %v2796, %v2808
      %v2813 = vmax.f32 %v2809, %v2810
      %v2814 = vmax.f32 %v2811, %v2812
      %v2815 = vmax.f32 %v2813, %v2814
      %v2816 = vrot.slane %v2815, 4
      %v2817 = vmax.f32 %v2815, %v2816
      %v2818 = vrot.slane %v2817, 2
      %v2819 = vmax.f32 %v2817, %v2818
      %v2820 = vrot.slane %v2819, 1
      %v2821 = vmax.f32 %v2819, %v2820
      %v2822 = vsub.f32 %v2787, %v2821
      %v2823 = vsub.f32 %v2790, %v2821
      %v2824 = vsub.f32 %v2793, %v2821
      %v2825 = vsub.f32 %v2796, %v2821
      %v2826 = vsub.f32 %v2799, %v2821
      %v2827 = vsub.f32 %v2802, %v2821
      %v2828 = vsub.f32 %v2805, %v2821
      %v2829 = vsub.f32 %v2808, %v2821
      %v2830 = vmul.f32 %v2822, 1.442695
      %v2831 = vpow.pop %v2830
      %v2832 = vmul.f32 %v2823, 1.442695
      %v2833 = vpow.pop %v2832
      %v2834 = vmul.f32 %v2824, 1.442695
      %v2835 = vpow.pop %v2834
      %v2836 = vmul.f32 %v2825, 1.442695
      %v2837 = vpow.pop %v2836
      %v2838 = vmul.f32 %v2826, 1.442695
      %v2839 = vpow.pop %v2838
      %v2840 = vmul.f32 %v2827, 1.442695
      %v2841 = vpow.pop %v2840
      %v2842 = vmul.f32 %v2828, 1.442695
      %v2843 = vpow.pop %v2842
      %v2844 = vmul.f32 %v2829, 1.442695
      %v2845 = vpow.pop %v2844
      %v2846 = vadd.f32 %v2831, %v2833
      %v2847 = vadd.f32 %v2846, %v2835
      %v2848 = vadd.f32 %v2847, %v2837
      %v2849 = vadd.f32 %v2848, %v2839
      %v2850 = vadd.f32 %v2849, %v2841
      %v2851 = vadd.f32 %v2850, %v2843
      %v2852 = vadd.f32 %v2851, %v2845
      %v2853 = vrot.slane %v2852, 4
      %v2854 = vadd.f32 %v2852, %v2853
      %v2855 = vrot.slane %v2854, 2
      %v2856 = vadd.f32 %v2854, %v2855
      %v2857 = vrot.slane %v2856, 1
      %v2858 = vadd.f32 %v2856, %v2857
      %v2859 = vrcp.pop %v2858
      %v2860 = vmul.f32 %v2858, %v2859
      %v2861 = vsub.f32 1.0, %v2860
      %v2862 = vmul.f32 %v2859, %v2861
      %v2863 = vadd.f32 %v2859, %v2862
      %vm2864 = vweird.f32 %v2858
      %vm2865 = vweird.f32 %v2859
      %vm2866 = vmor %vm2864, %vm2865
      %v2867 = vsel %vm2866, %v2859, %v2863
      %v2868 = vand.u32 2147483647, %v2858
      %vm2869 = vcmp.eq.f32.partialorder %v2868, 8.507059e+37
      %v2870 = vand.u32 %v2858, 2147483648
      %v2871 = vor.u32 1.1754944e-38, %v2870
      %v2872 = vsel %vm2869, %v2871, %v2867
      %v2873 = vmul.f32 %v2831, %v2872
      %v2874 = vmul.f32 %v2833, %v2872
      %v2875 = vmul.f32 %v2835, %v2872
      %v2876 = vmul.f32 %v2837, %v2872
      %v2877 = vmul.f32 %v2839, %v2872
      %v2878 = vmul.f32 %v2841, %v2872
      %v2879 = vmul.f32 %v2843, %v2872
      %v2880 = vmul.f32 %v2845, %v2872
      %v2881 = vmul.f32 %v2360, %v2873
      %v2882 = vmul.f32 %v2361, %v2874
      %v2883 = vmul.f32 %v2362, %v2875
      %v2884 = vmul.f32 %v2363, %v2876
      %v2885 = vmul.f32 %v2364, %v2877
      %v2886 = vmul.f32 %v2365, %v2878
      %v2887 = vmul.f32 %v2366, %v2879
      %v2888 = vmul.f32 %v2367, %v2880
      %v2889 = vsel %vm2062, %v2881, 0.0
      %v2890 = vsel %vm2062, %v2882, 0.0
      %v2891 = vadd.f32 %v2889, %v2890
      %v2892 = vsel %vm2062, %v2883, 0.0
      %v2893 = vadd.f32 %v2891, %v2892
      %v2894 = vsel %vm2062, %v2884, 0.0
      %v2895 = vadd.f32 %v2893, %v2894
      %v2896 = vsel %vm2062, %v2885, 0.0
      %v2897 = vadd.f32 %v2895, %v2896
      %v2898 = vsel %vm2062, %v2886, 0.0
      %v2899 = vadd.f32 %v2897, %v2898
      %v2900 = vsel %vm2062, %v2887, 0.0
      %v2901 = vadd.f32 %v2899, %v2900
      %v2902 = vsel %vm2062, %v2888, 0.0
      %v2903 = vadd.f32 %v2901, %v2902
      %v2904 = vrot.slane %v2903, 4
      %v2905 = vadd.f32 %v2903, %v2904
      %v2906 = vrot.slane %v2905, 2
      %v2907 = vadd.f32 %v2905, %v2906
      %v2908 = vrot.slane %v2907, 1
      %v2909 = vadd.f32 %v2907, %v2908
      %v2910 = vld [vmem:[%s15] sm:$0x1]
      %v2912 = vperm.slane %v2910, 0
      %v2914 = vmul.f32 %v2628, %v2912
      %v2915 = vmul.f32 %v2629, %v2912
      %v2916 = vmul.f32 %v2630, %v2912
      %v2917 = vmul.f32 %v2631, %v2912
      %v2918 = vmul.f32 %v2632, %v2912
      %v2919 = vmul.f32 %v2633, %v2912
      %v2920 = vmul.f32 %v2634, %v2912
      %v2921 = vmul.f32 %v2635, %v2912
      %v2922 = vsel %vm2062, %v2914, 0.0
      %2923 = vadd.xlane.f32.xlu0 %v2922
      %v2924 = vpop.xlane.xlu0 %2923
      %v2925 = vsel %vm2062, %v2915, 0.0
      %2926 = vadd.xlane.f32.xlu0 %v2925
      %v2927 = vpop.xlane.xlu0 %2926
      %v2928 = vsel %vm2062, %v2916, 0.0
      %2929 = vadd.xlane.f32.xlu0 %v2928
      %v2930 = vpop.xlane.xlu0 %2929
      %v2931 = vsel %vm2062, %v2917, 0.0
      %2932 = vadd.xlane.f32.xlu0 %v2931
      %v2933 = vpop.xlane.xlu0 %2932
      %v2934 = vsel %vm2062, %v2918, 0.0
      %2935 = vadd.xlane.f32.xlu0 %v2934
      %v2936 = vpop.xlane.xlu0 %2935
      %v2937 = vsel %vm2062, %v2919, 0.0
      %2938 = vadd.xlane.f32.xlu0 %v2937
      %v2939 = vpop.xlane.xlu0 %2938
      %v2940 = vsel %vm2062, %v2920, 0.0
      %2941 = vadd.xlane.f32.xlu0 %v2940
      %v2942 = vpop.xlane.xlu0 %2941
      %v2943 = vsel %vm2062, %v2921, 0.0
      %2944 = vadd.xlane.f32.xlu0 %v2943
      %v2945 = vpop.xlane.xlu0 %2944
      %v2946 = vmax.f32 %v2924, %v2936
      %v2947 = vmax.f32 %v2927, %v2939
      %v2948 = vmax.f32 %v2930, %v2942
      %v2949 = vmax.f32 %v2933, %v2945
      %v2950 = vmax.f32 %v2946, %v2947
      %v2951 = vmax.f32 %v2948, %v2949
      %v2952 = vmax.f32 %v2950, %v2951
      %v2953 = vrot.slane %v2952, 4
      %v2954 = vmax.f32 %v2952, %v2953
      %v2955 = vrot.slane %v2954, 2
      %v2956 = vmax.f32 %v2954, %v2955
      %v2957 = vrot.slane %v2956, 1
      %v2958 = vmax.f32 %v2956, %v2957
      %v2959 = vsub.f32 %v2924, %v2958
      %v2960 = vsub.f32 %v2927, %v2958
      %v2961 = vsub.f32 %v2930, %v2958
      %v2962 = vsub.f32 %v2933, %v2958
      %v2963 = vsub.f32 %v2936, %v2958
      %v2964 = vsub.f32 %v2939, %v2958
      %v2965 = vsub.f32 %v2942, %v2958
      %v2966 = vsub.f32 %v2945, %v2958
      %v2967 = vmul.f32 %v2959, 1.442695
      %v2968 = vpow.pop %v2967
      %v2969 = vmul.f32 %v2960, 1.442695
      %v2970 = vpow.pop %v2969
      %v2971 = vmul.f32 %v2961, 1.442695
      %v2972 = vpow.pop %v2971
      %v2973 = vmul.f32 %v2962, 1.442695
      %v2974 = vpow.pop %v2973
      %v2975 = vmul.f32 %v2963, 1.442695
      %v2976 = vpow.pop %v2975
      %v2977 = vmul.f32 %v2964, 1.442695
      %v2978 = vpow.pop %v2977
      %v2979 = vmul.f32 %v2965, 1.442695
      %v2980 = vpow.pop %v2979
      %v2981 = vmul.f32 %v2966, 1.442695
      %v2982 = vpow.pop %v2981
      %v2983 = vadd.f32 %v2968, %v2970
      %v2984 = vadd.f32 %v2983, %v2972
      %v2985 = vadd.f32 %v2984, %v2974
      %v2986 = vadd.f32 %v2985, %v2976
      %v2987 = vadd.f32 %v2986, %v2978
      %v2988 = vadd.f32 %v2987, %v2980
      %v2989 = vadd.f32 %v2988, %v2982
      %v2990 = vrot.slane %v2989, 4
      %v2991 = vadd.f32 %v2989, %v2990
      %v2992 = vrot.slane %v2991, 2
      %v2993 = vadd.f32 %v2991, %v2992
      %v2994 = vrot.slane %v2993, 1
      %v2995 = vadd.f32 %v2993, %v2994
      %v2996 = vrcp.pop %v2995
      %v2997 = vmul.f32 %v2995, %v2996
      %v2998 = vsub.f32 1.0, %v2997
      %v2999 = vmul.f32 %v2996, %v2998
      %v3000 = vadd.f32 %v2996, %v2999
      %vm3001 = vweird.f32 %v2995
      %vm3002 = vweird.f32 %v2996
      %vm3003 = vmor %vm3001, %vm3002
      %v3004 = vsel %vm3003, %v2996, %v3000
      %v3005 = vand.u32 2147483647, %v2995
      %vm3006 = vcmp.eq.f32.partialorder %v3005, 8.507059e+37
      %v3007 = vand.u32 %v2995, 2147483648
      %v3008 = vor.u32 1.1754944e-38, %v3007
      %v3009 = vsel %vm3006, %v3008, %v3004
      %v3010 = vmul.f32 %v2968, %v3009
      %v3011 = vmul.f32 %v2970, %v3009
      %v3012 = vmul.f32 %v2972, %v3009
      %v3013 = vmul.f32 %v2974, %v3009
      %v3014 = vmul.f32 %v2976, %v3009
      %v3015 = vmul.f32 %v2978, %v3009
      %v3016 = vmul.f32 %v2980, %v3009
      %v3017 = vmul.f32 %v2982, %v3009
      %v3018 = vmul.f32 %v2628, %v3010
      %v3019 = vmul.f32 %v2629, %v3011
      %v3020 = vmul.f32 %v2630, %v3012
      %v3021 = vmul.f32 %v2631, %v3013
      %v3022 = vmul.f32 %v2632, %v3014
      %v3023 = vmul.f32 %v2633, %v3015
      %v3024 = vmul.f32 %v2634, %v3016
      %v3025 = vmul.f32 %v2635, %v3017
      %v3026 = vsel %vm2062, %v3018, 0.0
      %v3027 = vsel %vm2062, %v3019, 0.0
      %v3028 = vadd.f32 %v3026, %v3027
      %v3029 = vsel %vm2062, %v3020, 0.0
      %v3030 = vadd.f32 %v3028, %v3029
      %v3031 = vsel %vm2062, %v3021, 0.0
      %v3032 = vadd.f32 %v3030, %v3031
      %v3033 = vsel %vm2062, %v3022, 0.0
      %v3034 = vadd.f32 %v3032, %v3033
      %v3035 = vsel %vm2062, %v3023, 0.0
      %v3036 = vadd.f32 %v3034, %v3035
      %v3037 = vsel %vm2062, %v3024, 0.0
      %v3038 = vadd.f32 %v3036, %v3037
      %v3039 = vsel %vm2062, %v3025, 0.0
      %v3040 = vadd.f32 %v3038, %v3039
      %v3041 = vrot.slane %v3040, 4
      %v3042 = vadd.f32 %v3040, %v3041
      %v3043 = vrot.slane %v3042, 2
      %v3044 = vadd.f32 %v3042, %v3043
      %v3045 = vrot.slane %v3044, 1
      %v3046 = vadd.f32 %v3044, %v3045
      %v3047 = vld [vmem:[%s16] sm:$0xff]
      %v3048 = vld [vmem:[%s17] sm:$0x1]
      %v3050 = vsel %vm2062, %v2772, 0
      %3052 = vmatpush.msra.mxu0 0.0
      %3053 = vmatpush.msra.mxu0 0.0
      %3054 = vmatpush.msra.mxu0 0.0
      %3055 = vmatpush.msra.mxu0 0.0
      %3056 = vmatpush.msra.mxu0 0.0
      %3057 = vmatpush.msra.mxu0 0.0
      %3058 = vmatpush.msra.mxu0 0.0
      %3059 = vmatpush.msra.mxu0 0.0
      %3060 = vmatpush.msra.mxu0 0.0
      %3061 = vmatpush.msra.mxu0 0.0
      %3062 = vmatpush.msra.mxu0 0.0
      %3063 = vmatpush.msra.mxu0 0.0
      %3064 = vmatpush.msra.mxu0 0.0
      %3065 = vmatpush.msra.mxu0 0.0
      %3066 = vmatpush.msra.mxu0 0.0
      %3067 = vmatpush.msra.mxu0 %v3047
      %3068 = vmatmul.f32.gmra.mxu0 %v3050
      %v3069 = vpop.f32.mrf.mxu0
      %v3070 = vadd.f32 %v3048, %v3069
      %3071 = vdwg.mxu0
      %v3072 = vtanh.pop %v3070
      %v3073 = vld [vmem:[%s18] sm:$0x3]
      %v3074 = vld [vmem:[%s19] sm:$0x1]
      %vm3075 = vcmask 15360
      %v3077 = vsel %vm3075, %v3072, 0
      %vm3079 = vcmask 1041408
      %v3081 = vsel %vm3079, %v3073, 0
      %3083 = vmatpush.msra.mxu0 0.0
      %3084 = vmatpush.msra.mxu0 0.0
      %3085 = vmatpush.msra.mxu0 0.0
      %3086 = vmatpush.msra.mxu0 0.0
      %3087 = vmatpush.msra.mxu0 0.0
      %3088 = vmatpush.msra.mxu0 0.0
      %3089 = vmatpush.msra.mxu0 0.0
      %3090 = vmatpush.msra.mxu0 0.0
      %3091 = vmatpush.msra.mxu0 0.0
      %3092 = vmatpush.msra.mxu0 0.0
      %3093 = vmatpush.msra.mxu0 0.0
      %3094 = vmatpush.msra.mxu0 0.0
      %3095 = vmatpush.msra.mxu0 0.0
      %3096 = vmatpush.msra.mxu0 0.0
      %3097 = vmatpush.msra.mxu0 0.0
      %3098 = vmatpush.msra.mxu0 %v3081
      %3099 = vmatmul.f32.gmra.mxu0 %v3077
      %v3100 = vpop.f32.mrf.mxu0
      %v3101 = vadd.f32 %v3074, %v3100
      %3102 = vdwg.mxu0
      %v3103 = vxor.u32 %v3101, 2147483648
      %v3104 = vmul.f32 %v3103, 1.442695
      %v3105 = vpow.pop %v3104
      %v3106 = vadd.f32 %v3105, 1.0
      %v3107 = vrcp.pop %v3106
      %v3108 = vmul.f32 %v3106, %v3107
      %v3109 = vsub.f32 1.0, %v3108
      %v3110 = vmul.f32 %v3107, %v3109
      %v3111 = vadd.f32 %v3107, %v3110
      %vm3112 = vweird.f32 %v3106
      %vm3113 = vweird.f32 %v3107
      %vm3114 = vmor %vm3112, %vm3113
      %v3115 = vsel %vm3114, %v3107, %v3111
      %v3116 = vand.u32 2147483647, %v3106
      %vm3117 = vcmp.eq.f32.partialorder %v3116, 8.507059e+37
      %v3118 = vand.u32 %v3106, 2147483648
      %v3119 = vor.u32 1.1754944e-38, %v3118
      %v3120 = vsel %vm3117, %v3119, %v3115
      %v3121 = vmul.f32 1.0, %v3120
      %v3122 = vld [vmem:[%s20] sm:$0xff]
      %v3123 = vld [vmem:[%s21] sm:$0xff]
      %v3125 = vsel %vm2062, %v3046, 0
      %3127 = vmatpush.msra.mxu0 0.0
      %3128 = vmatpush.msra.mxu0 0.0
      %3129 = vmatpush.msra.mxu0 0.0
      %3130 = vmatpush.msra.mxu0 0.0
      %3131 = vmatpush.msra.mxu0 0.0
      %3132 = vmatpush.msra.mxu0 0.0
      %3133 = vmatpush.msra.mxu0 0.0
      %3134 = vmatpush.msra.mxu0 0.0
      %3135 = vmatpush.msra.mxu0 0.0
      %3136 = vmatpush.msra.mxu0 0.0
      %3137 = vmatpush.msra.mxu0 0.0
      %3138 = vmatpush.msra.mxu0 0.0
      %3139 = vmatpush.msra.mxu0 0.0
      %3140 = vmatpush.msra.mxu0 0.0
      %3141 = vmatpush.msra.mxu0 0.0
      %3142 = vmatpush.msra.mxu0 %v3123
      %3143 = vmatmul.f32.gmra.mxu0 %v3125
      %v3144 = vpop.f32.mrf.mxu0
      %v3145 = vadd.f32 0.0, %v3144
      %3146 = vdwg.mxu0
      %v3148 = vsel %vm2062, %v2909, 0
      %3150 = vmatpush.msra.mxu0 0.0
      %3151 = vmatpush.msra.mxu0 0.0
      %3152 = vmatpush.msra.mxu0 0.0
      %3153 = vmatpush.msra.mxu0 0.0
      %3154 = vmatpush.msra.mxu0 0.0
      %3155 = vmatpush.msra.mxu0 0.0
      %3156 = vmatpush.msra.mxu0 0.0
      %3157 = vmatpush.msra.mxu0 0.0
      %3158 = vmatpush.msra.mxu0 0.0
      %3159 = vmatpush.msra.mxu0 0.0
      %3160 = vmatpush.msra.mxu0 0.0
      %3161 = vmatpush.msra.mxu0 0.0
      %3162 = vmatpush.msra.mxu0 0.0
      %3163 = vmatpush.msra.mxu0 0.0
      %3164 = vmatpush.msra.mxu0 0.0
      %3165 = vmatpush.msra.mxu0 %v3122
      %3166 = vmatmul.f32.gmra.mxu0 %v3148
      %v3167 = vpop.f32.mrf.mxu0
      %v3168 = vadd.f32 %v3145, %v3167
      %3169 = vdwg.mxu0
      %v3170 = vld [vmem:[%s22] sm:$0x1]
      %v3171 = vadd.f32 %v3168, %v3170
      %v3172 = vtanh.pop %v3171
      %v3173 = vld [vmem:[%s23] sm:$0xf]
      %v3174 = vld [vmem:[%s24] sm:$0x1]
      %vm3175 = vcmask 31744
      %v3177 = vsel %vm3175, %v3172, 0
      %vm3179 = vcmask 1043456
      %v3181 = vsel %vm3179, %v3173, 0
      %3183 = vmatpush.msra.mxu0 0.0
      %3184 = vmatpush.msra.mxu0 0.0
      %3185 = vmatpush.msra.mxu0 0.0
      %3186 = vmatpush.msra.mxu0 0.0
      %3187 = vmatpush.msra.mxu0 0.0
      %3188 = vmatpush.msra.mxu0 0.0
      %3189 = vmatpush.msra.mxu0 0.0
      %3190 = vmatpush.msra.mxu0 0.0
      %3191 = vmatpush.msra.mxu0 0.0
      %3192 = vmatpush.msra.mxu0 0.0
      %3193 = vmatpush.msra.mxu0 0.0
      %3194 = vmatpush.msra.mxu0 0.0
      %3195 = vmatpush.msra.mxu0 0.0
      %3196 = vmatpush.msra.mxu0 0.0
      %3197 = vmatpush.msra.mxu0 0.0
      %3198 = vmatpush.msra.mxu0 %v3181
      %3199 = vmatmul.f32.gmra.mxu0 %v3177
      %v3200 = vpop.f32.mrf.mxu0
      %v3201 = vadd.f32 %v3174, %v3200
      %3202 = vdwg.mxu0
      %v3203 = vld [vmem:[%s25] sm:$0xf]
      %v3204 = vld [vmem:[%s26] sm:$0x1]
      %v3206 = vsel %vm3179, %v3203, 0
      %3208 = vmatpush.msra.mxu0 0.0
      %3209 = vmatpush.msra.mxu0 0.0
      %3210 = vmatpush.msra.mxu0 0.0
      %3211 = vmatpush.msra.mxu0 0.0
      %3212 = vmatpush.msra.mxu0 0.0
      %3213 = vmatpush.msra.mxu0 0.0
      %3214 = vmatpush.msra.mxu0 0.0
      %3215 = vmatpush.msra.mxu0 0.0
      %3216 = vmatpush.msra.mxu0 0.0
      %3217 = vmatpush.msra.mxu0 0.0
      %3218 = vmatpush.msra.mxu0 0.0
      %3219 = vmatpush.msra.mxu0 0.0
      %3220 = vmatpush.msra.mxu0 0.0
      %3221 = vmatpush.msra.mxu0 0.0
      %3222 = vmatpush.msra.mxu0 0.0
      %3223 = vmatpush.msra.mxu0 %v3206
      %3224 = vmatmul.f32.gmra.mxu0 %v3177
      %v3225 = vpop.f32.mrf.mxu0
      %v3226 = vadd.f32 %v3204, %v3225
      %3227 = vdwg.mxu0
      %v3228 = vmax.f32 %v3201, %v3226
      %v3229 = vsub.f32 %v3201, %v3228
      %v3230 = vmul.f32 %v3229, 1.442695
      %v3231 = vpow.pop %v3230
      %v3232 = vsub.f32 %v3226, %v3228
      %v3233 = vmul.f32 %v3232, 1.442695
      %v3234 = vpow.pop %v3233
      %v3235 = vmul.f32 %v3231, %v2909
      %v3236 = vmul.f32 %v3234, %v3046
      %v3237 = vadd.f32 %v3235, %v3236
      %v3238 = vadd.f32 %v3231, %v3234
      %v3239 = vrcp.pop %v3238
      %v3240 = vmul.f32 %v3238, %v3239
      %v3241 = vsub.f32 1.0, %v3240
      %v3242 = vmul.f32 %v3239, %v3241
      %v3243 = vadd.f32 %v3239, %v3242
      %vm3244 = vweird.f32 %v3238
      %vm3245 = vweird.f32 %v3239
      %vm3246 = vmor %vm3244, %vm3245
      %v3247 = vsel %vm3246, %v3239, %v3243
      %v3248 = vand.u32 2147483647, %v3238
      %vm3249 = vcmp.eq.f32.partialorder %v3248, 8.507059e+37
      %v3250 = vand.u32 %v3238, 2147483648
      %v3251 = vor.u32 1.1754944e-38, %v3250
      %v3252 = vsel %vm3249, %v3251, %v3247
      %v3253 = vmul.f32 %v3237, %v3252
      %v3254 = vperm.slane %v3121, 0
      %v3255 = vmul.f32 %v2054, %v3254
      %v3256 = vmul.f32 %v2055, %v3254
      %v3257 = vmul.f32 %v2056, %v3254
      %v3258 = vmul.f32 %v2057, %v3254
      %v3259 = vmul.f32 %v2058, %v3254
      %v3260 = vmul.f32 %v2059, %v3254
      %v3261 = vmul.f32 %v2060, %v3254
      %v3262 = vmul.f32 %v2061, %v3254
      %v3263 = vperm.slane %v3253, 0
      %v3264 = vadd.f32 %v3255, %v3263
      %v3265 = vadd.f32 %v3256, %v3263
      %v3266 = vadd.f32 %v3257, %v3263
      %v3267 = vadd.f32 %v3258, %v3263
      %v3268 = vadd.f32 %v3259, %v3263
      %v3269 = vadd.f32 %v3260, %v3263
      %v3270 = vadd.f32 %v3261, %v3263
      %v3271 = vadd.f32 %v3262, %v3263
      %3272 = vst.msk [vmem:[%s818] sm:$0xff] %vm2062, %v3264
      %3273 = vst.msk [vmem:[%s818 + $0x8] sm:$0xff] %vm2062, %v3265
      %3274 = vst.msk [vmem:[%s818 + $0x10] sm:$0xff] %vm2062, %v3266
      %3275 = vst.msk [vmem:[%s818 + $0x18] sm:$0xff] %vm2062, %v3267
      %3276 = vst.msk [vmem:[%s818 + $0x20] sm:$0xff] %vm2062, %v3268
      %3277 = vst.msk [vmem:[%s818 + $0x28] sm:$0xff] %vm2062, %v3269
      %3278 = vst.msk [vmem:[%s818 + $0x30] sm:$0xff] %vm2062, %v3270
      %3279 = vst.msk [vmem:[%s818 + $0x38] sm:$0xff] %vm2062, %v3271
      %p3280 = scmp.lt.s32.totalorder %s38, 1
      %s3281 = scalar_select %p3280, %s38, 1
      %s3282 = smul.addr %s3281, 8
      %s3283 = smul.addr %s3282, 8
      %s3284 = scalar_lea.vmem %s27, %s3283
      // Predicated region
      $region129: #{_lambda_.1} parent=127 // pred_check
        %p3285 = pneg %p628
      $region130: #{_lambda_.1} parent=127 // pred_check_branch
        %3287 = sbr.rel (%p3285) target = $region132
      $region131: #{_lambda_.1} parent=127 // pred_region
        _
      $region132: #{_lambda_.1} parent=127 // pred_fallthru
        _
    $region128: #{_lambda_.1} parent=5 // pred_fallthru
      _
    %p3288 = scmp.le.s32.totalorder 2, %s33
    // Predicated region
    $region133: #{_lambda_.1} parent=5 // pred_check
      %p3289 = pneg %p3288
    $region134: #{_lambda_.1} parent=5 // pred_check_branch
      %3291 = sbr.rel (%p3289) target = $region136
    $region135: #{_lambda_.1} parent=5 // pred_region
      %s3292 = ssub.s32 %s33, 2
      // Predicated region
      $region137: #{_lambda_.1} parent=135 // pred_check
        %p3293 = pneg %p634
      $region138: #{_lambda_.1} parent=135 // pred_check_branch
        %3295 = sbr.rel (%p3293) target = $region140
      $region139: #{_lambda_.1} parent=135 // pred_region
        %p3296 = scmp.lt.s32.totalorder %s39, 1
        %s3297 = scalar_select %p3296, %s39, 1
        %s3298 = smul.addr %s3297, 8
        %s3299 = smul.addr %s3298, 8
        %s3300 = scalar_lea.vmem %s27, %s3299
      $region140: #{_lambda_.1} parent=135 // pred_fallthru
        _
    $region136: #{_lambda_.1} parent=5 // pred_fallthru
      _
  $region6: #{_lambda_.1} parent=0 // loop_footer
    %s37 = sadd.s32 1, %s33
  $region7: #{_lambda_.1} parent=0 // loop_footer_branch
    %32 = sbr.rel target = $region3
  $region8: #{_lambda_.1} parent=0 // loop_exit
    _

</llo_original>
